<compile_context>
chip_gen: v7x
topology: tpu7x:2x2x1
jax: 0.10.0
libtpu: 0.0.40
codegen_flags: <defaults>
</compile_context>

<pallas_src>
import jax
import jax.numpy as jnp
from jax.experimental import pallas as pl
from jax.experimental.pallas import tpu as pltpu


# ------------------------------- LSTM cell -------------------------------- #

def _lstm_cell(gates, c, H):
    """PyTorch gate order i, f, g, o.  gates: (B, 4H) f32, c: (B, H) f32."""
    # TODO(synk): a lane-masked full-width sigmoid/tanh + pltpu.roll alignment would avoid
    # the four narrow H-lane slices on the serial path (micro-opt, kept simple here).
    i = jax.nn.sigmoid(gates[:, 0:H])
    f = jax.nn.sigmoid(gates[:, H:2 * H])
    g = jnp.tanh(gates[:, 2 * H:3 * H])
    o = jax.nn.sigmoid(gates[:, 3 * H:4 * H])
    c_new = f * c + i * g
    h_new = o * jnp.tanh(c_new)
    return h_new, c_new


# ------------------------------ fused kernel ------------------------------- #

def _fused_kernel(x_ref, w1_ref, b1_ref, w2_ref, b2_ref,
                  wih1_ref, bg1_ref, whh1_ref,
                  wih2_ref, bg2_ref, whh2f_ref,
                  wfc_ref, bfc_ref, out_ref, hs_ref):
    """Whole MYLSTMModel forward for all B*T rows (time-major, row = t*B + b)."""
    TB, _ = x_ref.shape
    B = out_ref.shape[0]
    T = TB // B
    H1 = whh1_ref.shape[0] // 2
    H2 = whh2f_ref.shape[0]

    def conv3_relu(h, wflat_ref, b_ref):
        # Conv1d(kernel=3, padding=1) as one matmul.  In row = t*B + b layout a time shift
        # of +/-1 is a row shift of +/-B, and the per-element zero padding lands exactly on
        # the first / last B rows of the slab.
        C = h.shape[1]
        zero = jnp.zeros((B, C), jnp.float32)
        h_prev = jnp.concatenate([zero, h[:-B]], axis=0)          # x[t-1]
        h_next = jnp.concatenate([h[B:], zero], axis=0)           # x[t+1]
        cols = jnp.concatenate([h_prev, h, h_next], axis=1)       # (TB, 3C), k-major
        y = jnp.dot(cols.astype(jnp.bfloat16), wflat_ref[...],
                    preferred_element_type=jnp.float32) + b_ref[...]
        return jnp.maximum(y, 0.0)

    h1 = conv3_relu(x_ref[...], w1_ref, b1_ref)                   # (TB, 48)
    h2 = conv3_relu(h1, w2_ref, b2_ref)                           # (TB, 64)

    # Hoisted lstm1 input->hidden projection for BOTH directions (biases folded in).
    gx1 = jnp.dot(h2.astype(jnp.bfloat16), wih1_ref[...],
                  preferred_element_type=jnp.float32) + bg1_ref[...]   # (TB, 8*H1)

    # ----- layer-1 bidirectional recurrence (fwd & bwd advance together) -----
    whh1 = whh1_ref[...]                                           # (2H1, 8H1) block-diag
    zeros1 = jnp.zeros((B, H1), jnp.float32)
    hf, cf, hb, cb = zeros1, zeros1, zeros1, zeros1
    # Fully unrolled: T is small & static.  Only the single fused (B,2H)@(2H,8H) recurrent
    # matmul per step sits on the serial path.
    # TODO(synk): for large B / v7x, add a leading "parallel" batch-block grid axis so the
    # second TensorCore is used; at B=2 a batched single invocation is faster on 1-TC chips.
    for t in range(T):
        tb = T - 1 - t
        g_rec = jnp.dot(jnp.concatenate([hf, hb], axis=1), whh1,
                        preferred_element_type=jnp.float32)        # (B, 8H1)
        gates_f = gx1[t * B:(t + 1) * B, :4 * H1] + g_rec[:, :4 * H1]
        gates_b = gx1[tb * B:(tb + 1) * B, 4 * H1:] + g_rec[:, 4 * H1:]
        hf, cf = _lstm_cell(gates_f, cf, H1)
        hb, cb = _lstm_cell(gates_b, cb, H1)
        hs_ref[t * B:(t + 1) * B, :H1] = hf                        # out1[:, t, :H1]
        hs_ref[tb * B:(tb + 1) * B, H1:] = hb                      # out1[:, tb, H1:]

    # ----- lstm2 input projection straight from the VMEM-resident layer-1 output -----
    gx2 = jnp.dot(hs_ref[...].astype(jnp.bfloat16), wih2_ref[...],
                  preferred_element_type=jnp.float32) + bg2_ref[...]   # (TB, 8*H2)

    # ----- layer-2: only what the fc consumes -----
    whh2f = whh2f_ref[...]
    zeros2 = jnp.zeros((B, H2), jnp.float32)
    hf2, cf2 = zeros2, zeros2
    for t in range(T):
        gates_f = gx2[t * B:(t + 1) * B, :4 * H2] + jnp.dot(
            hf2, whh2f, preferred_element_type=jnp.float32)
        hf2, cf2 = _lstm_cell(gates_f, cf2, H2)
    # Backward hidden at original time T-1 is the backward direction's FIRST step
    # (zero initial h/c), so no backward recurrence is needed at all.
    hb2_last, _ = _lstm_cell(gx2[(T - 1) * B:, 4 * H2:], zeros2, H2)

    last = jnp.concatenate([hf2, hb2_last], axis=1)                # (B, 2*H2)
    out_ref[...] = jnp.dot(last, wfc_ref[...],
                           preferred_element_type=jnp.float32) + bfc_ref[...]


# ---------------------------- pallas_call wrapper --------------------------- #

def _fused_call(q, x_tm, B):
    TB = x_tm.shape[0]
    H1 = q["whh1_bd"].shape[0] // 2
    full = pl.BlockSpec(memory_space=pltpu.MemorySpace.VMEM)
    return pl.pallas_call(
        _fused_kernel,
        out_shape=jax.ShapeDtypeStruct((B, 1), jnp.float32),
        in_specs=[full] * 13,
        out_specs=full,
        scratch_shapes=[pltpu.VMEM((TB, 2 * H1), jnp.float32)],
        compiler_params=pltpu.CompilerParams(vmem_limit_bytes=32 * 1024 * 1024),
    )(x_tm, q["w1"], q["b1"], q["w2"], q["b2"],
      q["wih1"], q["bg1"], q["whh1_bd"],
      q["wih2"], q["bg2"], q["whh2_f"],
      q["wfc"], q["bfc"])


# ------------------------------ parameters --------------------------------- #

def init_params(key, input_size, hidden1, hidden2):
    """PyTorch-style random init, PyTorch layouts (Conv1d (Cout,Cin,3), LSTM (4H,D)...)."""
    def uni(k, shape, fan_in):
        bound = 1.0 / jnp.sqrt(jnp.float32(fan_in))
        return jax.random.uniform(k, shape, jnp.float32, -bound, bound)

    keys = iter(jax.random.split(key, 64))
    p = {}
    p["conv1_w"] = uni(next(keys), (48, input_size, 3), input_size * 3)
    p["conv1_b"] = uni(next(keys), (48,), input_size * 3)
    p["conv2_w"] = uni(next(keys), (64, 48, 3), 48 * 3)
    p["conv2_b"] = uni(next(keys), (64,), 48 * 3)

    def lstm_dir(in_dim, h):
        return (uni(next(keys), (4 * h, in_dim), h),   # w_ih
                uni(next(keys), (4 * h, h), h),        # w_hh
                uni(next(keys), (4 * h,), h),          # b_ih
                uni(next(keys), (4 * h,), h))          # b_hh

    p["lstm1_f"] = lstm_dir(64, hidden1)
    p["lstm1_b"] = lstm_dir(64, hidden1)
    p["lstm2_f"] = lstm_dir(2 * hidden1, hidden2)
    p["lstm2_b"] = lstm_dir(2 * hidden1, hidden2)
    p["fc_w"] = uni(next(keys), (1, 2 * hidden2), 2 * hidden2)
    p["fc_b"] = uni(next(keys), (1,), 2 * hidden2)
    return p


def prepare_params(p):
    """One-time host-side weight preprocessing (transposes / concat / block-diag / bf16)."""
    def conv_flat(w):            # (Cout, Cin, 3) -> (3*Cin, Cout), row = k*Cin + cin
        return jnp.transpose(w, (2, 1, 0)).reshape(-1, w.shape[0])

    def dir_ih(d):               # (4H, D) -> (D, 4H)
        return jnp.transpose(d[0])

    def dir_hh(d):               # (4H, H) -> (H, 4H)
        return jnp.transpose(d[1])

    def dir_bias(d):             # b_ih + b_hh : (4H,)
        return d[2] + d[3]

    q = {}
    q["w1"] = conv_flat(p["conv1_w"]).astype(jnp.bfloat16)
    q["b1"] = p["conv1_b"].reshape(1, -1)
    q["w2"] = conv_flat(p["conv2_w"]).astype(jnp.bfloat16)
    q["b2"] = p["conv2_b"].reshape(1, -1)

    q["wih1"] = jnp.concatenate([dir_ih(p["lstm1_f"]), dir_ih(p["lstm1_b"])],
                                axis=1).astype(jnp.bfloat16)          # (64, 8H1)
    q["bg1"] = jnp.concatenate([dir_bias(p["lstm1_f"]),
                                dir_bias(p["lstm1_b"])]).reshape(1, -1)
    whf, whb = dir_hh(p["lstm1_f"]), dir_hh(p["lstm1_b"])             # (H1, 4H1) each
    z = jnp.zeros_like(whf)
    q["whh1_bd"] = jnp.concatenate(
        [jnp.concatenate([whf, z], axis=1),
         jnp.concatenate([z, whb], axis=1)], axis=0)                  # (2H1, 8H1) block-diag

    q["wih2"] = jnp.concatenate([dir_ih(p["lstm2_f"]), dir_ih(p["lstm2_b"])],
                                axis=1).astype(jnp.bfloat16)          # (2H1, 8H2)
    q["bg2"] = jnp.concatenate([dir_bias(p["lstm2_f"]),
                                dir_bias(p["lstm2_b"])]).reshape(1, -1)
    q["whh2_f"] = dir_hh(p["lstm2_f"])                                # (H2, 4H2); bwd whh unused
    q["wfc"] = jnp.transpose(p["fc_w"])                               # (2H2, 1)
    q["bfc"] = p["fc_b"].reshape(1, 1)
    return q


# -------------------------------- forward ---------------------------------- #

@jax.jit
def mylstm_forward(q, x):
    """x: (B, T, input_size) -> (B, 1).  Matches MYLSTMModel.forward in eval mode."""
    B, T, Cin = x.shape
    # Tiny wrapper-side re-layout (layout plumbing only): time-major slab, row = t*B + b.
    x_tm = jnp.transpose(x, (1, 0, 2)).reshape(T * B, Cin)
    # TODO(synk): dropout1 / dropout2 are identity here (inference / eval mode).
    return _fused_call(q, x_tm, B)


if __name__ == "__main__":
    B, T, INPUT_SIZE = 2, 8, 4
    HIDDEN1, HIDDEN2 = 32, 32

    key = jax.random.PRNGKey(0)
    k_param, k_x = jax.random.split(key)
    params = prepare_params(init_params(k_param, INPUT_SIZE, HIDDEN1, HIDDEN2))
    x = jax.random.normal(k_x, (B, T, INPUT_SIZE), jnp.float32)

    out = mylstm_forward(params, x)
    jax.block_until_ready(out)
    assert out.shape == (B, 1), out.shape
    assert bool(jnp.all(jnp.isfinite(out)))
    print("KERNEL_OK")
</pallas_src>

<mosaic_0001>
module attributes {stable_mosaic.version = 11 : i64} {
  func.func @_fused_kernel(%arg0: memref<16x4xf32, #tpu.memory_space<vmem>>, %arg1: memref<12x48xbf16, #tpu.memory_space<vmem>>, %arg2: memref<1x48xf32, #tpu.memory_space<vmem>>, %arg3: memref<144x64xbf16, #tpu.memory_space<vmem>>, %arg4: memref<1x64xf32, #tpu.memory_space<vmem>>, %arg5: memref<64x256xbf16, #tpu.memory_space<vmem>>, %arg6: memref<1x256xf32, #tpu.memory_space<vmem>>, %arg7: memref<64x256xf32, #tpu.memory_space<vmem>>, %arg8: memref<64x256xbf16, #tpu.memory_space<vmem>>, %arg9: memref<1x256xf32, #tpu.memory_space<vmem>>, %arg10: memref<32x128xf32, #tpu.memory_space<vmem>>, %arg11: memref<64x1xf32, #tpu.memory_space<vmem>>, %arg12: memref<1x1xf32, #tpu.memory_space<vmem>>, %arg13: memref<2x1xf32, #tpu.memory_space<vmem>>, %arg14: memref<16x64xf32, #tpu.memory_space<vmem>>) attributes {dimension_semantics = [], scalar_prefetch = 0 : i64, scratch_operands = 1 : i64, tpu.core_type = #tpu.core_type<tc>} {
    %c0 = arith.constant 0 : index
    %c0_0 = arith.constant 0 : index
    %0 = vector.load %arg0[%c0, %c0_0] : memref<16x4xf32, #tpu.memory_space<vmem>>, vector<16x4xf32>
    %cst = arith.constant 0.000000e+00 : f32
    %1 = vector.broadcast %cst : f32 to vector<2x4xf32>
    %2 = vector.extract_strided_slice %0 {offsets = [0, 0], sizes = [14, 4], strides = [1, 1]} : vector<16x4xf32> to vector<14x4xf32>
    %3 = tpu.concatenate %1, %2 in 0 : vector<2x4xf32>, vector<14x4xf32> -> vector<16x4xf32>
    %4 = vector.extract_strided_slice %0 {offsets = [2, 0], sizes = [14, 4], strides = [1, 1]} : vector<16x4xf32> to vector<14x4xf32>
    %5 = tpu.concatenate %4, %1 in 0 : vector<14x4xf32>, vector<2x4xf32> -> vector<16x4xf32>
    %6 = tpu.concatenate %3, %0, %5 in 1 : vector<16x4xf32>, vector<16x4xf32>, vector<16x4xf32> -> vector<16x12xf32>
    %7 = arith.truncf %6 : vector<16x12xf32> to vector<16x12xbf16>
    %c0_1 = arith.constant 0 : index
    %c0_2 = arith.constant 0 : index
    %8 = vector.load %arg1[%c0_1, %c0_2] : memref<12x48xbf16, #tpu.memory_space<vmem>>, vector<12x48xbf16>
    %cst_3 = arith.constant dense<0.000000e+00> : vector<16x48xf32>
    %9 = tpu.matmul %7, %8, %cst_3 {dimension_numbers = #tpu.dot_dimension_numbers<[1], [0], [0], [1], [0, 0, 1, 1], [], []>} : vector<16x12xbf16>, vector<12x48xbf16>, vector<16x48xf32> -> vector<16x48xf32>
    %c0_4 = arith.constant 0 : index
    %c0_5 = arith.constant 0 : index
    %10 = vector.load %arg2[%c0_4, %c0_5] : memref<1x48xf32, #tpu.memory_space<vmem>>, vector<1x48xf32>
    %11 = vector.broadcast %10 : vector<1x48xf32> to vector<16x48xf32>
    %12 = arith.addf %9, %11 : vector<16x48xf32>
    %cst_6 = arith.constant 0.000000e+00 : f32
    %13 = vector.broadcast %cst_6 : f32 to vector<16x48xf32>
    %14 = arith.maximumf %12, %13 : vector<16x48xf32>
    %cst_7 = arith.constant 0.000000e+00 : f32
    %15 = vector.broadcast %cst_7 : f32 to vector<2x48xf32>
    %16 = vector.extract_strided_slice %14 {offsets = [0, 0], sizes = [14, 48], strides = [1, 1]} : vector<16x48xf32> to vector<14x48xf32>
    %17 = tpu.concatenate %15, %16 in 0 : vector<2x48xf32>, vector<14x48xf32> -> vector<16x48xf32>
    %18 = vector.extract_strided_slice %14 {offsets = [2, 0], sizes = [14, 48], strides = [1, 1]} : vector<16x48xf32> to vector<14x48xf32>
    %19 = tpu.concatenate %18, %15 in 0 : vector<14x48xf32>, vector<2x48xf32> -> vector<16x48xf32>
    %20 = tpu.concatenate %17, %14, %19 in 1 : vector<16x48xf32>, vector<16x48xf32>, vector<16x48xf32> -> vector<16x144xf32>
    %21 = arith.truncf %20 : vector<16x144xf32> to vector<16x144xbf16>
    %c0_8 = arith.constant 0 : index
    %c0_9 = arith.constant 0 : index
    %22 = vector.load %arg3[%c0_8, %c0_9] : memref<144x64xbf16, #tpu.memory_space<vmem>>, vector<144x64xbf16>
    %cst_10 = arith.constant dense<0.000000e+00> : vector<16x64xf32>
    %23 = tpu.matmul %21, %22, %cst_10 {dimension_numbers = #tpu.dot_dimension_numbers<[1], [0], [0], [1], [0, 0, 1, 1], [], []>} : vector<16x144xbf16>, vector<144x64xbf16>, vector<16x64xf32> -> vector<16x64xf32>
    %c0_11 = arith.constant 0 : index
    %c0_12 = arith.constant 0 : index
    %24 = vector.load %arg4[%c0_11, %c0_12] : memref<1x64xf32, #tpu.memory_space<vmem>>, vector<1x64xf32>
    %25 = vector.broadcast %24 : vector<1x64xf32> to vector<16x64xf32>
    %26 = arith.addf %23, %25 : vector<16x64xf32>
    %cst_13 = arith.constant 0.000000e+00 : f32
    %27 = vector.broadcast %cst_13 : f32 to vector<16x64xf32>
    %28 = arith.maximumf %26, %27 : vector<16x64xf32>
    %29 = arith.truncf %28 : vector<16x64xf32> to vector<16x64xbf16>
    %c0_14 = arith.constant 0 : index
    %c0_15 = arith.constant 0 : index
    %30 = vector.load %arg5[%c0_14, %c0_15] : memref<64x256xbf16, #tpu.memory_space<vmem>>, vector<64x256xbf16>
    %cst_16 = arith.constant dense<0.000000e+00> : vector<16x256xf32>
    %31 = tpu.matmul %29, %30, %cst_16 {dimension_numbers = #tpu.dot_dimension_numbers<[1], [0], [0], [1], [0, 0, 1, 1], [], []>} : vector<16x64xbf16>, vector<64x256xbf16>, vector<16x256xf32> -> vector<16x256xf32>
    %c0_17 = arith.constant 0 : index
    %c0_18 = arith.constant 0 : index
    %32 = vector.load %arg6[%c0_17, %c0_18] : memref<1x256xf32, #tpu.memory_space<vmem>>, vector<1x256xf32>
    %33 = vector.broadcast %32 : vector<1x256xf32> to vector<16x256xf32>
    %34 = arith.addf %31, %33 : vector<16x256xf32>
    %c0_19 = arith.constant 0 : index
    %c0_20 = arith.constant 0 : index
    %35 = vector.load %arg7[%c0_19, %c0_20] : memref<64x256xf32, #tpu.memory_space<vmem>>, vector<64x256xf32>
    %cst_21 = arith.constant 0.000000e+00 : f32
    %36 = vector.broadcast %cst_21 : f32 to vector<2x32xf32>
    %37 = tpu.concatenate %36, %36 in 1 : vector<2x32xf32>, vector<2x32xf32> -> vector<2x64xf32>
    %cst_22 = arith.constant dense<0.000000e+00> : vector<2x256xf32>
    %38 = tpu.matmul %37, %35, %cst_22 {dimension_numbers = #tpu.dot_dimension_numbers<[1], [0], [0], [1], [0, 0, 1, 1], [], []>} : vector<2x64xf32>, vector<64x256xf32>, vector<2x256xf32> -> vector<2x256xf32>
    %39 = vector.extract_strided_slice %34 {offsets = [0, 0], sizes = [2, 128], strides = [1, 1]} : vector<16x256xf32> to vector<2x128xf32>
    %40 = vector.extract_strided_slice %38 {offsets = [0, 0], sizes = [2, 128], strides = [1, 1]} : vector<2x256xf32> to vector<2x128xf32>
    %41 = arith.addf %39, %40 : vector<2x128xf32>
    %42 = vector.extract_strided_slice %34 {offsets = [14, 128], sizes = [2, 128], strides = [1, 1]} : vector<16x256xf32> to vector<2x128xf32>
    %43 = vector.extract_strided_slice %38 {offsets = [0, 128], sizes = [2, 128], strides = [1, 1]} : vector<2x256xf32> to vector<2x128xf32>
    %44 = arith.addf %42, %43 : vector<2x128xf32>
    %45 = vector.extract_strided_slice %41 {offsets = [0, 0], sizes = [2, 32], strides = [1, 1]} : vector<2x128xf32> to vector<2x32xf32>
    %46 = arith.negf %45 : vector<2x32xf32>
    %47 = math.exp %46 : vector<2x32xf32>
    %cst_23 = arith.constant 1.000000e+00 : f32
    %48 = vector.broadcast %cst_23 : f32 to vector<2x32xf32>
    %49 = arith.addf %48, %47 : vector<2x32xf32>
    %50 = arith.divf %48, %49 : vector<2x32xf32>
    %51 = vector.extract_strided_slice %41 {offsets = [0, 32], sizes = [2, 32], strides = [1, 1]} : vector<2x128xf32> to vector<2x32xf32>
    %52 = arith.negf %51 : vector<2x32xf32>
    %53 = math.exp %52 : vector<2x32xf32>
    %cst_24 = arith.constant 1.000000e+00 : f32
    %54 = vector.broadcast %cst_24 : f32 to vector<2x32xf32>
    %55 = arith.addf %54, %53 : vector<2x32xf32>
    %56 = arith.divf %54, %55 : vector<2x32xf32>
    %57 = vector.extract_strided_slice %41 {offsets = [0, 64], sizes = [2, 32], strides = [1, 1]} : vector<2x128xf32> to vector<2x32xf32>
    %58 = math.tanh %57 : vector<2x32xf32>
    %59 = vector.extract_strided_slice %41 {offsets = [0, 96], sizes = [2, 32], strides = [1, 1]} : vector<2x128xf32> to vector<2x32xf32>
    %60 = arith.negf %59 : vector<2x32xf32>
    %61 = math.exp %60 : vector<2x32xf32>
    %cst_25 = arith.constant 1.000000e+00 : f32
    %62 = vector.broadcast %cst_25 : f32 to vector<2x32xf32>
    %63 = arith.addf %62, %61 : vector<2x32xf32>
    %64 = arith.divf %62, %63 : vector<2x32xf32>
    %65 = arith.mulf %56, %36 : vector<2x32xf32>
    %66 = arith.mulf %50, %58 : vector<2x32xf32>
    %67 = arith.addf %65, %66 : vector<2x32xf32>
    %68 = math.tanh %67 : vector<2x32xf32>
    %69 = arith.mulf %64, %68 : vector<2x32xf32>
    %70 = vector.extract_strided_slice %44 {offsets = [0, 0], sizes = [2, 32], strides = [1, 1]} : vector<2x128xf32> to vector<2x32xf32>
    %71 = arith.negf %70 : vector<2x32xf32>
    %72 = math.exp %71 : vector<2x32xf32>
    %cst_26 = arith.constant 1.000000e+00 : f32
    %73 = vector.broadcast %cst_26 : f32 to vector<2x32xf32>
    %74 = arith.addf %73, %72 : vector<2x32xf32>
    %75 = arith.divf %73, %74 : vector<2x32xf32>
    %76 = vector.extract_strided_slice %44 {offsets = [0, 32], sizes = [2, 32], strides = [1, 1]} : vector<2x128xf32> to vector<2x32xf32>
    %77 = arith.negf %76 : vector<2x32xf32>
    %78 = math.exp %77 : vector<2x32xf32>
    %cst_27 = arith.constant 1.000000e+00 : f32
    %79 = vector.broadcast %cst_27 : f32 to vector<2x32xf32>
    %80 = arith.addf %79, %78 : vector<2x32xf32>
    %81 = arith.divf %79, %80 : vector<2x32xf32>
    %82 = vector.extract_strided_slice %44 {offsets = [0, 64], sizes = [2, 32], strides = [1, 1]} : vector<2x128xf32> to vector<2x32xf32>
    %83 = math.tanh %82 : vector<2x32xf32>
    %84 = vector.extract_strided_slice %44 {offsets = [0, 96], sizes = [2, 32], strides = [1, 1]} : vector<2x128xf32> to vector<2x32xf32>
    %85 = arith.negf %84 : vector<2x32xf32>
    %86 = math.exp %85 : vector<2x32xf32>
    %cst_28 = arith.constant 1.000000e+00 : f32
    %87 = vector.broadcast %cst_28 : f32 to vector<2x32xf32>
    %88 = arith.addf %87, %86 : vector<2x32xf32>
    %89 = arith.divf %87, %88 : vector<2x32xf32>
    %90 = arith.mulf %81, %36 : vector<2x32xf32>
    %91 = arith.mulf %75, %83 : vector<2x32xf32>
    %92 = arith.addf %90, %91 : vector<2x32xf32>
    %93 = math.tanh %92 : vector<2x32xf32>
    %94 = arith.mulf %89, %93 : vector<2x32xf32>
    %c0_29 = arith.constant 0 : index
    %c0_30 = arith.constant 0 : index
    %95 = vector.load %arg14[%c0_29, %c0_30] : memref<16x64xf32, #tpu.memory_space<vmem>>, vector<2x32xf32>
    tpu.vector_store %arg14[%c0_29, %c0_30], %69 {strides = array<i32>} : memref<16x64xf32, #tpu.memory_space<vmem>>, vector<2x32xf32>,
    %c14 = arith.constant 14 : index
    %c32 = arith.constant 32 : index
    %96 = vector.load %arg14[%c14, %c32] : memref<16x64xf32, #tpu.memory_space<vmem>>, vector<2x32xf32>
    tpu.vector_store %arg14[%c14, %c32], %94 {strides = array<i32>} : memref<16x64xf32, #tpu.memory_space<vmem>>, vector<2x32xf32>,
    %97 = tpu.concatenate %69, %94 in 1 : vector<2x32xf32>, vector<2x32xf32> -> vector<2x64xf32>
    %cst_31 = arith.constant dense<0.000000e+00> : vector<2x256xf32>
    %98 = tpu.matmul %97, %35, %cst_31 {dimension_numbers = #tpu.dot_dimension_numbers<[1], [0], [0], [1], [0, 0, 1, 1], [], []>} : vector<2x64xf32>, vector<64x256xf32>, vector<2x256xf32> -> vector<2x256xf32>
    %99 = vector.extract_strided_slice %34 {offsets = [2, 0], sizes = [2, 128], strides = [1, 1]} : vector<16x256xf32> to vector<2x128xf32>
    %100 = vector.extract_strided_slice %98 {offsets = [0, 0], sizes = [2, 128], strides = [1, 1]} : vector<2x256xf32> to vector<2x128xf32>
    %101 = arith.addf %99, %100 : vector<2x128xf32>
    %102 = vector.extract_strided_slice %34 {offsets = [12, 128], sizes = [2, 128], strides = [1, 1]} : vector<16x256xf32> to vector<2x128xf32>
    %103 = vector.extract_strided_slice %98 {offsets = [0, 128], sizes = [2, 128], strides = [1, 1]} : vector<2x256xf32> to vector<2x128xf32>
    %104 = arith.addf %102, %103 : vector<2x128xf32>
    %105 = vector.extract_strided_slice %101 {offsets = [0, 0], sizes = [2, 32], strides = [1, 1]} : vector<2x128xf32> to vector<2x32xf32>
    %106 = arith.negf %105 : vector<2x32xf32>
    %107 = math.exp %106 : vector<2x32xf32>
    %cst_32 = arith.constant 1.000000e+00 : f32
    %108 = vector.broadcast %cst_32 : f32 to vector<2x32xf32>
    %109 = arith.addf %108, %107 : vector<2x32xf32>
    %110 = arith.divf %108, %109 : vector<2x32xf32>
    %111 = vector.extract_strided_slice %101 {offsets = [0, 32], sizes = [2, 32], strides = [1, 1]} : vector<2x128xf32> to vector<2x32xf32>
    %112 = arith.negf %111 : vector<2x32xf32>
    %113 = math.exp %112 : vector<2x32xf32>
    %cst_33 = arith.constant 1.000000e+00 : f32
    %114 = vector.broadcast %cst_33 : f32 to vector<2x32xf32>
    %115 = arith.addf %114, %113 : vector<2x32xf32>
    %116 = arith.divf %114, %115 : vector<2x32xf32>
    %117 = vector.extract_strided_slice %101 {offsets = [0, 64], sizes = [2, 32], strides = [1, 1]} : vector<2x128xf32> to vector<2x32xf32>
    %118 = math.tanh %117 : vector<2x32xf32>
    %119 = vector.extract_strided_slice %101 {offsets = [0, 96], sizes = [2, 32], strides = [1, 1]} : vector<2x128xf32> to vector<2x32xf32>
    %120 = arith.negf %119 : vector<2x32xf32>
    %121 = math.exp %120 : vector<2x32xf32>
    %cst_34 = arith.constant 1.000000e+00 : f32
    %122 = vector.broadcast %cst_34 : f32 to vector<2x32xf32>
    %123 = arith.addf %122, %121 : vector<2x32xf32>
    %124 = arith.divf %122, %123 : vector<2x32xf32>
    %125 = arith.mulf %116, %67 : vector<2x32xf32>
    %126 = arith.mulf %110, %118 : vector<2x32xf32>
    %127 = arith.addf %125, %126 : vector<2x32xf32>
    %128 = math.tanh %127 : vector<2x32xf32>
    %129 = arith.mulf %124, %128 : vector<2x32xf32>
    %130 = vector.extract_strided_slice %104 {offsets = [0, 0], sizes = [2, 32], strides = [1, 1]} : vector<2x128xf32> to vector<2x32xf32>
    %131 = arith.negf %130 : vector<2x32xf32>
    %132 = math.exp %131 : vector<2x32xf32>
    %cst_35 = arith.constant 1.000000e+00 : f32
    %133 = vector.broadcast %cst_35 : f32 to vector<2x32xf32>
    %134 = arith.addf %133, %132 : vector<2x32xf32>
    %135 = arith.divf %133, %134 : vector<2x32xf32>
    %136 = vector.extract_strided_slice %104 {offsets = [0, 32], sizes = [2, 32], strides = [1, 1]} : vector<2x128xf32> to vector<2x32xf32>
    %137 = arith.negf %136 : vector<2x32xf32>
    %138 = math.exp %137 : vector<2x32xf32>
    %cst_36 = arith.constant 1.000000e+00 : f32
    %139 = vector.broadcast %cst_36 : f32 to vector<2x32xf32>
    %140 = arith.addf %139, %138 : vector<2x32xf32>
    %141 = arith.divf %139, %140 : vector<2x32xf32>
    %142 = vector.extract_strided_slice %104 {offsets = [0, 64], sizes = [2, 32], strides = [1, 1]} : vector<2x128xf32> to vector<2x32xf32>
    %143 = math.tanh %142 : vector<2x32xf32>
    %144 = vector.extract_strided_slice %104 {offsets = [0, 96], sizes = [2, 32], strides = [1, 1]} : vector<2x128xf32> to vector<2x32xf32>
    %145 = arith.negf %144 : vector<2x32xf32>
    %146 = math.exp %145 : vector<2x32xf32>
    %cst_37 = arith.constant 1.000000e+00 : f32
    %147 = vector.broadcast %cst_37 : f32 to vector<2x32xf32>
    %148 = arith.addf %147, %146 : vector<2x32xf32>
    %149 = arith.divf %147, %148 : vector<2x32xf32>
    %150 = arith.mulf %141, %92 : vector<2x32xf32>
    %151 = arith.mulf %135, %143 : vector<2x32xf32>
    %152 = arith.addf %150, %151 : vector<2x32xf32>
    %153 = math.tanh %152 : vector<2x32xf32>
    %154 = arith.mulf %149, %153 : vector<2x32xf32>
    %c2 = arith.constant 2 : index
    %c0_38 = arith.constant 0 : index
    %155 = vector.load %arg14[%c2, %c0_38] : memref<16x64xf32, #tpu.memory_space<vmem>>, vector<2x32xf32>
    tpu.vector_store %arg14[%c2, %c0_38], %129 {strides = array<i32>} : memref<16x64xf32, #tpu.memory_space<vmem>>, vector<2x32xf32>,
    %c12 = arith.constant 12 : index
    %c32_39 = arith.constant 32 : index
    %156 = vector.load %arg14[%c12, %c32_39] : memref<16x64xf32, #tpu.memory_space<vmem>>, vector<2x32xf32>
    tpu.vector_store %arg14[%c12, %c32_39], %154 {strides = array<i32>} : memref<16x64xf32, #tpu.memory_space<vmem>>, vector<2x32xf32>,
    %157 = tpu.concatenate %129, %154 in 1 : vector<2x32xf32>, vector<2x32xf32> -> vector<2x64xf32>
    %cst_40 = arith.constant dense<0.000000e+00> : vector<2x256xf32>
    %158 = tpu.matmul %157, %35, %cst_40 {dimension_numbers = #tpu.dot_dimension_numbers<[1], [0], [0], [1], [0, 0, 1, 1], [], []>} : vector<2x64xf32>, vector<64x256xf32>, vector<2x256xf32> -> vector<2x256xf32>
    %159 = vector.extract_strided_slice %34 {offsets = [4, 0], sizes = [2, 128], strides = [1, 1]} : vector<16x256xf32> to vector<2x128xf32>
    %160 = vector.extract_strided_slice %158 {offsets = [0, 0], sizes = [2, 128], strides = [1, 1]} : vector<2x256xf32> to vector<2x128xf32>
    %161 = arith.addf %159, %160 : vector<2x128xf32>
    %162 = vector.extract_strided_slice %34 {offsets = [10, 128], sizes = [2, 128], strides = [1, 1]} : vector<16x256xf32> to vector<2x128xf32>
    %163 = vector.extract_strided_slice %158 {offsets = [0, 128], sizes = [2, 128], strides = [1, 1]} : vector<2x256xf32> to vector<2x128xf32>
    %164 = arith.addf %162, %163 : vector<2x128xf32>
    %165 = vector.extract_strided_slice %161 {offsets = [0, 0], sizes = [2, 32], strides = [1, 1]} : vector<2x128xf32> to vector<2x32xf32>
    %166 = arith.negf %165 : vector<2x32xf32>
    %167 = math.exp %166 : vector<2x32xf32>
    %cst_41 = arith.constant 1.000000e+00 : f32
    %168 = vector.broadcast %cst_41 : f32 to vector<2x32xf32>
    %169 = arith.addf %168, %167 : vector<2x32xf32>
    %170 = arith.divf %168, %169 : vector<2x32xf32>
    %171 = vector.extract_strided_slice %161 {offsets = [0, 32], sizes = [2, 32], strides = [1, 1]} : vector<2x128xf32> to vector<2x32xf32>
    %172 = arith.negf %171 : vector<2x32xf32>
    %173 = math.exp %172 : vector<2x32xf32>
    %cst_42 = arith.constant 1.000000e+00 : f32
    %174 = vector.broadcast %cst_42 : f32 to vector<2x32xf32>
    %175 = arith.addf %174, %173 : vector<2x32xf32>
    %176 = arith.divf %174, %175 : vector<2x32xf32>
    %177 = vector.extract_strided_slice %161 {offsets = [0, 64], sizes = [2, 32], strides = [1, 1]} : vector<2x128xf32> to vector<2x32xf32>
    %178 = math.tanh %177 : vector<2x32xf32>
    %179 = vector.extract_strided_slice %161 {offsets = [0, 96], sizes = [2, 32], strides = [1, 1]} : vector<2x128xf32> to vector<2x32xf32>
    %180 = arith.negf %179 : vector<2x32xf32>
    %181 = math.exp %180 : vector<2x32xf32>
    %cst_43 = arith.constant 1.000000e+00 : f32
    %182 = vector.broadcast %cst_43 : f32 to vector<2x32xf32>
    %183 = arith.addf %182, %181 : vector<2x32xf32>
    %184 = arith.divf %182, %183 : vector<2x32xf32>
    %185 = arith.mulf %176, %127 : vector<2x32xf32>
    %186 = arith.mulf %170, %178 : vector<2x32xf32>
    %187 = arith.addf %185, %186 : vector<2x32xf32>
    %188 = math.tanh %187 : vector<2x32xf32>
    %189 = arith.mulf %184, %188 : vector<2x32xf32>
    %190 = vector.extract_strided_slice %164 {offsets = [0, 0], sizes = [2, 32], strides = [1, 1]} : vector<2x128xf32> to vector<2x32xf32>
    %191 = arith.negf %190 : vector<2x32xf32>
    %192 = math.exp %191 : vector<2x32xf32>
    %cst_44 = arith.constant 1.000000e+00 : f32
    %193 = vector.broadcast %cst_44 : f32 to vector<2x32xf32>
    %194 = arith.addf %193, %192 : vector<2x32xf32>
    %195 = arith.divf %193, %194 : vector<2x32xf32>
    %196 = vector.extract_strided_slice %164 {offsets = [0, 32], sizes = [2, 32], strides = [1, 1]} : vector<2x128xf32> to vector<2x32xf32>
    %197 = arith.negf %196 : vector<2x32xf32>
    %198 = math.exp %197 : vector<2x32xf32>
    %cst_45 = arith.constant 1.000000e+00 : f32
    %199 = vector.broadcast %cst_45 : f32 to vector<2x32xf32>
    %200 = arith.addf %199, %198 : vector<2x32xf32>
    %201 = arith.divf %199, %200 : vector<2x32xf32>
    %202 = vector.extract_strided_slice %164 {offsets = [0, 64], sizes = [2, 32], strides = [1, 1]} : vector<2x128xf32> to vector<2x32xf32>
    %203 = math.tanh %202 : vector<2x32xf32>
    %204 = vector.extract_strided_slice %164 {offsets = [0, 96], sizes = [2, 32], strides = [1, 1]} : vector<2x128xf32> to vector<2x32xf32>
    %205 = arith.negf %204 : vector<2x32xf32>
    %206 = math.exp %205 : vector<2x32xf32>
    %cst_46 = arith.constant 1.000000e+00 : f32
    %207 = vector.broadcast %cst_46 : f32 to vector<2x32xf32>
    %208 = arith.addf %207, %206 : vector<2x32xf32>
    %209 = arith.divf %207, %208 : vector<2x32xf32>
    %210 = arith.mulf %201, %152 : vector<2x32xf32>
    %211 = arith.mulf %195, %203 : vector<2x32xf32>
    %212 = arith.addf %210, %211 : vector<2x32xf32>
    %213 = math.tanh %212 : vector<2x32xf32>
    %214 = arith.mulf %209, %213 : vector<2x32xf32>
    %c4 = arith.constant 4 : index
    %c0_47 = arith.constant 0 : index
    %215 = vector.load %arg14[%c4, %c0_47] : memref<16x64xf32, #tpu.memory_space<vmem>>, vector<2x32xf32>
    tpu.vector_store %arg14[%c4, %c0_47], %189 {strides = array<i32>} : memref<16x64xf32, #tpu.memory_space<vmem>>, vector<2x32xf32>,
    %c10 = arith.constant 10 : index
    %c32_48 = arith.constant 32 : index
    %216 = vector.load %arg14[%c10, %c32_48] : memref<16x64xf32, #tpu.memory_space<vmem>>, vector<2x32xf32>
    tpu.vector_store %arg14[%c10, %c32_48], %214 {strides = array<i32>} : memref<16x64xf32, #tpu.memory_space<vmem>>, vector<2x32xf32>,
    %217 = tpu.concatenate %189, %214 in 1 : vector<2x32xf32>, vector<2x32xf32> -> vector<2x64xf32>
    %cst_49 = arith.constant dense<0.000000e+00> : vector<2x256xf32>
    %218 = tpu.matmul %217, %35, %cst_49 {dimension_numbers = #tpu.dot_dimension_numbers<[1], [0], [0], [1], [0, 0, 1, 1], [], []>} : vector<2x64xf32>, vector<64x256xf32>, vector<2x256xf32> -> vector<2x256xf32>
    %219 = vector.extract_strided_slice %34 {offsets = [6, 0], sizes = [2, 128], strides = [1, 1]} : vector<16x256xf32> to vector<2x128xf32>
    %220 = vector.extract_strided_slice %218 {offsets = [0, 0], sizes = [2, 128], strides = [1, 1]} : vector<2x256xf32> to vector<2x128xf32>
    %221 = arith.addf %219, %220 : vector<2x128xf32>
    %222 = vector.extract_strided_slice %34 {offsets = [8, 128], sizes = [2, 128], strides = [1, 1]} : vector<16x256xf32> to vector<2x128xf32>
    %223 = vector.extract_strided_slice %218 {offsets = [0, 128], sizes = [2, 128], strides = [1, 1]} : vector<2x256xf32> to vector<2x128xf32>
    %224 = arith.addf %222, %223 : vector<2x128xf32>
    %225 = vector.extract_strided_slice %221 {offsets = [0, 0], sizes = [2, 32], strides = [1, 1]} : vector<2x128xf32> to vector<2x32xf32>
    %226 = arith.negf %225 : vector<2x32xf32>
    %227 = math.exp %226 : vector<2x32xf32>
    %cst_50 = arith.constant 1.000000e+00 : f32
    %228 = vector.broadcast %cst_50 : f32 to vector<2x32xf32>
    %229 = arith.addf %228, %227 : vector<2x32xf32>
    %230 = arith.divf %228, %229 : vector<2x32xf32>
    %231 = vector.extract_strided_slice %221 {offsets = [0, 32], sizes = [2, 32], strides = [1, 1]} : vector<2x128xf32> to vector<2x32xf32>
    %232 = arith.negf %231 : vector<2x32xf32>
    %233 = math.exp %232 : vector<2x32xf32>
    %cst_51 = arith.constant 1.000000e+00 : f32
    %234 = vector.broadcast %cst_51 : f32 to vector<2x32xf32>
    %235 = arith.addf %234, %233 : vector<2x32xf32>
    %236 = arith.divf %234, %235 : vector<2x32xf32>
    %237 = vector.extract_strided_slice %221 {offsets = [0, 64], sizes = [2, 32], strides = [1, 1]} : vector<2x128xf32> to vector<2x32xf32>
    %238 = math.tanh %237 : vector<2x32xf32>
    %239 = vector.extract_strided_slice %221 {offsets = [0, 96], sizes = [2, 32], strides = [1, 1]} : vector<2x128xf32> to vector<2x32xf32>
    %240 = arith.negf %239 : vector<2x32xf32>
    %241 = math.exp %240 : vector<2x32xf32>
    %cst_52 = arith.constant 1.000000e+00 : f32
    %242 = vector.broadcast %cst_52 : f32 to vector<2x32xf32>
    %243 = arith.addf %242, %241 : vector<2x32xf32>
    %244 = arith.divf %242, %243 : vector<2x32xf32>
    %245 = arith.mulf %236, %187 : vector<2x32xf32>
    %246 = arith.mulf %230, %238 : vector<2x32xf32>
    %247 = arith.addf %245, %246 : vector<2x32xf32>
    %248 = math.tanh %247 : vector<2x32xf32>
    %249 = arith.mulf %244, %248 : vector<2x32xf32>
    %250 = vector.extract_strided_slice %224 {offsets = [0, 0], sizes = [2, 32], strides = [1, 1]} : vector<2x128xf32> to vector<2x32xf32>
    %251 = arith.negf %250 : vector<2x32xf32>
    %252 = math.exp %251 : vector<2x32xf32>
    %cst_53 = arith.constant 1.000000e+00 : f32
    %253 = vector.broadcast %cst_53 : f32 to vector<2x32xf32>
    %254 = arith.addf %253, %252 : vector<2x32xf32>
    %255 = arith.divf %253, %254 : vector<2x32xf32>
    %256 = vector.extract_strided_slice %224 {offsets = [0, 32], sizes = [2, 32], strides = [1, 1]} : vector<2x128xf32> to vector<2x32xf32>
    %257 = arith.negf %256 : vector<2x32xf32>
    %258 = math.exp %257 : vector<2x32xf32>
    %cst_54 = arith.constant 1.000000e+00 : f32
    %259 = vector.broadcast %cst_54 : f32 to vector<2x32xf32>
    %260 = arith.addf %259, %258 : vector<2x32xf32>
    %261 = arith.divf %259, %260 : vector<2x32xf32>
    %262 = vector.extract_strided_slice %224 {offsets = [0, 64], sizes = [2, 32], strides = [1, 1]} : vector<2x128xf32> to vector<2x32xf32>
    %263 = math.tanh %262 : vector<2x32xf32>
    %264 = vector.extract_strided_slice %224 {offsets = [0, 96], sizes = [2, 32], strides = [1, 1]} : vector<2x128xf32> to vector<2x32xf32>
    %265 = arith.negf %264 : vector<2x32xf32>
    %266 = math.exp %265 : vector<2x32xf32>
    %cst_55 = arith.constant 1.000000e+00 : f32
    %267 = vector.broadcast %cst_55 : f32 to vector<2x32xf32>
    %268 = arith.addf %267, %266 : vector<2x32xf32>
    %269 = arith.divf %267, %268 : vector<2x32xf32>
    %270 = arith.mulf %261, %212 : vector<2x32xf32>
    %271 = arith.mulf %255, %263 : vector<2x32xf32>
    %272 = arith.addf %270, %271 : vector<2x32xf32>
    %273 = math.tanh %272 : vector<2x32xf32>
    %274 = arith.mulf %269, %273 : vector<2x32xf32>
    %c6 = arith.constant 6 : index
    %c0_56 = arith.constant 0 : index
    %275 = vector.load %arg14[%c6, %c0_56] : memref<16x64xf32, #tpu.memory_space<vmem>>, vector<2x32xf32>
    tpu.vector_store %arg14[%c6, %c0_56], %249 {strides = array<i32>} : memref<16x64xf32, #tpu.memory_space<vmem>>, vector<2x32xf32>,
    %c8 = arith.constant 8 : index
    %c32_57 = arith.constant 32 : index
    %276 = vector.load %arg14[%c8, %c32_57] : memref<16x64xf32, #tpu.memory_space<vmem>>, vector<2x32xf32>
    tpu.vector_store %arg14[%c8, %c32_57], %274 {strides = array<i32>} : memref<16x64xf32, #tpu.memory_space<vmem>>, vector<2x32xf32>,
    %277 = tpu.concatenate %249, %274 in 1 : vector<2x32xf32>, vector<2x32xf32> -> vector<2x64xf32>
    %cst_58 = arith.constant dense<0.000000e+00> : vector<2x256xf32>
    %278 = tpu.matmul %277, %35, %cst_58 {dimension_numbers = #tpu.dot_dimension_numbers<[1], [0], [0], [1], [0, 0, 1, 1], [], []>} : vector<2x64xf32>, vector<64x256xf32>, vector<2x256xf32> -> vector<2x256xf32>
    %279 = vector.extract_strided_slice %34 {offsets = [8, 0], sizes = [2, 128], strides = [1, 1]} : vector<16x256xf32> to vector<2x128xf32>
    %280 = vector.extract_strided_slice %278 {offsets = [0, 0], sizes = [2, 128], strides = [1, 1]} : vector<2x256xf32> to vector<2x128xf32>
    %281 = arith.addf %279, %280 : vector<2x128xf32>
    %282 = vector.extract_strided_slice %34 {offsets = [6, 128], sizes = [2, 128], strides = [1, 1]} : vector<16x256xf32> to vector<2x128xf32>
    %283 = vector.extract_strided_slice %278 {offsets = [0, 128], sizes = [2, 128], strides = [1, 1]} : vector<2x256xf32> to vector<2x128xf32>
    %284 = arith.addf %282, %283 : vector<2x128xf32>
    %285 = vector.extract_strided_slice %281 {offsets = [0, 0], sizes = [2, 32], strides = [1, 1]} : vector<2x128xf32> to vector<2x32xf32>
    %286 = arith.negf %285 : vector<2x32xf32>
    %287 = math.exp %286 : vector<2x32xf32>
    %cst_59 = arith.constant 1.000000e+00 : f32
    %288 = vector.broadcast %cst_59 : f32 to vector<2x32xf32>
    %289 = arith.addf %288, %287 : vector<2x32xf32>
    %290 = arith.divf %288, %289 : vector<2x32xf32>
    %291 = vector.extract_strided_slice %281 {offsets = [0, 32], sizes = [2, 32], strides = [1, 1]} : vector<2x128xf32> to vector<2x32xf32>
    %292 = arith.negf %291 : vector<2x32xf32>
    %293 = math.exp %292 : vector<2x32xf32>
    %cst_60 = arith.constant 1.000000e+00 : f32
    %294 = vector.broadcast %cst_60 : f32 to vector<2x32xf32>
    %295 = arith.addf %294, %293 : vector<2x32xf32>
    %296 = arith.divf %294, %295 : vector<2x32xf32>
    %297 = vector.extract_strided_slice %281 {offsets = [0, 64], sizes = [2, 32], strides = [1, 1]} : vector<2x128xf32> to vector<2x32xf32>
    %298 = math.tanh %297 : vector<2x32xf32>
    %299 = vector.extract_strided_slice %281 {offsets = [0, 96], sizes = [2, 32], strides = [1, 1]} : vector<2x128xf32> to vector<2x32xf32>
    %300 = arith.negf %299 : vector<2x32xf32>
    %301 = math.exp %300 : vector<2x32xf32>
    %cst_61 = arith.constant 1.000000e+00 : f32
    %302 = vector.broadcast %cst_61 : f32 to vector<2x32xf32>
    %303 = arith.addf %302, %301 : vector<2x32xf32>
    %304 = arith.divf %302, %303 : vector<2x32xf32>
    %305 = arith.mulf %296, %247 : vector<2x32xf32>
    %306 = arith.mulf %290, %298 : vector<2x32xf32>
    %307 = arith.addf %305, %306 : vector<2x32xf32>
    %308 = math.tanh %307 : vector<2x32xf32>
    %309 = arith.mulf %304, %308 : vector<2x32xf32>
    %310 = vector.extract_strided_slice %284 {offsets = [0, 0], sizes = [2, 32], strides = [1, 1]} : vector<2x128xf32> to vector<2x32xf32>
    %311 = arith.negf %310 : vector<2x32xf32>
    %312 = math.exp %311 : vector<2x32xf32>
    %cst_62 = arith.constant 1.000000e+00 : f32
    %313 = vector.broadcast %cst_62 : f32 to vector<2x32xf32>
    %314 = arith.addf %313, %312 : vector<2x32xf32>
    %315 = arith.divf %313, %314 : vector<2x32xf32>
    %316 = vector.extract_strided_slice %284 {offsets = [0, 32], sizes = [2, 32], strides = [1, 1]} : vector<2x128xf32> to vector<2x32xf32>
    %317 = arith.negf %316 : vector<2x32xf32>
    %318 = math.exp %317 : vector<2x32xf32>
    %cst_63 = arith.constant 1.000000e+00 : f32
    %319 = vector.broadcast %cst_63 : f32 to vector<2x32xf32>
    %320 = arith.addf %319, %318 : vector<2x32xf32>
    %321 = arith.divf %319, %320 : vector<2x32xf32>
    %322 = vector.extract_strided_slice %284 {offsets = [0, 64], sizes = [2, 32], strides = [1, 1]} : vector<2x128xf32> to vector<2x32xf32>
    %323 = math.tanh %322 : vector<2x32xf32>
    %324 = vector.extract_strided_slice %284 {offsets = [0, 96], sizes = [2, 32], strides = [1, 1]} : vector<2x128xf32> to vector<2x32xf32>
    %325 = arith.negf %324 : vector<2x32xf32>
    %326 = math.exp %325 : vector<2x32xf32>
    %cst_64 = arith.constant 1.000000e+00 : f32
    %327 = vector.broadcast %cst_64 : f32 to vector<2x32xf32>
    %328 = arith.addf %327, %326 : vector<2x32xf32>
    %329 = arith.divf %327, %328 : vector<2x32xf32>
    %330 = arith.mulf %321, %272 : vector<2x32xf32>
    %331 = arith.mulf %315, %323 : vector<2x32xf32>
    %332 = arith.addf %330, %331 : vector<2x32xf32>
    %333 = math.tanh %332 : vector<2x32xf32>
    %334 = arith.mulf %329, %333 : vector<2x32xf32>
    %c8_65 = arith.constant 8 : index
    %c0_66 = arith.constant 0 : index
    %335 = vector.load %arg14[%c8_65, %c0_66] : memref<16x64xf32, #tpu.memory_space<vmem>>, vector<2x32xf32>
    tpu.vector_store %arg14[%c8_65, %c0_66], %309 {strides = array<i32>} : memref<16x64xf32, #tpu.memory_space<vmem>>, vector<2x32xf32>,
    %c6_67 = arith.constant 6 : index
    %c32_68 = arith.constant 32 : index
    %336 = vector.load %arg14[%c6_67, %c32_68] : memref<16x64xf32, #tpu.memory_space<vmem>>, vector<2x32xf32>
    tpu.vector_store %arg14[%c6_67, %c32_68], %334 {strides = array<i32>} : memref<16x64xf32, #tpu.memory_space<vmem>>, vector<2x32xf32>,
    %337 = tpu.concatenate %309, %334 in 1 : vector<2x32xf32>, vector<2x32xf32> -> vector<2x64xf32>
    %cst_69 = arith.constant dense<0.000000e+00> : vector<2x256xf32>
    %338 = tpu.matmul %337, %35, %cst_69 {dimension_numbers = #tpu.dot_dimension_numbers<[1], [0], [0], [1], [0, 0, 1, 1], [], []>} : vector<2x64xf32>, vector<64x256xf32>, vector<2x256xf32> -> vector<2x256xf32>
    %339 = vector.extract_strided_slice %34 {offsets = [10, 0], sizes = [2, 128], strides = [1, 1]} : vector<16x256xf32> to vector<2x128xf32>
    %340 = vector.extract_strided_slice %338 {offsets = [0, 0], sizes = [2, 128], strides = [1, 1]} : vector<2x256xf32> to vector<2x128xf32>
    %341 = arith.addf %339, %340 : vector<2x128xf32>
    %342 = vector.extract_strided_slice %34 {offsets = [4, 128], sizes = [2, 128], strides = [1, 1]} : vector<16x256xf32> to vector<2x128xf32>
    %343 = vector.extract_strided_slice %338 {offsets = [0, 128], sizes = [2, 128], strides = [1, 1]} : vector<2x256xf32> to vector<2x128xf32>
    %344 = arith.addf %342, %343 : vector<2x128xf32>
    %345 = vector.extract_strided_slice %341 {offsets = [0, 0], sizes = [2, 32], strides = [1, 1]} : vector<2x128xf32> to vector<2x32xf32>
    %346 = arith.negf %345 : vector<2x32xf32>
    %347 = math.exp %346 : vector<2x32xf32>
    %cst_70 = arith.constant 1.000000e+00 : f32
    %348 = vector.broadcast %cst_70 : f32 to vector<2x32xf32>
    %349 = arith.addf %348, %347 : vector<2x32xf32>
    %350 = arith.divf %348, %349 : vector<2x32xf32>
    %351 = vector.extract_strided_slice %341 {offsets = [0, 32], sizes = [2, 32], strides = [1, 1]} : vector<2x128xf32> to vector<2x32xf32>
    %352 = arith.negf %351 : vector<2x32xf32>
    %353 = math.exp %352 : vector<2x32xf32>
    %cst_71 = arith.constant 1.000000e+00 : f32
    %354 = vector.broadcast %cst_71 : f32 to vector<2x32xf32>
    %355 = arith.addf %354, %353 : vector<2x32xf32>
    %356 = arith.divf %354, %355 : vector<2x32xf32>
    %357 = vector.extract_strided_slice %341 {offsets = [0, 64], sizes = [2, 32], strides = [1, 1]} : vector<2x128xf32> to vector<2x32xf32>
    %358 = math.tanh %357 : vector<2x32xf32>
    %359 = vector.extract_strided_slice %341 {offsets = [0, 96], sizes = [2, 32], strides = [1, 1]} : vector<2x128xf32> to vector<2x32xf32>
    %360 = arith.negf %359 : vector<2x32xf32>
    %361 = math.exp %360 : vector<2x32xf32>
    %cst_72 = arith.constant 1.000000e+00 : f32
    %362 = vector.broadcast %cst_72 : f32 to vector<2x32xf32>
    %363 = arith.addf %362, %361 : vector<2x32xf32>
    %364 = arith.divf %362, %363 : vector<2x32xf32>
    %365 = arith.mulf %356, %307 : vector<2x32xf32>
    %366 = arith.mulf %350, %358 : vector<2x32xf32>
    %367 = arith.addf %365, %366 : vector<2x32xf32>
    %368 = math.tanh %367 : vector<2x32xf32>
    %369 = arith.mulf %364, %368 : vector<2x32xf32>
    %370 = vector.extract_strided_slice %344 {offsets = [0, 0], sizes = [2, 32], strides = [1, 1]} : vector<2x128xf32> to vector<2x32xf32>
    %371 = arith.negf %370 : vector<2x32xf32>
    %372 = math.exp %371 : vector<2x32xf32>
    %cst_73 = arith.constant 1.000000e+00 : f32
    %373 = vector.broadcast %cst_73 : f32 to vector<2x32xf32>
    %374 = arith.addf %373, %372 : vector<2x32xf32>
    %375 = arith.divf %373, %374 : vector<2x32xf32>
    %376 = vector.extract_strided_slice %344 {offsets = [0, 32], sizes = [2, 32], strides = [1, 1]} : vector<2x128xf32> to vector<2x32xf32>
    %377 = arith.negf %376 : vector<2x32xf32>
    %378 = math.exp %377 : vector<2x32xf32>
    %cst_74 = arith.constant 1.000000e+00 : f32
    %379 = vector.broadcast %cst_74 : f32 to vector<2x32xf32>
    %380 = arith.addf %379, %378 : vector<2x32xf32>
    %381 = arith.divf %379, %380 : vector<2x32xf32>
    %382 = vector.extract_strided_slice %344 {offsets = [0, 64], sizes = [2, 32], strides = [1, 1]} : vector<2x128xf32> to vector<2x32xf32>
    %383 = math.tanh %382 : vector<2x32xf32>
    %384 = vector.extract_strided_slice %344 {offsets = [0, 96], sizes = [2, 32], strides = [1, 1]} : vector<2x128xf32> to vector<2x32xf32>
    %385 = arith.negf %384 : vector<2x32xf32>
    %386 = math.exp %385 : vector<2x32xf32>
    %cst_75 = arith.constant 1.000000e+00 : f32
    %387 = vector.broadcast %cst_75 : f32 to vector<2x32xf32>
    %388 = arith.addf %387, %386 : vector<2x32xf32>
    %389 = arith.divf %387, %388 : vector<2x32xf32>
    %390 = arith.mulf %381, %332 : vector<2x32xf32>
    %391 = arith.mulf %375, %383 : vector<2x32xf32>
    %392 = arith.addf %390, %391 : vector<2x32xf32>
    %393 = math.tanh %392 : vector<2x32xf32>
    %394 = arith.mulf %389, %393 : vector<2x32xf32>
    %c10_76 = arith.constant 10 : index
    %c0_77 = arith.constant 0 : index
    %395 = vector.load %arg14[%c10_76, %c0_77] : memref<16x64xf32, #tpu.memory_space<vmem>>, vector<2x32xf32>
    tpu.vector_store %arg14[%c10_76, %c0_77], %369 {strides = array<i32>} : memref<16x64xf32, #tpu.memory_space<vmem>>, vector<2x32xf32>,
    %c4_78 = arith.constant 4 : index
    %c32_79 = arith.constant 32 : index
    %396 = vector.load %arg14[%c4_78, %c32_79] : memref<16x64xf32, #tpu.memory_space<vmem>>, vector<2x32xf32>
    tpu.vector_store %arg14[%c4_78, %c32_79], %394 {strides = array<i32>} : memref<16x64xf32, #tpu.memory_space<vmem>>, vector<2x32xf32>,
    %397 = tpu.concatenate %369, %394 in 1 : vector<2x32xf32>, vector<2x32xf32> -> vector<2x64xf32>
    %cst_80 = arith.constant dense<0.000000e+00> : vector<2x256xf32>
    %398 = tpu.matmul %397, %35, %cst_80 {dimension_numbers = #tpu.dot_dimension_numbers<[1], [0], [0], [1], [0, 0, 1, 1], [], []>} : vector<2x64xf32>, vector<64x256xf32>, vector<2x256xf32> -> vector<2x256xf32>
    %399 = vector.extract_strided_slice %34 {offsets = [12, 0], sizes = [2, 128], strides = [1, 1]} : vector<16x256xf32> to vector<2x128xf32>
    %400 = vector.extract_strided_slice %398 {offsets = [0, 0], sizes = [2, 128], strides = [1, 1]} : vector<2x256xf32> to vector<2x128xf32>
    %401 = arith.addf %399, %400 : vector<2x128xf32>
    %402 = vector.extract_strided_slice %34 {offsets = [2, 128], sizes = [2, 128], strides = [1, 1]} : vector<16x256xf32> to vector<2x128xf32>
    %403 = vector.extract_strided_slice %398 {offsets = [0, 128], sizes = [2, 128], strides = [1, 1]} : vector<2x256xf32> to vector<2x128xf32>
    %404 = arith.addf %402, %403 : vector<2x128xf32>
    %405 = vector.extract_strided_slice %401 {offsets = [0, 0], sizes = [2, 32], strides = [1, 1]} : vector<2x128xf32> to vector<2x32xf32>
    %406 = arith.negf %405 : vector<2x32xf32>
    %407 = math.exp %406 : vector<2x32xf32>
    %cst_81 = arith.constant 1.000000e+00 : f32
    %408 = vector.broadcast %cst_81 : f32 to vector<2x32xf32>
    %409 = arith.addf %408, %407 : vector<2x32xf32>
    %410 = arith.divf %408, %409 : vector<2x32xf32>
    %411 = vector.extract_strided_slice %401 {offsets = [0, 32], sizes = [2, 32], strides = [1, 1]} : vector<2x128xf32> to vector<2x32xf32>
    %412 = arith.negf %411 : vector<2x32xf32>
    %413 = math.exp %412 : vector<2x32xf32>
    %cst_82 = arith.constant 1.000000e+00 : f32
    %414 = vector.broadcast %cst_82 : f32 to vector<2x32xf32>
    %415 = arith.addf %414, %413 : vector<2x32xf32>
    %416 = arith.divf %414, %415 : vector<2x32xf32>
    %417 = vector.extract_strided_slice %401 {offsets = [0, 64], sizes = [2, 32], strides = [1, 1]} : vector<2x128xf32> to vector<2x32xf32>
    %418 = math.tanh %417 : vector<2x32xf32>
    %419 = vector.extract_strided_slice %401 {offsets = [0, 96], sizes = [2, 32], strides = [1, 1]} : vector<2x128xf32> to vector<2x32xf32>
    %420 = arith.negf %419 : vector<2x32xf32>
    %421 = math.exp %420 : vector<2x32xf32>
    %cst_83 = arith.constant 1.000000e+00 : f32
    %422 = vector.broadcast %cst_83 : f32 to vector<2x32xf32>
    %423 = arith.addf %422, %421 : vector<2x32xf32>
    %424 = arith.divf %422, %423 : vector<2x32xf32>
    %425 = arith.mulf %416, %367 : vector<2x32xf32>
    %426 = arith.mulf %410, %418 : vector<2x32xf32>
    %427 = arith.addf %425, %426 : vector<2x32xf32>
    %428 = math.tanh %427 : vector<2x32xf32>
    %429 = arith.mulf %424, %428 : vector<2x32xf32>
    %430 = vector.extract_strided_slice %404 {offsets = [0, 0], sizes = [2, 32], strides = [1, 1]} : vector<2x128xf32> to vector<2x32xf32>
    %431 = arith.negf %430 : vector<2x32xf32>
    %432 = math.exp %431 : vector<2x32xf32>
    %cst_84 = arith.constant 1.000000e+00 : f32
    %433 = vector.broadcast %cst_84 : f32 to vector<2x32xf32>
    %434 = arith.addf %433, %432 : vector<2x32xf32>
    %435 = arith.divf %433, %434 : vector<2x32xf32>
    %436 = vector.extract_strided_slice %404 {offsets = [0, 32], sizes = [2, 32], strides = [1, 1]} : vector<2x128xf32> to vector<2x32xf32>
    %437 = arith.negf %436 : vector<2x32xf32>
    %438 = math.exp %437 : vector<2x32xf32>
    %cst_85 = arith.constant 1.000000e+00 : f32
    %439 = vector.broadcast %cst_85 : f32 to vector<2x32xf32>
    %440 = arith.addf %439, %438 : vector<2x32xf32>
    %441 = arith.divf %439, %440 : vector<2x32xf32>
    %442 = vector.extract_strided_slice %404 {offsets = [0, 64], sizes = [2, 32], strides = [1, 1]} : vector<2x128xf32> to vector<2x32xf32>
    %443 = math.tanh %442 : vector<2x32xf32>
    %444 = vector.extract_strided_slice %404 {offsets = [0, 96], sizes = [2, 32], strides = [1, 1]} : vector<2x128xf32> to vector<2x32xf32>
    %445 = arith.negf %444 : vector<2x32xf32>
    %446 = math.exp %445 : vector<2x32xf32>
    %cst_86 = arith.constant 1.000000e+00 : f32
    %447 = vector.broadcast %cst_86 : f32 to vector<2x32xf32>
    %448 = arith.addf %447, %446 : vector<2x32xf32>
    %449 = arith.divf %447, %448 : vector<2x32xf32>
    %450 = arith.mulf %441, %392 : vector<2x32xf32>
    %451 = arith.mulf %435, %443 : vector<2x32xf32>
    %452 = arith.addf %450, %451 : vector<2x32xf32>
    %453 = math.tanh %452 : vector<2x32xf32>
    %454 = arith.mulf %449, %453 : vector<2x32xf32>
    %c12_87 = arith.constant 12 : index
    %c0_88 = arith.constant 0 : index
    %455 = vector.load %arg14[%c12_87, %c0_88] : memref<16x64xf32, #tpu.memory_space<vmem>>, vector<2x32xf32>
    tpu.vector_store %arg14[%c12_87, %c0_88], %429 {strides = array<i32>} : memref<16x64xf32, #tpu.memory_space<vmem>>, vector<2x32xf32>,
    %c2_89 = arith.constant 2 : index
    %c32_90 = arith.constant 32 : index
    %456 = vector.load %arg14[%c2_89, %c32_90] : memref<16x64xf32, #tpu.memory_space<vmem>>, vector<2x32xf32>
    tpu.vector_store %arg14[%c2_89, %c32_90], %454 {strides = array<i32>} : memref<16x64xf32, #tpu.memory_space<vmem>>, vector<2x32xf32>,
    %457 = tpu.concatenate %429, %454 in 1 : vector<2x32xf32>, vector<2x32xf32> -> vector<2x64xf32>
    %cst_91 = arith.constant dense<0.000000e+00> : vector<2x256xf32>
    %458 = tpu.matmul %457, %35, %cst_91 {dimension_numbers = #tpu.dot_dimension_numbers<[1], [0], [0], [1], [0, 0, 1, 1], [], []>} : vector<2x64xf32>, vector<64x256xf32>, vector<2x256xf32> -> vector<2x256xf32>
    %459 = vector.extract_strided_slice %34 {offsets = [14, 0], sizes = [2, 128], strides = [1, 1]} : vector<16x256xf32> to vector<2x128xf32>
    %460 = vector.extract_strided_slice %458 {offsets = [0, 0], sizes = [2, 128], strides = [1, 1]} : vector<2x256xf32> to vector<2x128xf32>
    %461 = arith.addf %459, %460 : vector<2x128xf32>
    %462 = vector.extract_strided_slice %34 {offsets = [0, 128], sizes = [2, 128], strides = [1, 1]} : vector<16x256xf32> to vector<2x128xf32>
    %463 = vector.extract_strided_slice %458 {offsets = [0, 128], sizes = [2, 128], strides = [1, 1]} : vector<2x256xf32> to vector<2x128xf32>
    %464 = arith.addf %462, %463 : vector<2x128xf32>
    %465 = vector.extract_strided_slice %461 {offsets = [0, 0], sizes = [2, 32], strides = [1, 1]} : vector<2x128xf32> to vector<2x32xf32>
    %466 = arith.negf %465 : vector<2x32xf32>
    %467 = math.exp %466 : vector<2x32xf32>
    %cst_92 = arith.constant 1.000000e+00 : f32
    %468 = vector.broadcast %cst_92 : f32 to vector<2x32xf32>
    %469 = arith.addf %468, %467 : vector<2x32xf32>
    %470 = arith.divf %468, %469 : vector<2x32xf32>
    %471 = vector.extract_strided_slice %461 {offsets = [0, 32], sizes = [2, 32], strides = [1, 1]} : vector<2x128xf32> to vector<2x32xf32>
    %472 = arith.negf %471 : vector<2x32xf32>
    %473 = math.exp %472 : vector<2x32xf32>
    %cst_93 = arith.constant 1.000000e+00 : f32
    %474 = vector.broadcast %cst_93 : f32 to vector<2x32xf32>
    %475 = arith.addf %474, %473 : vector<2x32xf32>
    %476 = arith.divf %474, %475 : vector<2x32xf32>
    %477 = vector.extract_strided_slice %461 {offsets = [0, 64], sizes = [2, 32], strides = [1, 1]} : vector<2x128xf32> to vector<2x32xf32>
    %478 = math.tanh %477 : vector<2x32xf32>
    %479 = vector.extract_strided_slice %461 {offsets = [0, 96], sizes = [2, 32], strides = [1, 1]} : vector<2x128xf32> to vector<2x32xf32>
    %480 = arith.negf %479 : vector<2x32xf32>
    %481 = math.exp %480 : vector<2x32xf32>
    %cst_94 = arith.constant 1.000000e+00 : f32
    %482 = vector.broadcast %cst_94 : f32 to vector<2x32xf32>
    %483 = arith.addf %482, %481 : vector<2x32xf32>
    %484 = arith.divf %482, %483 : vector<2x32xf32>
    %485 = arith.mulf %476, %427 : vector<2x32xf32>
    %486 = arith.mulf %470, %478 : vector<2x32xf32>
    %487 = arith.addf %485, %486 : vector<2x32xf32>
    %488 = math.tanh %487 : vector<2x32xf32>
    %489 = arith.mulf %484, %488 : vector<2x32xf32>
    %490 = vector.extract_strided_slice %464 {offsets = [0, 0], sizes = [2, 32], strides = [1, 1]} : vector<2x128xf32> to vector<2x32xf32>
    %491 = arith.negf %490 : vector<2x32xf32>
    %492 = math.exp %491 : vector<2x32xf32>
    %cst_95 = arith.constant 1.000000e+00 : f32
    %493 = vector.broadcast %cst_95 : f32 to vector<2x32xf32>
    %494 = arith.addf %493, %492 : vector<2x32xf32>
    %495 = arith.divf %493, %494 : vector<2x32xf32>
    %496 = vector.extract_strided_slice %464 {offsets = [0, 32], sizes = [2, 32], strides = [1, 1]} : vector<2x128xf32> to vector<2x32xf32>
    %497 = arith.negf %496 : vector<2x32xf32>
    %498 = math.exp %497 : vector<2x32xf32>
    %cst_96 = arith.constant 1.000000e+00 : f32
    %499 = vector.broadcast %cst_96 : f32 to vector<2x32xf32>
    %500 = arith.addf %499, %498 : vector<2x32xf32>
    %501 = arith.divf %499, %500 : vector<2x32xf32>
    %502 = vector.extract_strided_slice %464 {offsets = [0, 64], sizes = [2, 32], strides = [1, 1]} : vector<2x128xf32> to vector<2x32xf32>
    %503 = math.tanh %502 : vector<2x32xf32>
    %504 = vector.extract_strided_slice %464 {offsets = [0, 96], sizes = [2, 32], strides = [1, 1]} : vector<2x128xf32> to vector<2x32xf32>
    %505 = arith.negf %504 : vector<2x32xf32>
    %506 = math.exp %505 : vector<2x32xf32>
    %cst_97 = arith.constant 1.000000e+00 : f32
    %507 = vector.broadcast %cst_97 : f32 to vector<2x32xf32>
    %508 = arith.addf %507, %506 : vector<2x32xf32>
    %509 = arith.divf %507, %508 : vector<2x32xf32>
    %510 = arith.mulf %501, %452 : vector<2x32xf32>
    %511 = arith.mulf %495, %503 : vector<2x32xf32>
    %512 = arith.addf %510, %511 : vector<2x32xf32>
    %513 = math.tanh %512 : vector<2x32xf32>
    %514 = arith.mulf %509, %513 : vector<2x32xf32>
    %c14_98 = arith.constant 14 : index
    %c0_99 = arith.constant 0 : index
    %515 = vector.load %arg14[%c14_98, %c0_99] : memref<16x64xf32, #tpu.memory_space<vmem>>, vector<2x32xf32>
    tpu.vector_store %arg14[%c14_98, %c0_99], %489 {strides = array<i32>} : memref<16x64xf32, #tpu.memory_space<vmem>>, vector<2x32xf32>,
    %c0_100 = arith.constant 0 : index
    %c32_101 = arith.constant 32 : index
    %516 = vector.load %arg14[%c0_100, %c32_101] : memref<16x64xf32, #tpu.memory_space<vmem>>, vector<2x32xf32>
    tpu.vector_store %arg14[%c0_100, %c32_101], %514 {strides = array<i32>} : memref<16x64xf32, #tpu.memory_space<vmem>>, vector<2x32xf32>,
    %c0_102 = arith.constant 0 : index
    %c0_103 = arith.constant 0 : index
    %517 = vector.load %arg14[%c0_102, %c0_103] : memref<16x64xf32, #tpu.memory_space<vmem>>, vector<16x64xf32>
    %518 = arith.truncf %517 : vector<16x64xf32> to vector<16x64xbf16>
    %c0_104 = arith.constant 0 : index
    %c0_105 = arith.constant 0 : index
    %519 = vector.load %arg8[%c0_104, %c0_105] : memref<64x256xbf16, #tpu.memory_space<vmem>>, vector<64x256xbf16>
    %cst_106 = arith.constant dense<0.000000e+00> : vector<16x256xf32>
    %520 = tpu.matmul %518, %519, %cst_106 {dimension_numbers = #tpu.dot_dimension_numbers<[1], [0], [0], [1], [0, 0, 1, 1], [], []>} : vector<16x64xbf16>, vector<64x256xbf16>, vector<16x256xf32> -> vector<16x256xf32>
    %c0_107 = arith.constant 0 : index
    %c0_108 = arith.constant 0 : index
    %521 = vector.load %arg9[%c0_107, %c0_108] : memref<1x256xf32, #tpu.memory_space<vmem>>, vector<1x256xf32>
    %522 = vector.broadcast %521 : vector<1x256xf32> to vector<16x256xf32>
    %523 = arith.addf %520, %522 : vector<16x256xf32>
    %c0_109 = arith.constant 0 : index
    %c0_110 = arith.constant 0 : index
    %524 = vector.load %arg10[%c0_109, %c0_110] : memref<32x128xf32, #tpu.memory_space<vmem>>, vector<32x128xf32>
    %cst_111 = arith.constant 0.000000e+00 : f32
    %525 = vector.broadcast %cst_111 : f32 to vector<2x32xf32>
    %526 = vector.extract_strided_slice %523 {offsets = [0, 0], sizes = [2, 128], strides = [1, 1]} : vector<16x256xf32> to vector<2x128xf32>
    %cst_112 = arith.constant dense<0.000000e+00> : vector<2x128xf32>
    %527 = tpu.matmul %525, %524, %cst_112 {dimension_numbers = #tpu.dot_dimension_numbers<[1], [0], [0], [1], [0, 0, 1, 1], [], []>} : vector<2x32xf32>, vector<32x128xf32>, vector<2x128xf32> -> vector<2x128xf32>
    %528 = arith.addf %526, %527 : vector<2x128xf32>
    %529 = vector.extract_strided_slice %528 {offsets = [0, 0], sizes = [2, 32], strides = [1, 1]} : vector<2x128xf32> to vector<2x32xf32>
    %530 = arith.negf %529 : vector<2x32xf32>
    %531 = math.exp %530 : vector<2x32xf32>
    %cst_113 = arith.constant 1.000000e+00 : f32
    %532 = vector.broadcast %cst_113 : f32 to vector<2x32xf32>
    %533 = arith.addf %532, %531 : vector<2x32xf32>
    %534 = arith.divf %532, %533 : vector<2x32xf32>
    %535 = vector.extract_strided_slice %528 {offsets = [0, 32], sizes = [2, 32], strides = [1, 1]} : vector<2x128xf32> to vector<2x32xf32>
    %536 = arith.negf %535 : vector<2x32xf32>
    %537 = math.exp %536 : vector<2x32xf32>
    %cst_114 = arith.constant 1.000000e+00 : f32
    %538 = vector.broadcast %cst_114 : f32 to vector<2x32xf32>
    %539 = arith.addf %538, %537 : vector<2x32xf32>
    %540 = arith.divf %538, %539 : vector<2x32xf32>
    %541 = vector.extract_strided_slice %528 {offsets = [0, 64], sizes = [2, 32], strides = [1, 1]} : vector<2x128xf32> to vector<2x32xf32>
    %542 = math.tanh %541 : vector<2x32xf32>
    %543 = vector.extract_strided_slice %528 {offsets = [0, 96], sizes = [2, 32], strides = [1, 1]} : vector<2x128xf32> to vector<2x32xf32>
    %544 = arith.negf %543 : vector<2x32xf32>
    %545 = math.exp %544 : vector<2x32xf32>
    %cst_115 = arith.constant 1.000000e+00 : f32
    %546 = vector.broadcast %cst_115 : f32 to vector<2x32xf32>
    %547 = arith.addf %546, %545 : vector<2x32xf32>
    %548 = arith.divf %546, %547 : vector<2x32xf32>
    %549 = arith.mulf %540, %525 : vector<2x32xf32>
    %550 = arith.mulf %534, %542 : vector<2x32xf32>
    %551 = arith.addf %549, %550 : vector<2x32xf32>
    %552 = math.tanh %551 : vector<2x32xf32>
    %553 = arith.mulf %548, %552 : vector<2x32xf32>
    %554 = vector.extract_strided_slice %523 {offsets = [2, 0], sizes = [2, 128], strides = [1, 1]} : vector<16x256xf32> to vector<2x128xf32>
    %cst_116 = arith.constant dense<0.000000e+00> : vector<2x128xf32>
    %555 = tpu.matmul %553, %524, %cst_116 {dimension_numbers = #tpu.dot_dimension_numbers<[1], [0], [0], [1], [0, 0, 1, 1], [], []>} : vector<2x32xf32>, vector<32x128xf32>, vector<2x128xf32> -> vector<2x128xf32>
    %556 = arith.addf %554, %555 : vector<2x128xf32>
    %557 = vector.extract_strided_slice %556 {offsets = [0, 0], sizes = [2, 32], strides = [1, 1]} : vector<2x128xf32> to vector<2x32xf32>
    %558 = arith.negf %557 : vector<2x32xf32>
    %559 = math.exp %558 : vector<2x32xf32>
    %cst_117 = arith.constant 1.000000e+00 : f32
    %560 = vector.broadcast %cst_117 : f32 to vector<2x32xf32>
    %561 = arith.addf %560, %559 : vector<2x32xf32>
    %562 = arith.divf %560, %561 : vector<2x32xf32>
    %563 = vector.extract_strided_slice %556 {offsets = [0, 32], sizes = [2, 32], strides = [1, 1]} : vector<2x128xf32> to vector<2x32xf32>
    %564 = arith.negf %563 : vector<2x32xf32>
    %565 = math.exp %564 : vector<2x32xf32>
    %cst_118 = arith.constant 1.000000e+00 : f32
    %566 = vector.broadcast %cst_118 : f32 to vector<2x32xf32>
    %567 = arith.addf %566, %565 : vector<2x32xf32>
    %568 = arith.divf %566, %567 : vector<2x32xf32>
    %569 = vector.extract_strided_slice %556 {offsets = [0, 64], sizes = [2, 32], strides = [1, 1]} : vector<2x128xf32> to vector<2x32xf32>
    %570 = math.tanh %569 : vector<2x32xf32>
    %571 = vector.extract_strided_slice %556 {offsets = [0, 96], sizes = [2, 32], strides = [1, 1]} : vector<2x128xf32> to vector<2x32xf32>
    %572 = arith.negf %571 : vector<2x32xf32>
    %573 = math.exp %572 : vector<2x32xf32>
    %cst_119 = arith.constant 1.000000e+00 : f32
    %574 = vector.broadcast %cst_119 : f32 to vector<2x32xf32>
    %575 = arith.addf %574, %573 : vector<2x32xf32>
    %576 = arith.divf %574, %575 : vector<2x32xf32>
    %577 = arith.mulf %568, %551 : vector<2x32xf32>
    %578 = arith.mulf %562, %570 : vector<2x32xf32>
    %579 = arith.addf %577, %578 : vector<2x32xf32>
    %580 = math.tanh %579 : vector<2x32xf32>
    %581 = arith.mulf %576, %580 : vector<2x32xf32>
    %582 = vector.extract_strided_slice %523 {offsets = [4, 0], sizes = [2, 128], strides = [1, 1]} : vector<16x256xf32> to vector<2x128xf32>
    %cst_120 = arith.constant dense<0.000000e+00> : vector<2x128xf32>
    %583 = tpu.matmul %581, %524, %cst_120 {dimension_numbers = #tpu.dot_dimension_numbers<[1], [0], [0], [1], [0, 0, 1, 1], [], []>} : vector<2x32xf32>, vector<32x128xf32>, vector<2x128xf32> -> vector<2x128xf32>
    %584 = arith.addf %582, %583 : vector<2x128xf32>
    %585 = vector.extract_strided_slice %584 {offsets = [0, 0], sizes = [2, 32], strides = [1, 1]} : vector<2x128xf32> to vector<2x32xf32>
    %586 = arith.negf %585 : vector<2x32xf32>
    %587 = math.exp %586 : vector<2x32xf32>
    %cst_121 = arith.constant 1.000000e+00 : f32
    %588 = vector.broadcast %cst_121 : f32 to vector<2x32xf32>
    %589 = arith.addf %588, %587 : vector<2x32xf32>
    %590 = arith.divf %588, %589 : vector<2x32xf32>
    %591 = vector.extract_strided_slice %584 {offsets = [0, 32], sizes = [2, 32], strides = [1, 1]} : vector<2x128xf32> to vector<2x32xf32>
    %592 = arith.negf %591 : vector<2x32xf32>
    %593 = math.exp %592 : vector<2x32xf32>
    %cst_122 = arith.constant 1.000000e+00 : f32
    %594 = vector.broadcast %cst_122 : f32 to vector<2x32xf32>
    %595 = arith.addf %594, %593 : vector<2x32xf32>
    %596 = arith.divf %594, %595 : vector<2x32xf32>
    %597 = vector.extract_strided_slice %584 {offsets = [0, 64], sizes = [2, 32], strides = [1, 1]} : vector<2x128xf32> to vector<2x32xf32>
    %598 = math.tanh %597 : vector<2x32xf32>
    %599 = vector.extract_strided_slice %584 {offsets = [0, 96], sizes = [2, 32], strides = [1, 1]} : vector<2x128xf32> to vector<2x32xf32>
    %600 = arith.negf %599 : vector<2x32xf32>
    %601 = math.exp %600 : vector<2x32xf32>
    %cst_123 = arith.constant 1.000000e+00 : f32
    %602 = vector.broadcast %cst_123 : f32 to vector<2x32xf32>
    %603 = arith.addf %602, %601 : vector<2x32xf32>
    %604 = arith.divf %602, %603 : vector<2x32xf32>
    %605 = arith.mulf %596, %579 : vector<2x32xf32>
    %606 = arith.mulf %590, %598 : vector<2x32xf32>
    %607 = arith.addf %605, %606 : vector<2x32xf32>
    %608 = math.tanh %607 : vector<2x32xf32>
    %609 = arith.mulf %604, %608 : vector<2x32xf32>
    %610 = vector.extract_strided_slice %523 {offsets = [6, 0], sizes = [2, 128], strides = [1, 1]} : vector<16x256xf32> to vector<2x128xf32>
    %cst_124 = arith.constant dense<0.000000e+00> : vector<2x128xf32>
    %611 = tpu.matmul %609, %524, %cst_124 {dimension_numbers = #tpu.dot_dimension_numbers<[1], [0], [0], [1], [0, 0, 1, 1], [], []>} : vector<2x32xf32>, vector<32x128xf32>, vector<2x128xf32> -> vector<2x128xf32>
    %612 = arith.addf %610, %611 : vector<2x128xf32>
    %613 = vector.extract_strided_slice %612 {offsets = [0, 0], sizes = [2, 32], strides = [1, 1]} : vector<2x128xf32> to vector<2x32xf32>
    %614 = arith.negf %613 : vector<2x32xf32>
    %615 = math.exp %614 : vector<2x32xf32>
    %cst_125 = arith.constant 1.000000e+00 : f32
    %616 = vector.broadcast %cst_125 : f32 to vector<2x32xf32>
    %617 = arith.addf %616, %615 : vector<2x32xf32>
    %618 = arith.divf %616, %617 : vector<2x32xf32>
    %619 = vector.extract_strided_slice %612 {offsets = [0, 32], sizes = [2, 32], strides = [1, 1]} : vector<2x128xf32> to vector<2x32xf32>
    %620 = arith.negf %619 : vector<2x32xf32>
    %621 = math.exp %620 : vector<2x32xf32>
    %cst_126 = arith.constant 1.000000e+00 : f32
    %622 = vector.broadcast %cst_126 : f32 to vector<2x32xf32>
    %623 = arith.addf %622, %621 : vector<2x32xf32>
    %624 = arith.divf %622, %623 : vector<2x32xf32>
    %625 = vector.extract_strided_slice %612 {offsets = [0, 64], sizes = [2, 32], strides = [1, 1]} : vector<2x128xf32> to vector<2x32xf32>
    %626 = math.tanh %625 : vector<2x32xf32>
    %627 = vector.extract_strided_slice %612 {offsets = [0, 96], sizes = [2, 32], strides = [1, 1]} : vector<2x128xf32> to vector<2x32xf32>
    %628 = arith.negf %627 : vector<2x32xf32>
    %629 = math.exp %628 : vector<2x32xf32>
    %cst_127 = arith.constant 1.000000e+00 : f32
    %630 = vector.broadcast %cst_127 : f32 to vector<2x32xf32>
    %631 = arith.addf %630, %629 : vector<2x32xf32>
    %632 = arith.divf %630, %631 : vector<2x32xf32>
    %633 = arith.mulf %624, %607 : vector<2x32xf32>
    %634 = arith.mulf %618, %626 : vector<2x32xf32>
    %635 = arith.addf %633, %634 : vector<2x32xf32>
    %636 = math.tanh %635 : vector<2x32xf32>
    %637 = arith.mulf %632, %636 : vector<2x32xf32>
    %638 = vector.extract_strided_slice %523 {offsets = [8, 0], sizes = [2, 128], strides = [1, 1]} : vector<16x256xf32> to vector<2x128xf32>
    %cst_128 = arith.constant dense<0.000000e+00> : vector<2x128xf32>
    %639 = tpu.matmul %637, %524, %cst_128 {dimension_numbers = #tpu.dot_dimension_numbers<[1], [0], [0], [1], [0, 0, 1, 1], [], []>} : vector<2x32xf32>, vector<32x128xf32>, vector<2x128xf32> -> vector<2x128xf32>
    %640 = arith.addf %638, %639 : vector<2x128xf32>
    %641 = vector.extract_strided_slice %640 {offsets = [0, 0], sizes = [2, 32], strides = [1, 1]} : vector<2x128xf32> to vector<2x32xf32>
    %642 = arith.negf %641 : vector<2x32xf32>
    %643 = math.exp %642 : vector<2x32xf32>
    %cst_129 = arith.constant 1.000000e+00 : f32
    %644 = vector.broadcast %cst_129 : f32 to vector<2x32xf32>
    %645 = arith.addf %644, %643 : vector<2x32xf32>
    %646 = arith.divf %644, %645 : vector<2x32xf32>
    %647 = vector.extract_strided_slice %640 {offsets = [0, 32], sizes = [2, 32], strides = [1, 1]} : vector<2x128xf32> to vector<2x32xf32>
    %648 = arith.negf %647 : vector<2x32xf32>
    %649 = math.exp %648 : vector<2x32xf32>
    %cst_130 = arith.constant 1.000000e+00 : f32
    %650 = vector.broadcast %cst_130 : f32 to vector<2x32xf32>
    %651 = arith.addf %650, %649 : vector<2x32xf32>
    %652 = arith.divf %650, %651 : vector<2x32xf32>
    %653 = vector.extract_strided_slice %640 {offsets = [0, 64], sizes = [2, 32], strides = [1, 1]} : vector<2x128xf32> to vector<2x32xf32>
    %654 = math.tanh %653 : vector<2x32xf32>
    %655 = vector.extract_strided_slice %640 {offsets = [0, 96], sizes = [2, 32], strides = [1, 1]} : vector<2x128xf32> to vector<2x32xf32>
    %656 = arith.negf %655 : vector<2x32xf32>
    %657 = math.exp %656 : vector<2x32xf32>
    %cst_131 = arith.constant 1.000000e+00 : f32
    %658 = vector.broadcast %cst_131 : f32 to vector<2x32xf32>
    %659 = arith.addf %658, %657 : vector<2x32xf32>
    %660 = arith.divf %658, %659 : vector<2x32xf32>
    %661 = arith.mulf %652, %635 : vector<2x32xf32>
    %662 = arith.mulf %646, %654 : vector<2x32xf32>
    %663 = arith.addf %661, %662 : vector<2x32xf32>
    %664 = math.tanh %663 : vector<2x32xf32>
    %665 = arith.mulf %660, %664 : vector<2x32xf32>
    %666 = vector.extract_strided_slice %523 {offsets = [10, 0], sizes = [2, 128], strides = [1, 1]} : vector<16x256xf32> to vector<2x128xf32>
    %cst_132 = arith.constant dense<0.000000e+00> : vector<2x128xf32>
    %667 = tpu.matmul %665, %524, %cst_132 {dimension_numbers = #tpu.dot_dimension_numbers<[1], [0], [0], [1], [0, 0, 1, 1], [], []>} : vector<2x32xf32>, vector<32x128xf32>, vector<2x128xf32> -> vector<2x128xf32>
    %668 = arith.addf %666, %667 : vector<2x128xf32>
    %669 = vector.extract_strided_slice %668 {offsets = [0, 0], sizes = [2, 32], strides = [1, 1]} : vector<2x128xf32> to vector<2x32xf32>
    %670 = arith.negf %669 : vector<2x32xf32>
    %671 = math.exp %670 : vector<2x32xf32>
    %cst_133 = arith.constant 1.000000e+00 : f32
    %672 = vector.broadcast %cst_133 : f32 to vector<2x32xf32>
    %673 = arith.addf %672, %671 : vector<2x32xf32>
    %674 = arith.divf %672, %673 : vector<2x32xf32>
    %675 = vector.extract_strided_slice %668 {offsets = [0, 32], sizes = [2, 32], strides = [1, 1]} : vector<2x128xf32> to vector<2x32xf32>
    %676 = arith.negf %675 : vector<2x32xf32>
    %677 = math.exp %676 : vector<2x32xf32>
    %cst_134 = arith.constant 1.000000e+00 : f32
    %678 = vector.broadcast %cst_134 : f32 to vector<2x32xf32>
    %679 = arith.addf %678, %677 : vector<2x32xf32>
    %680 = arith.divf %678, %679 : vector<2x32xf32>
    %681 = vector.extract_strided_slice %668 {offsets = [0, 64], sizes = [2, 32], strides = [1, 1]} : vector<2x128xf32> to vector<2x32xf32>
    %682 = math.tanh %681 : vector<2x32xf32>
    %683 = vector.extract_strided_slice %668 {offsets = [0, 96], sizes = [2, 32], strides = [1, 1]} : vector<2x128xf32> to vector<2x32xf32>
    %684 = arith.negf %683 : vector<2x32xf32>
    %685 = math.exp %684 : vector<2x32xf32>
    %cst_135 = arith.constant 1.000000e+00 : f32
    %686 = vector.broadcast %cst_135 : f32 to vector<2x32xf32>
    %687 = arith.addf %686, %685 : vector<2x32xf32>
    %688 = arith.divf %686, %687 : vector<2x32xf32>
    %689 = arith.mulf %680, %663 : vector<2x32xf32>
    %690 = arith.mulf %674, %682 : vector<2x32xf32>
    %691 = arith.addf %689, %690 : vector<2x32xf32>
    %692 = math.tanh %691 : vector<2x32xf32>
    %693 = arith.mulf %688, %692 : vector<2x32xf32>
    %694 = vector.extract_strided_slice %523 {offsets = [12, 0], sizes = [2, 128], strides = [1, 1]} : vector<16x256xf32> to vector<2x128xf32>
    %cst_136 = arith.constant dense<0.000000e+00> : vector<2x128xf32>
    %695 = tpu.matmul %693, %524, %cst_136 {dimension_numbers = #tpu.dot_dimension_numbers<[1], [0], [0], [1], [0, 0, 1, 1], [], []>} : vector<2x32xf32>, vector<32x128xf32>, vector<2x128xf32> -> vector<2x128xf32>
    %696 = arith.addf %694, %695 : vector<2x128xf32>
    %697 = vector.extract_strided_slice %696 {offsets = [0, 0], sizes = [2, 32], strides = [1, 1]} : vector<2x128xf32> to vector<2x32xf32>
    %698 = arith.negf %697 : vector<2x32xf32>
    %699 = math.exp %698 : vector<2x32xf32>
    %cst_137 = arith.constant 1.000000e+00 : f32
    %700 = vector.broadcast %cst_137 : f32 to vector<2x32xf32>
    %701 = arith.addf %700, %699 : vector<2x32xf32>
    %702 = arith.divf %700, %701 : vector<2x32xf32>
    %703 = vector.extract_strided_slice %696 {offsets = [0, 32], sizes = [2, 32], strides = [1, 1]} : vector<2x128xf32> to vector<2x32xf32>
    %704 = arith.negf %703 : vector<2x32xf32>
    %705 = math.exp %704 : vector<2x32xf32>
    %cst_138 = arith.constant 1.000000e+00 : f32
    %706 = vector.broadcast %cst_138 : f32 to vector<2x32xf32>
    %707 = arith.addf %706, %705 : vector<2x32xf32>
    %708 = arith.divf %706, %707 : vector<2x32xf32>
    %709 = vector.extract_strided_slice %696 {offsets = [0, 64], sizes = [2, 32], strides = [1, 1]} : vector<2x128xf32> to vector<2x32xf32>
    %710 = math.tanh %709 : vector<2x32xf32>
    %711 = vector.extract_strided_slice %696 {offsets = [0, 96], sizes = [2, 32], strides = [1, 1]} : vector<2x128xf32> to vector<2x32xf32>
    %712 = arith.negf %711 : vector<2x32xf32>
    %713 = math.exp %712 : vector<2x32xf32>
    %cst_139 = arith.constant 1.000000e+00 : f32
    %714 = vector.broadcast %cst_139 : f32 to vector<2x32xf32>
    %715 = arith.addf %714, %713 : vector<2x32xf32>
    %716 = arith.divf %714, %715 : vector<2x32xf32>
    %717 = arith.mulf %708, %691 : vector<2x32xf32>
    %718 = arith.mulf %702, %710 : vector<2x32xf32>
    %719 = arith.addf %717, %718 : vector<2x32xf32>
    %720 = math.tanh %719 : vector<2x32xf32>
    %721 = arith.mulf %716, %720 : vector<2x32xf32>
    %722 = vector.extract_strided_slice %523 {offsets = [14, 0], sizes = [2, 128], strides = [1, 1]} : vector<16x256xf32> to vector<2x128xf32>
    %cst_140 = arith.constant dense<0.000000e+00> : vector<2x128xf32>
    %723 = tpu.matmul %721, %524, %cst_140 {dimension_numbers = #tpu.dot_dimension_numbers<[1], [0], [0], [1], [0, 0, 1, 1], [], []>} : vector<2x32xf32>, vector<32x128xf32>, vector<2x128xf32> -> vector<2x128xf32>
    %724 = arith.addf %722, %723 : vector<2x128xf32>
    %725 = vector.extract_strided_slice %724 {offsets = [0, 0], sizes = [2, 32], strides = [1, 1]} : vector<2x128xf32> to vector<2x32xf32>
    %726 = arith.negf %725 : vector<2x32xf32>
    %727 = math.exp %726 : vector<2x32xf32>
    %cst_141 = arith.constant 1.000000e+00 : f32
    %728 = vector.broadcast %cst_141 : f32 to vector<2x32xf32>
    %729 = arith.addf %728, %727 : vector<2x32xf32>
    %730 = arith.divf %728, %729 : vector<2x32xf32>
    %731 = vector.extract_strided_slice %724 {offsets = [0, 32], sizes = [2, 32], strides = [1, 1]} : vector<2x128xf32> to vector<2x32xf32>
    %732 = arith.negf %731 : vector<2x32xf32>
    %733 = math.exp %732 : vector<2x32xf32>
    %cst_142 = arith.constant 1.000000e+00 : f32
    %734 = vector.broadcast %cst_142 : f32 to vector<2x32xf32>
    %735 = arith.addf %734, %733 : vector<2x32xf32>
    %736 = arith.divf %734, %735 : vector<2x32xf32>
    %737 = vector.extract_strided_slice %724 {offsets = [0, 64], sizes = [2, 32], strides = [1, 1]} : vector<2x128xf32> to vector<2x32xf32>
    %738 = math.tanh %737 : vector<2x32xf32>
    %739 = vector.extract_strided_slice %724 {offsets = [0, 96], sizes = [2, 32], strides = [1, 1]} : vector<2x128xf32> to vector<2x32xf32>
    %740 = arith.negf %739 : vector<2x32xf32>
    %741 = math.exp %740 : vector<2x32xf32>
    %cst_143 = arith.constant 1.000000e+00 : f32
    %742 = vector.broadcast %cst_143 : f32 to vector<2x32xf32>
    %743 = arith.addf %742, %741 : vector<2x32xf32>
    %744 = arith.divf %742, %743 : vector<2x32xf32>
    %745 = arith.mulf %736, %719 : vector<2x32xf32>
    %746 = arith.mulf %730, %738 : vector<2x32xf32>
    %747 = arith.addf %745, %746 : vector<2x32xf32>
    %748 = math.tanh %747 : vector<2x32xf32>
    %749 = arith.mulf %744, %748 : vector<2x32xf32>
    %750 = vector.extract_strided_slice %523 {offsets = [14, 128], sizes = [2, 128], strides = [1, 1]} : vector<16x256xf32> to vector<2x128xf32>
    %751 = vector.extract_strided_slice %750 {offsets = [0, 0], sizes = [2, 32], strides = [1, 1]} : vector<2x128xf32> to vector<2x32xf32>
    %752 = arith.negf %751 : vector<2x32xf32>
    %753 = math.exp %752 : vector<2x32xf32>
    %cst_144 = arith.constant 1.000000e+00 : f32
    %754 = vector.broadcast %cst_144 : f32 to vector<2x32xf32>
    %755 = arith.addf %754, %753 : vector<2x32xf32>
    %756 = arith.divf %754, %755 : vector<2x32xf32>
    %757 = vector.extract_strided_slice %750 {offsets = [0, 32], sizes = [2, 32], strides = [1, 1]} : vector<2x128xf32> to vector<2x32xf32>
    %758 = arith.negf %757 : vector<2x32xf32>
    %759 = math.exp %758 : vector<2x32xf32>
    %cst_145 = arith.constant 1.000000e+00 : f32
    %760 = vector.broadcast %cst_145 : f32 to vector<2x32xf32>
    %761 = arith.addf %760, %759 : vector<2x32xf32>
    %762 = arith.divf %760, %761 : vector<2x32xf32>
    %763 = vector.extract_strided_slice %750 {offsets = [0, 64], sizes = [2, 32], strides = [1, 1]} : vector<2x128xf32> to vector<2x32xf32>
    %764 = math.tanh %763 : vector<2x32xf32>
    %765 = vector.extract_strided_slice %750 {offsets = [0, 96], sizes = [2, 32], strides = [1, 1]} : vector<2x128xf32> to vector<2x32xf32>
    %766 = arith.negf %765 : vector<2x32xf32>
    %767 = math.exp %766 : vector<2x32xf32>
    %cst_146 = arith.constant 1.000000e+00 : f32
    %768 = vector.broadcast %cst_146 : f32 to vector<2x32xf32>
    %769 = arith.addf %768, %767 : vector<2x32xf32>
    %770 = arith.divf %768, %769 : vector<2x32xf32>
    %771 = arith.mulf %762, %525 : vector<2x32xf32>
    %772 = arith.mulf %756, %764 : vector<2x32xf32>
    %773 = arith.addf %771, %772 : vector<2x32xf32>
    %774 = math.tanh %773 : vector<2x32xf32>
    %775 = arith.mulf %770, %774 : vector<2x32xf32>
    %776 = tpu.concatenate %749, %775 in 1 : vector<2x32xf32>, vector<2x32xf32> -> vector<2x64xf32>
    %c0_147 = arith.constant 0 : index
    %c0_148 = arith.constant 0 : index
    %777 = vector.load %arg11[%c0_147, %c0_148] : memref<64x1xf32, #tpu.memory_space<vmem>>, vector<64x1xf32>
    %cst_149 = arith.constant dense<0.000000e+00> : vector<2x1xf32>
    %778 = tpu.matmul %776, %777, %cst_149 {dimension_numbers = #tpu.dot_dimension_numbers<[1], [0], [0], [1], [0, 0, 1, 1], [], []>} : vector<2x64xf32>, vector<64x1xf32>, vector<2x1xf32> -> vector<2x1xf32>
    %c0_150 = arith.constant 0 : index
    %c0_151 = arith.constant 0 : index
    %779 = vector.load %arg12[%c0_150, %c0_151] : memref<1x1xf32, #tpu.memory_space<vmem>>, vector<1x1xf32>
    %780 = vector.broadcast %779 : vector<1x1xf32> to vector<2x1xf32>
    %781 = arith.addf %778, %780 : vector<2x1xf32>
    %c0_152 = arith.constant 0 : index
    %c0_153 = arith.constant 0 : index
    %782 = vector.load %arg13[%c0_152, %c0_153] : memref<2x1xf32, #tpu.memory_space<vmem>>, vector<2x1xf32>
    tpu.vector_store %arg13[%c0_152, %c0_153], %781 {strides = array<i32>} : memref<2x1xf32, #tpu.memory_space<vmem>>, vector<2x1xf32>,
    return
  }
}

</mosaic_0001>

<llo_original>
// kernel: mylstm_forward.1
$region0: #{mylstm_forward.1}
  #allocation0 [shape = 'u32[]', space=smem, size = 0x4, offset = 0x4, fixed_abs, tag = 'smem constant byte address 0x4 - core index']
  #allocation1 [shape = 'u32[144,128]{1,0:T(1,128)}', space=vmem, size = 0x12000, scoped, tag = 'internal scratch']
  #allocation2 [shape = 'f32[16,64]{1,0:T(8,128)}', space=vmem, size = 0x2000, scoped, tag = 'scratch operand']
  #allocation3 [shape = 'f32[1,1]{1,0:T(1,128)S(1)}', space=vmem, size = 0x200, scoped, tag = 'scoped memory for mylstm_forward.1']
  %s0 = inlined_call_operand.vmem [shape: f32[16,4], index: 0, kind: input, shape index: {}]
  %s1 = inlined_call_operand.hbm [shape: bf16[12,48], index: 1, kind: input, shape index: {}]
  %s2 = inlined_call_operand.hbm [shape: f32[1,48], index: 2, kind: input, shape index: {}]
  %s3 = inlined_call_operand.vmem [shape: bf16[144,64], index: 3, kind: input, shape index: {}]
  %s4 = inlined_call_operand.hbm [shape: f32[1,64], index: 4, kind: input, shape index: {}]
  %s5 = inlined_call_operand.vmem [shape: bf16[64,256], index: 5, kind: input, shape index: {}]
  %s6 = inlined_call_operand.vmem [shape: f32[1,256], index: 6, kind: input, shape index: {}]
  %s7 = inlined_call_operand.vmem [shape: f32[64,256], index: 7, kind: input, shape index: {}]
  %s8 = inlined_call_operand.vmem [shape: bf16[64,256], index: 8, kind: input, shape index: {}]
  %s9 = inlined_call_operand.hbm [shape: f32[1,256], index: 9, kind: input, shape index: {}]
  %s10 = inlined_call_operand.hbm [shape: f32[32,128], index: 10, kind: input, shape index: {}]
  %s11 = inlined_call_operand.vmem [shape: f32[64,1], index: 11, kind: input, shape index: {}]
  %s12 = inlined_call_operand.<no memory space> [shape: f32[1,1], index: 12, kind: input, shape index: {}]
  %s13 = inlined_call_operand.vmem [shape: f32[2,1], index: 13, kind: output, shape index: {}]
  %s14 = sld [smem:[#allocation0]]
  $region82: #{mylstm_forward.1} parent=0
    _
  %s16 = ssub.s32 1, %s14
  %s17 = scalar_select 0, %s16, %s14
  %v18 = vstv %s12
  %19 = vst [vmem:[#allocation3] sm:$0x1] %v18
  $region1: #{mylstm_forward.1} parent=0
    #allocation4 [shape = 'u8[4096]{0}', space=vmem, size = 0x1000, scoped, tag = 'input window, operand 1, single buffered']
    #allocation5 [shape = 's32[1]{0}', space=sflag, size = 0x4, scoped, tag = 'scoped memory for mylstm_forward.1']
    #allocation6 [shape = 'u8[512]{0}', space=vmem, size = 0x400, scoped, tag = 'input window, operand 2, single buffered']
    #allocation7 [shape = 's32[1]{0}', space=sflag, size = 0x4, scoped, tag = 'scoped memory for mylstm_forward.1']
    #allocation8 [shape = 'u8[512]{0}', space=vmem, size = 0x400, scoped, tag = 'input window, operand 4, single buffered']
    #allocation9 [shape = 'u8[1024]{0}', space=vmem, size = 0x400, scoped, tag = 'input window, operand 9, single buffered']
    #allocation10 [shape = 's32[1]{0}', space=sflag, size = 0x4, scoped, tag = 'scoped memory for mylstm_forward.1']
    #allocation11 [shape = 'u8[16384]{0}', space=vmem, size = 0x4000, scoped, tag = 'input window, operand 10, single buffered']
    %20 = vsyncpa [#allocation5], 0
    %21 = vsyncpa [#allocation7], 0
    %22 = vsyncpa [#allocation10], 0
    // Predicated region
    $region2: #{mylstm_forward.1} parent=1 // pred_check
      _
    $region3: #{mylstm_forward.1} parent=1 // pred_check_branch
      %24 = sbr.rel (0) target = $region5
    $region4: #{mylstm_forward.1} parent=1 // pred_region
      _
    $region5: #{mylstm_forward.1} parent=1 // pred_fallthru
      _
    // Predicated region
    $region6: #{mylstm_forward.1} parent=1 // pred_check
      _
    $region7: #{mylstm_forward.1} parent=1 // pred_check_branch
      %26 = sbr.rel (0) target = $region9
    $region8: #{mylstm_forward.1} parent=1 // pred_region
      %s28 = ssub.s32 128, 128
      %29 = vsyncadd [#allocation5], %s28
      %s30 = sshll.u32 [#allocation4], 4
      %s31 = int_to_ptr.vmem [resolvable:$true] %s30
      %36 = dma.hbm_to_vmem [thread:$0]  %s1, 128, %s31, [#allocation5], 64, 64, 4
    $region9: #{mylstm_forward.1} parent=1 // pred_fallthru
      _
    // Predicated region
    $region10: #{mylstm_forward.1} parent=1 // pred_check
      _
    $region11: #{mylstm_forward.1} parent=1 // pred_check_branch
      %38 = sbr.rel (0) target = $region13
    $region12: #{mylstm_forward.1} parent=1 // pred_region
      %s40 = ssub.s32 16, 16
      %41 = vsyncadd [#allocation7], %s40
      %s43 = sshll.u32 [#allocation6], 4
      %s44 = int_to_ptr.vmem [resolvable:$true] %s43
      %46 = dma.hbm_to_vmem [thread:$0]  %s2, 16, %s44, [#allocation7]
    $region13: #{mylstm_forward.1} parent=1 // pred_fallthru
      _
    // Predicated region
    $region14: #{mylstm_forward.1} parent=1 // pred_check
      _
    $region15: #{mylstm_forward.1} parent=1 // pred_check_branch
      %48 = sbr.rel (0) target = $region17
    $region16: #{mylstm_forward.1} parent=1 // pred_region
      _
    $region17: #{mylstm_forward.1} parent=1 // pred_fallthru
      _
    // Predicated region
    $region18: #{mylstm_forward.1} parent=1 // pred_check
      _
    $region19: #{mylstm_forward.1} parent=1 // pred_check_branch
      %50 = sbr.rel (0) target = $region21
    $region20: #{mylstm_forward.1} parent=1 // pred_region
      %s52 = ssub.s32 16, 16
      %53 = vsyncadd [#allocation7], %s52
      %s55 = sshll.u32 [#allocation8], 4
      %s56 = int_to_ptr.vmem [resolvable:$true] %s55
      %58 = dma.hbm_to_vmem [thread:$0]  %s4, 16, %s56, [#allocation7]
    $region21: #{mylstm_forward.1} parent=1 // pred_fallthru
      _
    // Predicated region
    $region22: #{mylstm_forward.1} parent=1 // pred_check
      _
    $region23: #{mylstm_forward.1} parent=1 // pred_check_branch
      %60 = sbr.rel (0) target = $region25
    $region24: #{mylstm_forward.1} parent=1 // pred_region
      _
    $region25: #{mylstm_forward.1} parent=1 // pred_fallthru
      _
    // Predicated region
    $region26: #{mylstm_forward.1} parent=1 // pred_check
      _
    $region27: #{mylstm_forward.1} parent=1 // pred_check_branch
      %62 = sbr.rel (0) target = $region29
    $region28: #{mylstm_forward.1} parent=1 // pred_region
      _
    $region29: #{mylstm_forward.1} parent=1 // pred_fallthru
      _
    // Predicated region
    $region30: #{mylstm_forward.1} parent=1 // pred_check
      _
    $region31: #{mylstm_forward.1} parent=1 // pred_check_branch
      %64 = sbr.rel (0) target = $region33
    $region32: #{mylstm_forward.1} parent=1 // pred_region
      _
    $region33: #{mylstm_forward.1} parent=1 // pred_fallthru
      _
    // Predicated region
    $region34: #{mylstm_forward.1} parent=1 // pred_check
      _
    $region35: #{mylstm_forward.1} parent=1 // pred_check_branch
      %66 = sbr.rel (0) target = $region37
    $region36: #{mylstm_forward.1} parent=1 // pred_region
      _
    $region37: #{mylstm_forward.1} parent=1 // pred_fallthru
      _
    // Predicated region
    $region38: #{mylstm_forward.1} parent=1 // pred_check
      _
    $region39: #{mylstm_forward.1} parent=1 // pred_check_branch
      %68 = sbr.rel (0) target = $region41
    $region40: #{mylstm_forward.1} parent=1 // pred_region
      %s70 = ssub.s32 32, 32
      %71 = vsyncadd [#allocation10], %s70
      %s73 = sshll.u32 [#allocation9], 4
      %s74 = int_to_ptr.vmem [resolvable:$true] %s73
      %76 = dma.hbm_to_vmem [thread:$0]  %s9, 32, %s74, [#allocation10]
    $region41: #{mylstm_forward.1} parent=1 // pred_fallthru
      _
    // Predicated region
    $region42: #{mylstm_forward.1} parent=1 // pred_check
      _
    $region43: #{mylstm_forward.1} parent=1 // pred_check_branch
      %78 = sbr.rel (0) target = $region45
    $region44: #{mylstm_forward.1} parent=1 // pred_region
      %s80 = ssub.s32 512, 512
      %81 = vsyncadd [#allocation10], %s80
      %s82 = sshll.u32 [#allocation11], 4
      %s83 = int_to_ptr.vmem [resolvable:$true] %s82
      %88 = dma.hbm_to_vmem [thread:$0]  %s10, 512, %s83, [#allocation10], 128, 128, 8
    $region45: #{mylstm_forward.1} parent=1 // pred_fallthru
      _
    // Predicated region
    $region46: #{mylstm_forward.1} parent=1 // pred_check
      _
    $region47: #{mylstm_forward.1} parent=1 // pred_check_branch
      %90 = sbr.rel (0) target = $region49
    $region48: #{mylstm_forward.1} parent=1 // pred_region
      _
    $region49: #{mylstm_forward.1} parent=1 // pred_fallthru
      _
    // Predicated region
    $region50: #{mylstm_forward.1} parent=1 // pred_check
      _
    $region51: #{mylstm_forward.1} parent=1 // pred_check_branch
      %92 = sbr.rel (0) target = $region53
    $region52: #{mylstm_forward.1} parent=1 // pred_region
      _
    $region53: #{mylstm_forward.1} parent=1 // pred_fallthru
      _
    // Predicated region
    $region54: #{mylstm_forward.1} parent=1 // pred_check
      _
    $region55: #{mylstm_forward.1} parent=1 // pred_check_branch
      %94 = sbr.rel (0) target = $region57
    $region56: #{mylstm_forward.1} parent=1 // pred_region
      %95 = dma.done [#allocation5], 128
    $region57: #{mylstm_forward.1} parent=1 // pred_fallthru
      _
    // Predicated region
    $region58: #{mylstm_forward.1} parent=1 // pred_check
      _
    $region59: #{mylstm_forward.1} parent=1 // pred_check_branch
      %97 = sbr.rel (0) target = $region61
    $region60: #{mylstm_forward.1} parent=1 // pred_region
      %98 = dma.done [#allocation7], 16
    $region61: #{mylstm_forward.1} parent=1 // pred_fallthru
      _
    // Predicated region
    $region62: #{mylstm_forward.1} parent=1 // pred_check
      _
    $region63: #{mylstm_forward.1} parent=1 // pred_check_branch
      %100 = sbr.rel (0) target = $region65
    $region64: #{mylstm_forward.1} parent=1 // pred_region
      %101 = dma.done [#allocation7], 16
    $region65: #{mylstm_forward.1} parent=1 // pred_fallthru
      _
    // Predicated region
    $region66: #{mylstm_forward.1} parent=1 // pred_check
      _
    $region67: #{mylstm_forward.1} parent=1 // pred_check_branch
      %103 = sbr.rel (0) target = $region69
    $region68: #{mylstm_forward.1} parent=1 // pred_region
      %104 = dma.done [#allocation10], 32
    $region69: #{mylstm_forward.1} parent=1 // pred_fallthru
      _
    // Predicated region
    $region70: #{mylstm_forward.1} parent=1 // pred_check
      _
    $region71: #{mylstm_forward.1} parent=1 // pred_check_branch
      %106 = sbr.rel (0) target = $region73
    $region72: #{mylstm_forward.1} parent=1 // pred_region
      %107 = dma.done [#allocation10], 512
    $region73: #{mylstm_forward.1} parent=1 // pred_fallthru
      _
    %v109 = vld [vmem:[%s0] sm:$0xff]
    %v110 = vld [vmem:[%s0 + $0x8] sm:$0xff]
    %vm113 = vcmask 1041408
    %v114 = vrot.slane %v109, 6
    %v115 = vrot.slane %v110, 6
    %v116 = vsel %vm113, %v114, %v115
    %v119 = vsel %vm113, 0.0, %v114
    %vm120 = vcmask 1045504
    %v121 = vrot.slane %v109, 2
    %v122 = vrot.slane %v110, 2
    %v123 = vsel %vm120, %v121, %v122
    %v125 = vsel %vm120, %v122, 0.0
    %126 = vrot.lane.b32.xlu0 %v109, 4
    %v127 = vpop.permute.xlu0 %126
    %128 = vrot.lane.b32.xlu0 %v110, 4
    %v129 = vpop.permute.xlu0 %128
    %133 = vrot.lane.b32.xlu0 %v123, 8
    %v134 = vpop.permute.xlu0 %133
    %135 = vrot.lane.b32.xlu0 %v125, 8
    %v136 = vpop.permute.xlu0 %135
    %vm139 = vcmask 31744
    %v140 = vsel %vm139, %v119, %v127
    %v141 = vsel %vm139, %v116, %v129
    %vm142 = vcmask 64512
    %v143 = vsel %vm142, %v140, %v134
    %v144 = vsel %vm142, %v141, %v136
    %v145 = vpack.c.bf16 %v144, %v143
    %v146 = vld [vmem:[#allocation4] sm:$0xf]
    %v147 = vld [vmem:[#allocation4 + $0x4] sm:$0x3]
    %v148 = vld [vmem:[#allocation6] sm:$0x1]
    %v150 = vlaneseq
    %v151 = vshrl.u32 %v150, 7
    %v152 = vsub.s32 0, %v151
    %v153 = vrot.slane %v148, %v152
    %v157 = vunpack.c.l.b16 %v146
    %v158 = vunpack.c.l.b16 %v147
    %v159 = vpack.c.b16 %v158, %v157
    %vm160 = vcmask 97280
    %v162 = vsel %vm160, %v145, 0
    %v165 = vsel %vm120, %v159, 0
    %167 = vmatprep.subr.bf16.mxu0 0
    %168 = vmatpush1.bf16.msra.mxu0 %v165
    %169 = vmatprep.subr.bf16.mxu0 0
    %170 = vmatpush1.bf16.msra.mxu0 0
    %171 = vmatprep.subr.bf16.mxu0 0
    %172 = vmatpush1.bf16.msra.mxu0 0
    %173 = vmatprep.subr.bf16.mxu0 0
    %174 = vmatpush1.bf16.msra.mxu0 0
    %175 = vmatprep.subr.bf16.mxu0 0
    %176 = vmatpush1.bf16.msra.mxu0 0
    %177 = vmatprep.subr.bf16.mxu0 0
    %178 = vmatpush1.bf16.msra.mxu0 0
    %179 = vmatprep.subr.bf16.mxu0 0
    %180 = vmatpush1.bf16.msra.mxu0 0
    %181 = vmatprep.subr.bf16.mxu0 0
    %182 = vmatpush1.bf16.msra.mxu0 0
    %183 = vmatprep.subr.bf16.mxu0 0
    %184 = vmatpush1.bf16.msra.mxu0 0
    %185 = vmatprep.subr.bf16.mxu0 0
    %186 = vmatpush1.bf16.msra.mxu0 0
    %187 = vmatprep.subr.bf16.mxu0 0
    %188 = vmatpush1.bf16.msra.mxu0 0
    %189 = vmatprep.subr.bf16.mxu0 0
    %190 = vmatpush1.bf16.msra.mxu0 0
    %191 = vmatprep.subr.bf16.mxu0 0
    %192 = vmatpush1.bf16.msra.mxu0 0
    %193 = vmatprep.subr.bf16.mxu0 0
    %194 = vmatpush1.bf16.msra.mxu0 0
    %195 = vmatprep.subr.bf16.mxu0 0
    %196 = vmatpush1.bf16.msra.mxu0 0
    %197 = vmatprep.subr.bf16.mxu0 0
    %198 = vmatpush1.bf16.msra.mxu0 0
    %199 = vmatprep.mubr.bf16.mxu0 0
    %200 = vmatmul.mubr.bf16.gmra.mrb[0].mxu0 %v162
    %v201 = vpop.f32.mrb[0].mxu0
    %v202 = vadd.f32 %v153, %v201
    %v203 = vpop.f32.mrb[0].mxu0
    %v204 = vpop.f32.mrb[0].mxu0
    %v205 = vadd.f32 %v153, %v204
    %v206 = vpop.f32.mrb[0].mxu0
    %207 = vdwg.mxu0
    %v208 = vmax.f32 %v202, 0.0
    %v209 = vmax.f32 %v205, 0.0
    %v212 = vrot.slane %v208, 6
    %v213 = vrot.slane %v209, 6
    %v214 = vsel %vm113, %v212, %v213
    %v217 = vsel %vm113, 0.0, %v212
    %v218 = vrot.slane %v208, 2
    %v219 = vrot.slane %v209, 2
    %v220 = vsel %vm120, %v218, %v219
    %v222 = vsel %vm120, %v219, 0.0
    %223 = vrot.lane.b32.xlu0 %v208, 48
    %v224 = vpop.permute.xlu0 %223
    %225 = vrot.lane.b32.xlu0 %v209, 48
    %v226 = vpop.permute.xlu0 %225
    %230 = vrot.lane.b32.xlu0 %v220, 96
    %v231 = vpop.permute.xlu0 %230
    %232 = vrot.lane.b32.xlu0 %v222, 96
    %v233 = vpop.permute.xlu0 %232
    %vm236 = vcmask 392192
    %v237 = vsel %vm236, %v217, %v224
    %v238 = vsel %vm236, %v214, %v226
    %vm239 = vcmask 785408
    %v240 = vsel %vm239, %v237, %v231
    %v241 = vsel %vm239, %v238, %v233
    %v242 = vpack.c.bf16 %v241, %v240
    %v243 = vpack.c.bf16 %v233, %v231
    %v244 = vld [vmem:[%s3] sm:$0xf]
    %v245 = vld [vmem:[%s3 + $0x4] sm:$0xf]
    %v246 = vld [vmem:[%s3 + $0x8] sm:$0xf]
    %v247 = vld [vmem:[%s3 + $0xc] sm:$0xf]
    %v248 = vld [vmem:[%s3 + $0x10] sm:$0xf]
    %v249 = vld [vmem:[%s3 + $0x14] sm:$0xf]
    %v250 = vld [vmem:[%s3 + $0x18] sm:$0xf]
    %v251 = vld [vmem:[%s3 + $0x1c] sm:$0xf]
    %v252 = vld [vmem:[%s3 + $0x20] sm:$0xf]
    %v253 = vld [vmem:[%s3 + $0x24] sm:$0xf]
    %v254 = vld [vmem:[%s3 + $0x28] sm:$0xf]
    %v255 = vld [vmem:[%s3 + $0x2c] sm:$0xf]
    %v256 = vld [vmem:[%s3 + $0x30] sm:$0xf]
    %v257 = vld [vmem:[%s3 + $0x34] sm:$0xf]
    %v258 = vld [vmem:[%s3 + $0x38] sm:$0xf]
    %v259 = vld [vmem:[%s3 + $0x3c] sm:$0xf]
    %v260 = vld [vmem:[%s3 + $0x40] sm:$0xf]
    %v261 = vld [vmem:[%s3 + $0x44] sm:$0xf]
    %v262 = vld [vmem:[#allocation8] sm:$0x1]
    %v264 = vlaneseq
    %v265 = vshrl.u32 %v264, 7
    %v266 = vsub.s32 0, %v265
    %v267 = vrot.slane %v262, %v266
    %v287 = vunpack.c.l.b16 %v244
    %v288 = vunpack.c.l.b16 %v245
    %v289 = vunpack.c.l.b16 %v246
    %v290 = vunpack.c.l.b16 %v247
    %v291 = vunpack.c.l.b16 %v248
    %v292 = vunpack.c.l.b16 %v249
    %v293 = vunpack.c.l.b16 %v250
    %v294 = vunpack.c.l.b16 %v251
    %v295 = vunpack.c.l.b16 %v252
    %v296 = vunpack.c.l.b16 %v253
    %v297 = vunpack.c.l.b16 %v254
    %v298 = vunpack.c.l.b16 %v255
    %v299 = vunpack.c.l.b16 %v256
    %v300 = vunpack.c.l.b16 %v257
    %v301 = vunpack.c.l.b16 %v258
    %v302 = vunpack.c.l.b16 %v259
    %v303 = vunpack.c.l.b16 %v260
    %v304 = vunpack.c.l.b16 %v261
    %v305 = vpack.c.b16 %v288, %v287
    %v306 = vpack.c.b16 %v290, %v289
    %v307 = vpack.c.b16 %v292, %v291
    %v308 = vpack.c.b16 %v294, %v293
    %v309 = vpack.c.b16 %v296, %v295
    %v310 = vpack.c.b16 %v298, %v297
    %v311 = vpack.c.b16 %v300, %v299
    %v312 = vpack.c.b16 %v302, %v301
    %v313 = vpack.c.b16 %v304, %v303
    %vm323 = vcmask 130048
    %v325 = vsel %vm323, %v243, 0
    %327 = vmatprep.subr.bf16.mxu0 0
    %328 = vmatpush1.bf16.msra.mxu0 %v305
    %329 = vmatprep.subr.bf16.mxu0 0
    %330 = vmatpush1.bf16.msra.mxu0 %v306
    %331 = vmatprep.subr.bf16.mxu0 0
    %332 = vmatpush1.bf16.msra.mxu0 %v307
    %333 = vmatprep.subr.bf16.mxu0 0
    %334 = vmatpush1.bf16.msra.mxu0 %v308
    %335 = vmatprep.subr.bf16.mxu0 0
    %336 = vmatpush1.bf16.msra.mxu0 %v309
    %337 = vmatprep.subr.bf16.mxu0 0
    %338 = vmatpush1.bf16.msra.mxu0 %v310
    %339 = vmatprep.subr.bf16.mxu0 0
    %340 = vmatpush1.bf16.msra.mxu0 %v311
    %341 = vmatprep.subr.bf16.mxu0 0
    %342 = vmatpush1.bf16.msra.mxu0 %v312
    %343 = vmatprep.subr.bf16.mxu0 0
    %344 = vmatpush1.bf16.msra.mxu0 %v313
    %345 = vmatprep.subr.bf16.mxu0 0
    %346 = vmatpush1.bf16.msra.mxu0 0
    %347 = vmatprep.subr.bf16.mxu0 0
    %348 = vmatpush1.bf16.msra.mxu0 0
    %349 = vmatprep.subr.bf16.mxu0 0
    %350 = vmatpush1.bf16.msra.mxu0 0
    %351 = vmatprep.subr.bf16.mxu0 0
    %352 = vmatpush1.bf16.msra.mxu0 0
    %353 = vmatprep.subr.bf16.mxu0 0
    %354 = vmatpush1.bf16.msra.mxu0 0
    %355 = vmatprep.subr.bf16.mxu0 0
    %356 = vmatpush1.bf16.msra.mxu0 0
    %357 = vmatprep.subr.bf16.mxu0 0
    %358 = vmatpush1.bf16.msra.mxu0 0
    %359 = vmatprep.mubr.bf16.mxu0 %v325
    %360 = vmatmul.mubr.bf16.gmra.mrb[0].mxu0 %v242
    %v361 = vpop.f32.mrb[0].mxu0
    %v362 = vadd.f32 %v267, %v361
    %v363 = vpop.f32.mrb[0].mxu0
    %v364 = vpop.f32.mrb[0].mxu0
    %v365 = vadd.f32 %v267, %v364
    %v366 = vpop.f32.mrb[0].mxu0
    %367 = vdwg.mxu0
    %v368 = vmax.f32 %v362, 0.0
    %v369 = vmax.f32 %v365, 0.0
    %v370 = vpack.c.bf16 %v369, %v368
    %v371 = vld [vmem:[%s5] sm:$0xff]
    %v372 = vld [vmem:[%s5 + $0x8] sm:$0xff]
    %v373 = vld [vmem:[%s5 + $0x10] sm:$0xff]
    %v374 = vld [vmem:[%s5 + $0x18] sm:$0xff]
    %v375 = vld [vmem:[%s5 + $0x20] sm:$0xff]
    %v376 = vld [vmem:[%s5 + $0x28] sm:$0xff]
    %v377 = vld [vmem:[%s5 + $0x30] sm:$0xff]
    %v378 = vld [vmem:[%s5 + $0x38] sm:$0xff]
    %v379 = vld [vmem:[%s6] sm:$0x3]
    %v381 = vlaneseq
    %v382 = vshrl.u32 %v381, 7
    %v383 = vsub.s32 0, %v382
    %v384 = vrot.slane %v379, %v383
    %v385 = vlaneseq
    %v386 = vshrl.u32 %v385, 7
    %v387 = vsub.s32 1, %v386
    %v388 = vrot.slane %v379, %v387
    %v399 = vunpack.c.l.b16 %v371
    %v400 = vunpack.c.h.b16 %v371
    %v401 = vunpack.c.l.b16 %v372
    %v402 = vunpack.c.h.b16 %v372
    %v403 = vunpack.c.l.b16 %v373
    %v404 = vunpack.c.h.b16 %v373
    %v405 = vunpack.c.l.b16 %v374
    %v406 = vunpack.c.h.b16 %v374
    %v407 = vunpack.c.l.b16 %v375
    %v408 = vunpack.c.h.b16 %v375
    %v409 = vunpack.c.l.b16 %v376
    %v410 = vunpack.c.h.b16 %v376
    %v411 = vunpack.c.l.b16 %v377
    %v412 = vunpack.c.h.b16 %v377
    %v413 = vunpack.c.l.b16 %v378
    %v414 = vunpack.c.h.b16 %v378
    %v415 = vpack.c.b16 %v401, %v399
    %v416 = vpack.c.b16 %v402, %v400
    %v417 = vpack.c.b16 %v405, %v403
    %v418 = vpack.c.b16 %v406, %v404
    %v419 = vpack.c.b16 %v409, %v407
    %v420 = vpack.c.b16 %v410, %v408
    %v421 = vpack.c.b16 %v413, %v411
    %v422 = vpack.c.b16 %v414, %v412
    %vm431 = vcmask 523264
    %v433 = vsel %vm431, %v370, 0
    %435 = vmatprep.subr.bf16.mxu0 %v416
    %436 = vmatpush1.bf16.msra.mxu0 %v415
    %437 = vmatprep.subr.bf16.mxu0 %v418
    %438 = vmatpush1.bf16.msra.mxu0 %v417
    %439 = vmatprep.subr.bf16.mxu0 %v420
    %440 = vmatpush1.bf16.msra.mxu0 %v419
    %441 = vmatprep.subr.bf16.mxu0 %v422
    %442 = vmatpush1.bf16.msra.mxu0 %v421
    %443 = vmatprep.subr.bf16.mxu0 0
    %444 = vmatpush1.bf16.msra.mxu0 0
    %445 = vmatprep.subr.bf16.mxu0 0
    %446 = vmatpush1.bf16.msra.mxu0 0
    %447 = vmatprep.subr.bf16.mxu0 0
    %448 = vmatpush1.bf16.msra.mxu0 0
    %449 = vmatprep.subr.bf16.mxu0 0
    %450 = vmatpush1.bf16.msra.mxu0 0
    %451 = vmatprep.subr.bf16.mxu0 0
    %452 = vmatpush1.bf16.msra.mxu0 0
    %453 = vmatprep.subr.bf16.mxu0 0
    %454 = vmatpush1.bf16.msra.mxu0 0
    %455 = vmatprep.subr.bf16.mxu0 0
    %456 = vmatpush1.bf16.msra.mxu0 0
    %457 = vmatprep.subr.bf16.mxu0 0
    %458 = vmatpush1.bf16.msra.mxu0 0
    %459 = vmatprep.subr.bf16.mxu0 0
    %460 = vmatpush1.bf16.msra.mxu0 0
    %461 = vmatprep.subr.bf16.mxu0 0
    %462 = vmatpush1.bf16.msra.mxu0 0
    %463 = vmatprep.subr.bf16.mxu0 0
    %464 = vmatpush1.bf16.msra.mxu0 0
    %465 = vmatprep.subr.bf16.mxu0 0
    %466 = vmatpush1.bf16.msra.mxu0 0
    %467 = vmatprep.mubr.bf16.mxu0 0
    %468 = vmatmul.mubr.bf16.gmra.mrb[0].mxu0 %v433
    %v469 = vpop.f32.mrb[0].mxu0
    %v470 = vadd.f32 %v384, %v469
    %v471 = vpop.f32.mrb[0].mxu0
    %v472 = vadd.f32 %v388, %v471
    %v473 = vpop.f32.mrb[0].mxu0
    %v474 = vadd.f32 %v384, %v473
    %v475 = vpop.f32.mrb[0].mxu0
    %v476 = vadd.f32 %v388, %v475
    %477 = vdwg.mxu0
    %v478 = vld [vmem:[%s7] sm:$0xff]
    %v479 = vld [vmem:[%s7 + $0x8] sm:$0xff]
    %v480 = vld [vmem:[%s7 + $0x10] sm:$0xff]
    %v481 = vld [vmem:[%s7 + $0x18] sm:$0xff]
    %v482 = vld [vmem:[%s7 + $0x20] sm:$0xff]
    %v483 = vld [vmem:[%s7 + $0x28] sm:$0xff]
    %v484 = vld [vmem:[%s7 + $0x30] sm:$0xff]
    %v485 = vld [vmem:[%s7 + $0x38] sm:$0xff]
    %v486 = vld [vmem:[%s7 + $0x40] sm:$0xff]
    %v487 = vld [vmem:[%s7 + $0x48] sm:$0xff]
    %v488 = vld [vmem:[%s7 + $0x50] sm:$0xff]
    %v489 = vld [vmem:[%s7 + $0x58] sm:$0xff]
    %v490 = vld [vmem:[%s7 + $0x60] sm:$0xff]
    %v491 = vld [vmem:[%s7 + $0x68] sm:$0xff]
    %v492 = vld [vmem:[%s7 + $0x70] sm:$0xff]
    %v493 = vld [vmem:[%s7 + $0x78] sm:$0xff]
    %v495 = vsel %vm431, 0.0, 0
    %497 = vmatprep.subr.mxu0 %v479
    %498 = vmatpush1.msra.mxu0 %v478
    %499 = vmatprep.subr.mxu0 %v481
    %500 = vmatpush1.msra.mxu0 %v480
    %501 = vmatprep.subr.mxu0 %v483
    %502 = vmatpush1.msra.mxu0 %v482
    %503 = vmatprep.subr.mxu0 %v485
    %504 = vmatpush1.msra.mxu0 %v484
    %505 = vmatprep.subr.mxu0 %v487
    %506 = vmatpush1.msra.mxu0 %v486
    %507 = vmatprep.subr.mxu0 %v489
    %508 = vmatpush1.msra.mxu0 %v488
    %509 = vmatprep.subr.mxu0 %v491
    %510 = vmatpush1.msra.mxu0 %v490
    %511 = vmatprep.subr.mxu0 %v493
    %512 = vmatpush1.msra.mxu0 %v492
    %513 = vmatprep.subr.mxu0 0.0
    %514 = vmatpush1.msra.mxu0 0.0
    %515 = vmatprep.subr.mxu0 0.0
    %516 = vmatpush1.msra.mxu0 0.0
    %517 = vmatprep.subr.mxu0 0.0
    %518 = vmatpush1.msra.mxu0 0.0
    %519 = vmatprep.subr.mxu0 0.0
    %520 = vmatpush1.msra.mxu0 0.0
    %521 = vmatprep.subr.mxu0 0.0
    %522 = vmatpush1.msra.mxu0 0.0
    %523 = vmatprep.subr.mxu0 0.0
    %524 = vmatpush1.msra.mxu0 0.0
    %525 = vmatprep.subr.mxu0 0.0
    %526 = vmatpush1.msra.mxu0 0.0
    %527 = vmatprep.subr.mxu0 0.0
    %528 = vmatpush1.msra.mxu0 0.0
    %529 = vmatprep.subr.mxu0 0.0
    %530 = vmatpush1.msra.mxu0 0.0
    %531 = vmatprep.subr.mxu0 0.0
    %532 = vmatpush1.msra.mxu0 0.0
    %533 = vmatprep.subr.mxu0 0.0
    %534 = vmatpush1.msra.mxu0 0.0
    %535 = vmatprep.subr.mxu0 0.0
    %536 = vmatpush1.msra.mxu0 0.0
    %537 = vmatprep.subr.mxu0 0.0
    %538 = vmatpush1.msra.mxu0 0.0
    %539 = vmatprep.subr.mxu0 0.0
    %540 = vmatpush1.msra.mxu0 0.0
    %541 = vmatprep.subr.mxu0 0.0
    %542 = vmatpush1.msra.mxu0 0.0
    %543 = vmatprep.subr.mxu0 0.0
    %544 = vmatpush1.msra.mxu0 0.0
    %545 = vmatprep.subr.mxu0 0.0
    %546 = vmatpush1.msra.mxu0 0.0
    %547 = vmatprep.subr.mxu0 0.0
    %548 = vmatpush1.msra.mxu0 0.0
    %549 = vmatprep.subr.mxu0 0.0
    %550 = vmatpush1.msra.mxu0 0.0
    %551 = vmatprep.subr.mxu0 0.0
    %552 = vmatpush1.msra.mxu0 0.0
    %553 = vmatprep.subr.mxu0 0.0
    %554 = vmatpush1.msra.mxu0 0.0
    %555 = vmatprep.subr.mxu0 0.0
    %556 = vmatpush1.msra.mxu0 0.0
    %557 = vmatprep.subr.mxu0 0.0
    %558 = vmatpush1.msra.mxu0 0.0
    %559 = vmatprep.subr.mxu0 0.0
    %560 = vmatpush1.msra.mxu0 0.0
    %561 = vmatprep.mubr.f32.mxu0 0.0
    %562 = vmatmul.mubr.f32.gmra.mrb[0].mxu0 %v495
    %v563 = vpop.f32.mrb[0].mxu0
    %v564 = vadd.f32 0.0, %v563
    %v565 = vpop.f32.mrb[0].mxu0
    %v566 = vadd.f32 0.0, %v565
    %567 = vdwg.mxu0
    %v568 = vadd.f32 %v470, %v564
    %v570 = vrot.slane %v566, 2
    %v572 = vadd.f32 %v476, %v570
    %v573 = vxor.u32 %v568, 2147483648
    %v574 = vmul.f32 %v573, 1.442695
    %v575 = vpow.pop %v574
    %v576 = vadd.f32 %v575, 1.0
    %v577 = vrcp.pop %v576
    %v578 = vmul.f32 1.0, %v577
    %v579 = vtanh.pop %v568
    %v580 = vmul.f32 %v578, 0.0
    %582 = vrot.lane.b32.xlu0 %v579, 64
    %v583 = vpop.permute.xlu0 %582
    %v585 = vmul.f32 %v578, %v583
    %587 = vrot.lane.b32.xlu0 %v585, 32
    %v588 = vpop.permute.xlu0 %587
    %v590 = vadd.f32 %v580, %v588
    %v591 = vtanh.pop %v590
    %593 = vrot.lane.b32.xlu0 %v591, 64
    %v594 = vpop.permute.xlu0 %593
    %v596 = vmul.f32 %v578, %v594
    %v597 = vxor.u32 %v572, 2147483648
    %v598 = vmul.f32 %v597, 1.442695
    %v599 = vpow.pop %v598
    %v600 = vadd.f32 %v599, 1.0
    %v601 = vrcp.pop %v600
    %v602 = vmul.f32 1.0, %v601
    %v603 = vtanh.pop %v572
    %v604 = vmul.f32 %v602, 0.0
    %606 = vrot.lane.b32.xlu0 %v603, 64
    %v607 = vpop.permute.xlu0 %606
    %v609 = vmul.f32 %v602, %v607
    %611 = vrot.lane.b32.xlu0 %v609, 32
    %v612 = vpop.permute.xlu0 %611
    %v614 = vadd.f32 %v604, %v612
    %v615 = vtanh.pop %v614
    %617 = vrot.lane.b32.xlu0 %v615, 64
    %v618 = vpop.permute.xlu0 %617
    %v620 = vmul.f32 %v602, %v618
    %622 = vrot.lane.b32.xlu0 %v596, 32
    %v623 = vpop.permute.xlu0 %622
    %vm625 = vcmask 254976
    %626 = vst.msk [vmem:[#allocation2] sm:$0x3] %vm625, %v623
    %628 = vrot.lane.b32.xlu0 %v620, 64
    %v629 = vpop.permute.xlu0 %628
    %vm631 = vcmask 523526
    %632 = vst.msk [vmem:[#allocation2 + $0x8] sm:$0xc0] %vm631, %v629
    %v633 = vrot.slane %v620, 6
    %634 = vrot.lane.b32.xlu0 %v633, 64
    %v635 = vpop.permute.xlu0 %634
    %vm637 = vcmask 261120
    %v638 = vsel %vm637, %v623, %v635
    %v640 = vsel %vm431, %v638, 0
    %642 = vmatprep.subr.mxu0 %v479
    %643 = vmatpush1.msra.mxu0 %v478
    %644 = vmatprep.subr.mxu0 %v481
    %645 = vmatpush1.msra.mxu0 %v480
    %646 = vmatprep.subr.mxu0 %v483
    %647 = vmatpush1.msra.mxu0 %v482
    %648 = vmatprep.subr.mxu0 %v485
    %649 = vmatpush1.msra.mxu0 %v484
    %650 = vmatprep.subr.mxu0 %v487
    %651 = vmatpush1.msra.mxu0 %v486
    %652 = vmatprep.subr.mxu0 %v489
    %653 = vmatpush1.msra.mxu0 %v488
    %654 = vmatprep.subr.mxu0 %v491
    %655 = vmatpush1.msra.mxu0 %v490
    %656 = vmatprep.subr.mxu0 %v493
    %657 = vmatpush1.msra.mxu0 %v492
    %658 = vmatprep.subr.mxu0 0.0
    %659 = vmatpush1.msra.mxu0 0.0
    %660 = vmatprep.subr.mxu0 0.0
    %661 = vmatpush1.msra.mxu0 0.0
    %662 = vmatprep.subr.mxu0 0.0
    %663 = vmatpush1.msra.mxu0 0.0
    %664 = vmatprep.subr.mxu0 0.0
    %665 = vmatpush1.msra.mxu0 0.0
    %666 = vmatprep.subr.mxu0 0.0
    %667 = vmatpush1.msra.mxu0 0.0
    %668 = vmatprep.subr.mxu0 0.0
    %669 = vmatpush1.msra.mxu0 0.0
    %670 = vmatprep.subr.mxu0 0.0
    %671 = vmatpush1.msra.mxu0 0.0
    %672 = vmatprep.subr.mxu0 0.0
    %673 = vmatpush1.msra.mxu0 0.0
    %674 = vmatprep.subr.mxu0 0.0
    %675 = vmatpush1.msra.mxu0 0.0
    %676 = vmatprep.subr.mxu0 0.0
    %677 = vmatpush1.msra.mxu0 0.0
    %678 = vmatprep.subr.mxu0 0.0
    %679 = vmatpush1.msra.mxu0 0.0
    %680 = vmatprep.subr.mxu0 0.0
    %681 = vmatpush1.msra.mxu0 0.0
    %682 = vmatprep.subr.mxu0 0.0
    %683 = vmatpush1.msra.mxu0 0.0
    %684 = vmatprep.subr.mxu0 0.0
    %685 = vmatpush1.msra.mxu0 0.0
    %686 = vmatprep.subr.mxu0 0.0
    %687 = vmatpush1.msra.mxu0 0.0
    %688 = vmatprep.subr.mxu0 0.0
    %689 = vmatpush1.msra.mxu0 0.0
    %690 = vmatprep.subr.mxu0 0.0
    %691 = vmatpush1.msra.mxu0 0.0
    %692 = vmatprep.subr.mxu0 0.0
    %693 = vmatpush1.msra.mxu0 0.0
    %694 = vmatprep.subr.mxu0 0.0
    %695 = vmatpush1.msra.mxu0 0.0
    %696 = vmatprep.subr.mxu0 0.0
    %697 = vmatpush1.msra.mxu0 0.0
    %698 = vmatprep.subr.mxu0 0.0
    %699 = vmatpush1.msra.mxu0 0.0
    %700 = vmatprep.subr.mxu0 0.0
    %701 = vmatpush1.msra.mxu0 0.0
    %702 = vmatprep.subr.mxu0 0.0
    %703 = vmatpush1.msra.mxu0 0.0
    %704 = vmatprep.subr.mxu0 0.0
    %705 = vmatpush1.msra.mxu0 0.0
    %706 = vmatprep.mubr.f32.mxu0 0.0
    %707 = vmatmul.mubr.f32.gmra.mrb[0].mxu0 %v640
    %v708 = vpop.f32.mrb[0].mxu0
    %v709 = vadd.f32 0.0, %v708
    %v710 = vpop.f32.mrb[0].mxu0
    %v711 = vadd.f32 0.0, %v710
    %712 = vdwg.mxu0
    %v714 = vrot.slane %v709, 6
    %v716 = vadd.f32 %v470, %v714
    %v718 = vrot.slane %v711, 4
    %v720 = vadd.f32 %v476, %v718
    %v721 = vxor.u32 %v716, 2147483648
    %v722 = vmul.f32 %v721, 1.442695
    %v723 = vpow.pop %v722
    %v724 = vadd.f32 %v723, 1.0
    %v725 = vrcp.pop %v724
    %v726 = vmul.f32 1.0, %v725
    %v727 = vtanh.pop %v716
    %v729 = vrot.slane %v590, 6
    %v731 = vmul.f32 %v726, %v729
    %733 = vrot.lane.b32.xlu0 %v727, 64
    %v734 = vpop.permute.xlu0 %733
    %v736 = vmul.f32 %v726, %v734
    %738 = vrot.lane.b32.xlu0 %v736, 32
    %v739 = vpop.permute.xlu0 %738
    %v741 = vadd.f32 %v731, %v739
    %v742 = vtanh.pop %v741
    %744 = vrot.lane.b32.xlu0 %v742, 64
    %v745 = vpop.permute.xlu0 %744
    %v747 = vmul.f32 %v726, %v745
    %v748 = vxor.u32 %v720, 2147483648
    %v749 = vmul.f32 %v748, 1.442695
    %v750 = vpow.pop %v749
    %v751 = vadd.f32 %v750, 1.0
    %v752 = vrcp.pop %v751
    %v753 = vmul.f32 1.0, %v752
    %v754 = vtanh.pop %v720
    %v756 = vrot.slane %v614, 2
    %v758 = vmul.f32 %v753, %v756
    %760 = vrot.lane.b32.xlu0 %v754, 64
    %v761 = vpop.permute.xlu0 %760
    %v763 = vmul.f32 %v753, %v761
    %765 = vrot.lane.b32.xlu0 %v763, 32
    %v766 = vpop.permute.xlu0 %765
    %v768 = vadd.f32 %v758, %v766
    %v769 = vtanh.pop %v768
    %771 = vrot.lane.b32.xlu0 %v769, 64
    %v772 = vpop.permute.xlu0 %771
    %v774 = vmul.f32 %v753, %v772
    %776 = vrot.lane.b32.xlu0 %v747, 32
    %v777 = vpop.permute.xlu0 %776
    %vm779 = vcmask 257026
    %780 = vst.msk [vmem:[#allocation2] sm:$0xc] %vm779, %v777
    %782 = vrot.lane.b32.xlu0 %v774, 64
    %v783 = vpop.permute.xlu0 %782
    %vm785 = vcmask 521476
    %786 = vst.msk [vmem:[#allocation2 + $0x8] sm:$0x30] %vm785, %v783
    %v787 = vrot.slane %v774, 2
    %788 = vrot.lane.b32.xlu0 %v787, 64
    %v789 = vpop.permute.xlu0 %788
    %v791 = vsel %vm637, %v777, %v789
    %v793 = vrot.slane %v791, 2
    %v794 = vsel %vm431, %v793, 0
    %796 = vmatprep.subr.mxu0 %v479
    %797 = vmatpush1.msra.mxu0 %v478
    %798 = vmatprep.subr.mxu0 %v481
    %799 = vmatpush1.msra.mxu0 %v480
    %800 = vmatprep.subr.mxu0 %v483
    %801 = vmatpush1.msra.mxu0 %v482
    %802 = vmatprep.subr.mxu0 %v485
    %803 = vmatpush1.msra.mxu0 %v484
    %804 = vmatprep.subr.mxu0 %v487
    %805 = vmatpush1.msra.mxu0 %v486
    %806 = vmatprep.subr.mxu0 %v489
    %807 = vmatpush1.msra.mxu0 %v488
    %808 = vmatprep.subr.mxu0 %v491
    %809 = vmatpush1.msra.mxu0 %v490
    %810 = vmatprep.subr.mxu0 %v493
    %811 = vmatpush1.msra.mxu0 %v492
    %812 = vmatprep.subr.mxu0 0.0
    %813 = vmatpush1.msra.mxu0 0.0
    %814 = vmatprep.subr.mxu0 0.0
    %815 = vmatpush1.msra.mxu0 0.0
    %816 = vmatprep.subr.mxu0 0.0
    %817 = vmatpush1.msra.mxu0 0.0
    %818 = vmatprep.subr.mxu0 0.0
    %819 = vmatpush1.msra.mxu0 0.0
    %820 = vmatprep.subr.mxu0 0.0
    %821 = vmatpush1.msra.mxu0 0.0
    %822 = vmatprep.subr.mxu0 0.0
    %823 = vmatpush1.msra.mxu0 0.0
    %824 = vmatprep.subr.mxu0 0.0
    %825 = vmatpush1.msra.mxu0 0.0
    %826 = vmatprep.subr.mxu0 0.0
    %827 = vmatpush1.msra.mxu0 0.0
    %828 = vmatprep.subr.mxu0 0.0
    %829 = vmatpush1.msra.mxu0 0.0
    %830 = vmatprep.subr.mxu0 0.0
    %831 = vmatpush1.msra.mxu0 0.0
    %832 = vmatprep.subr.mxu0 0.0
    %833 = vmatpush1.msra.mxu0 0.0
    %834 = vmatprep.subr.mxu0 0.0
    %835 = vmatpush1.msra.mxu0 0.0
    %836 = vmatprep.subr.mxu0 0.0
    %837 = vmatpush1.msra.mxu0 0.0
    %838 = vmatprep.subr.mxu0 0.0
    %839 = vmatpush1.msra.mxu0 0.0
    %840 = vmatprep.subr.mxu0 0.0
    %841 = vmatpush1.msra.mxu0 0.0
    %842 = vmatprep.subr.mxu0 0.0
    %843 = vmatpush1.msra.mxu0 0.0
    %844 = vmatprep.subr.mxu0 0.0
    %845 = vmatpush1.msra.mxu0 0.0
    %846 = vmatprep.subr.mxu0 0.0
    %847 = vmatpush1.msra.mxu0 0.0
    %848 = vmatprep.subr.mxu0 0.0
    %849 = vmatpush1.msra.mxu0 0.0
    %850 = vmatprep.subr.mxu0 0.0
    %851 = vmatpush1.msra.mxu0 0.0
    %852 = vmatprep.subr.mxu0 0.0
    %853 = vmatpush1.msra.mxu0 0.0
    %854 = vmatprep.subr.mxu0 0.0
    %855 = vmatpush1.msra.mxu0 0.0
    %856 = vmatprep.subr.mxu0 0.0
    %857 = vmatpush1.msra.mxu0 0.0
    %858 = vmatprep.subr.mxu0 0.0
    %859 = vmatpush1.msra.mxu0 0.0
    %860 = vmatprep.mubr.f32.mxu0 0.0
    %861 = vmatmul.mubr.f32.gmra.mrb[0].mxu0 %v794
    %v862 = vpop.f32.mrb[0].mxu0
    %v863 = vadd.f32 0.0, %v862
    %v864 = vpop.f32.mrb[0].mxu0
    %v865 = vadd.f32 0.0, %v864
    %866 = vdwg.mxu0
    %v868 = vrot.slane %v863, 4
    %v870 = vadd.f32 %v470, %v868
    %v872 = vrot.slane %v865, 6
    %v874 = vadd.f32 %v476, %v872
    %v875 = vxor.u32 %v870, 2147483648
    %v876 = vmul.f32 %v875, 1.442695
    %v877 = vpow.pop %v876
    %v878 = vadd.f32 %v877, 1.0
    %v879 = vrcp.pop %v878
    %v880 = vmul.f32 1.0, %v879
    %v881 = vtanh.pop %v870
    %v883 = vrot.slane %v741, 6
    %v885 = vmul.f32 %v880, %v883
    %887 = vrot.lane.b32.xlu0 %v881, 64
    %v888 = vpop.permute.xlu0 %887
    %v890 = vmul.f32 %v880, %v888
    %892 = vrot.lane.b32.xlu0 %v890, 32
    %v893 = vpop.permute.xlu0 %892
    %v895 = vadd.f32 %v885, %v893
    %v896 = vtanh.pop %v895
    %898 = vrot.lane.b32.xlu0 %v896, 64
    %v899 = vpop.permute.xlu0 %898
    %v901 = vmul.f32 %v880, %v899
    %v902 = vxor.u32 %v874, 2147483648
    %v903 = vmul.f32 %v902, 1.442695
    %v904 = vpow.pop %v903
    %v905 = vadd.f32 %v904, 1.0
    %v906 = vrcp.pop %v905
    %v907 = vmul.f32 1.0, %v906
    %v908 = vtanh.pop %v874
    %v910 = vrot.slane %v768, 2
    %v912 = vmul.f32 %v907, %v910
    %914 = vrot.lane.b32.xlu0 %v908, 64
    %v915 = vpop.permute.xlu0 %914
    %v917 = vmul.f32 %v907, %v915
    %919 = vrot.lane.b32.xlu0 %v917, 32
    %v920 = vpop.permute.xlu0 %919
    %v922 = vadd.f32 %v912, %v920
    %v923 = vtanh.pop %v922
    %925 = vrot.lane.b32.xlu0 %v923, 64
    %v926 = vpop.permute.xlu0 %925
    %v928 = vmul.f32 %v907, %v926
    %930 = vrot.lane.b32.xlu0 %v901, 32
    %v931 = vpop.permute.xlu0 %930
    %vm933 = vcmask 259076
    %934 = vst.msk [vmem:[#allocation2] sm:$0x30] %vm933, %v931
    %936 = vrot.lane.b32.xlu0 %v928, 64
    %v937 = vpop.permute.xlu0 %936
    %vm939 = vcmask 519426
    %940 = vst.msk [vmem:[#allocation2 + $0x8] sm:$0xc] %vm939, %v937
    %v941 = vrot.slane %v928, 6
    %942 = vrot.lane.b32.xlu0 %v941, 64
    %v943 = vpop.permute.xlu0 %942
    %v945 = vsel %vm637, %v931, %v943
    %v947 = vrot.slane %v945, 4
    %v948 = vsel %vm431, %v947, 0
    %950 = vmatprep.subr.mxu0 %v479
    %951 = vmatpush1.msra.mxu0 %v478
    %952 = vmatprep.subr.mxu0 %v481
    %953 = vmatpush1.msra.mxu0 %v480
    %954 = vmatprep.subr.mxu0 %v483
    %955 = vmatpush1.msra.mxu0 %v482
    %956 = vmatprep.subr.mxu0 %v485
    %957 = vmatpush1.msra.mxu0 %v484
    %958 = vmatprep.subr.mxu0 %v487
    %959 = vmatpush1.msra.mxu0 %v486
    %960 = vmatprep.subr.mxu0 %v489
    %961 = vmatpush1.msra.mxu0 %v488
    %962 = vmatprep.subr.mxu0 %v491
    %963 = vmatpush1.msra.mxu0 %v490
    %964 = vmatprep.subr.mxu0 %v493
    %965 = vmatpush1.msra.mxu0 %v492
    %966 = vmatprep.subr.mxu0 0.0
    %967 = vmatpush1.msra.mxu0 0.0
    %968 = vmatprep.subr.mxu0 0.0
    %969 = vmatpush1.msra.mxu0 0.0
    %970 = vmatprep.subr.mxu0 0.0
    %971 = vmatpush1.msra.mxu0 0.0
    %972 = vmatprep.subr.mxu0 0.0
    %973 = vmatpush1.msra.mxu0 0.0
    %974 = vmatprep.subr.mxu0 0.0
    %975 = vmatpush1.msra.mxu0 0.0
    %976 = vmatprep.subr.mxu0 0.0
    %977 = vmatpush1.msra.mxu0 0.0
    %978 = vmatprep.subr.mxu0 0.0
    %979 = vmatpush1.msra.mxu0 0.0
    %980 = vmatprep.subr.mxu0 0.0
    %981 = vmatpush1.msra.mxu0 0.0
    %982 = vmatprep.subr.mxu0 0.0
    %983 = vmatpush1.msra.mxu0 0.0
    %984 = vmatprep.subr.mxu0 0.0
    %985 = vmatpush1.msra.mxu0 0.0
    %986 = vmatprep.subr.mxu0 0.0
    %987 = vmatpush1.msra.mxu0 0.0
    %988 = vmatprep.subr.mxu0 0.0
    %989 = vmatpush1.msra.mxu0 0.0
    %990 = vmatprep.subr.mxu0 0.0
    %991 = vmatpush1.msra.mxu0 0.0
    %992 = vmatprep.subr.mxu0 0.0
    %993 = vmatpush1.msra.mxu0 0.0
    %994 = vmatprep.subr.mxu0 0.0
    %995 = vmatpush1.msra.mxu0 0.0
    %996 = vmatprep.subr.mxu0 0.0
    %997 = vmatpush1.msra.mxu0 0.0
    %998 = vmatprep.subr.mxu0 0.0
    %999 = vmatpush1.msra.mxu0 0.0
    %1000 = vmatprep.subr.mxu0 0.0
    %1001 = vmatpush1.msra.mxu0 0.0
    %1002 = vmatprep.subr.mxu0 0.0
    %1003 = vmatpush1.msra.mxu0 0.0
    %1004 = vmatprep.subr.mxu0 0.0
    %1005 = vmatpush1.msra.mxu0 0.0
    %1006 = vmatprep.subr.mxu0 0.0
    %1007 = vmatpush1.msra.mxu0 0.0
    %1008 = vmatprep.subr.mxu0 0.0
    %1009 = vmatpush1.msra.mxu0 0.0
    %1010 = vmatprep.subr.mxu0 0.0
    %1011 = vmatpush1.msra.mxu0 0.0
    %1012 = vmatprep.subr.mxu0 0.0
    %1013 = vmatpush1.msra.mxu0 0.0
    %1014 = vmatprep.mubr.f32.mxu0 0.0
    %1015 = vmatmul.mubr.f32.gmra.mrb[0].mxu0 %v948
    %v1016 = vpop.f32.mrb[0].mxu0
    %v1017 = vadd.f32 0.0, %v1016
    %v1018 = vpop.f32.mrb[0].mxu0
    %v1019 = vadd.f32 0.0, %v1018
    %1020 = vdwg.mxu0
    %v1022 = vrot.slane %v1017, 2
    %v1024 = vadd.f32 %v470, %v1022
    %v1025 = vadd.f32 %v476, %v1019
    %v1026 = vxor.u32 %v1024, 2147483648
    %v1027 = vmul.f32 %v1026, 1.442695
    %v1028 = vpow.pop %v1027
    %v1029 = vadd.f32 %v1028, 1.0
    %v1030 = vrcp.pop %v1029
    %v1031 = vmul.f32 1.0, %v1030
    %v1032 = vtanh.pop %v1024
    %v1034 = vrot.slane %v895, 6
    %v1036 = vmul.f32 %v1031, %v1034
    %1038 = vrot.lane.b32.xlu0 %v1032, 64
    %v1039 = vpop.permute.xlu0 %1038
    %v1041 = vmul.f32 %v1031, %v1039
    %1043 = vrot.lane.b32.xlu0 %v1041, 32
    %v1044 = vpop.permute.xlu0 %1043
    %v1046 = vadd.f32 %v1036, %v1044
    %v1047 = vtanh.pop %v1046
    %1049 = vrot.lane.b32.xlu0 %v1047, 64
    %v1050 = vpop.permute.xlu0 %1049
    %v1052 = vmul.f32 %v1031, %v1050
    %v1053 = vxor.u32 %v1025, 2147483648
    %v1054 = vmul.f32 %v1053, 1.442695
    %v1055 = vpow.pop %v1054
    %v1056 = vadd.f32 %v1055, 1.0
    %v1057 = vrcp.pop %v1056
    %v1058 = vmul.f32 1.0, %v1057
    %v1059 = vtanh.pop %v1025
    %v1061 = vrot.slane %v922, 2
    %v1063 = vmul.f32 %v1058, %v1061
    %1065 = vrot.lane.b32.xlu0 %v1059, 64
    %v1066 = vpop.permute.xlu0 %1065
    %v1068 = vmul.f32 %v1058, %v1066
    %1070 = vrot.lane.b32.xlu0 %v1068, 32
    %v1071 = vpop.permute.xlu0 %1070
    %v1073 = vadd.f32 %v1063, %v1071
    %v1074 = vtanh.pop %v1073
    %1076 = vrot.lane.b32.xlu0 %v1074, 64
    %v1077 = vpop.permute.xlu0 %1076
    %v1079 = vmul.f32 %v1058, %v1077
    %1081 = vrot.lane.b32.xlu0 %v1052, 32
    %v1082 = vpop.permute.xlu0 %1081
    %vm1084 = vcmask 261126
    %1085 = vst.msk [vmem:[#allocation2] sm:$0xc0] %vm1084, %v1082
    %1087 = vrot.lane.b32.xlu0 %v1079, 64
    %v1088 = vpop.permute.xlu0 %1087
    %vm1090 = vcmask 517376
    %1091 = vst.msk [vmem:[#allocation2 + $0x8] sm:$0x3] %vm1090, %v1088
    %v1092 = vrot.slane %v1079, 2
    %1093 = vrot.lane.b32.xlu0 %v1092, 64
    %v1094 = vpop.permute.xlu0 %1093
    %v1096 = vsel %vm637, %v1082, %v1094
    %v1098 = vrot.slane %v1096, 6
    %v1099 = vsel %vm431, %v1098, 0
    %1101 = vmatprep.subr.mxu0 %v479
    %1102 = vmatpush1.msra.mxu0 %v478
    %1103 = vmatprep.subr.mxu0 %v481
    %1104 = vmatpush1.msra.mxu0 %v480
    %1105 = vmatprep.subr.mxu0 %v483
    %1106 = vmatpush1.msra.mxu0 %v482
    %1107 = vmatprep.subr.mxu0 %v485
    %1108 = vmatpush1.msra.mxu0 %v484
    %1109 = vmatprep.subr.mxu0 %v487
    %1110 = vmatpush1.msra.mxu0 %v486
    %1111 = vmatprep.subr.mxu0 %v489
    %1112 = vmatpush1.msra.mxu0 %v488
    %1113 = vmatprep.subr.mxu0 %v491
    %1114 = vmatpush1.msra.mxu0 %v490
    %1115 = vmatprep.subr.mxu0 %v493
    %1116 = vmatpush1.msra.mxu0 %v492
    %1117 = vmatprep.subr.mxu0 0.0
    %1118 = vmatpush1.msra.mxu0 0.0
    %1119 = vmatprep.subr.mxu0 0.0
    %1120 = vmatpush1.msra.mxu0 0.0
    %1121 = vmatprep.subr.mxu0 0.0
    %1122 = vmatpush1.msra.mxu0 0.0
    %1123 = vmatprep.subr.mxu0 0.0
    %1124 = vmatpush1.msra.mxu0 0.0
    %1125 = vmatprep.subr.mxu0 0.0
    %1126 = vmatpush1.msra.mxu0 0.0
    %1127 = vmatprep.subr.mxu0 0.0
    %1128 = vmatpush1.msra.mxu0 0.0
    %1129 = vmatprep.subr.mxu0 0.0
    %1130 = vmatpush1.msra.mxu0 0.0
    %1131 = vmatprep.subr.mxu0 0.0
    %1132 = vmatpush1.msra.mxu0 0.0
    %1133 = vmatprep.subr.mxu0 0.0
    %1134 = vmatpush1.msra.mxu0 0.0
    %1135 = vmatprep.subr.mxu0 0.0
    %1136 = vmatpush1.msra.mxu0 0.0
    %1137 = vmatprep.subr.mxu0 0.0
    %1138 = vmatpush1.msra.mxu0 0.0
    %1139 = vmatprep.subr.mxu0 0.0
    %1140 = vmatpush1.msra.mxu0 0.0
    %1141 = vmatprep.subr.mxu0 0.0
    %1142 = vmatpush1.msra.mxu0 0.0
    %1143 = vmatprep.subr.mxu0 0.0
    %1144 = vmatpush1.msra.mxu0 0.0
    %1145 = vmatprep.subr.mxu0 0.0
    %1146 = vmatpush1.msra.mxu0 0.0
    %1147 = vmatprep.subr.mxu0 0.0
    %1148 = vmatpush1.msra.mxu0 0.0
    %1149 = vmatprep.subr.mxu0 0.0
    %1150 = vmatpush1.msra.mxu0 0.0
    %1151 = vmatprep.subr.mxu0 0.0
    %1152 = vmatpush1.msra.mxu0 0.0
    %1153 = vmatprep.subr.mxu0 0.0
    %1154 = vmatpush1.msra.mxu0 0.0
    %1155 = vmatprep.subr.mxu0 0.0
    %1156 = vmatpush1.msra.mxu0 0.0
    %1157 = vmatprep.subr.mxu0 0.0
    %1158 = vmatpush1.msra.mxu0 0.0
    %1159 = vmatprep.subr.mxu0 0.0
    %1160 = vmatpush1.msra.mxu0 0.0
    %1161 = vmatprep.subr.mxu0 0.0
    %1162 = vmatpush1.msra.mxu0 0.0
    %1163 = vmatprep.subr.mxu0 0.0
    %1164 = vmatpush1.msra.mxu0 0.0
    %1165 = vmatprep.mubr.f32.mxu0 0.0
    %1166 = vmatmul.mubr.f32.gmra.mrb[0].mxu0 %v1099
    %v1167 = vpop.f32.mrb[0].mxu0
    %v1168 = vadd.f32 0.0, %v1167
    %v1169 = vpop.f32.mrb[0].mxu0
    %v1170 = vadd.f32 0.0, %v1169
    %1171 = vdwg.mxu0
    %v1172 = vadd.f32 %v474, %v1168
    %v1174 = vrot.slane %v1170, 2
    %v1176 = vadd.f32 %v472, %v1174
    %v1177 = vxor.u32 %v1172, 2147483648
    %v1178 = vmul.f32 %v1177, 1.442695
    %v1179 = vpow.pop %v1178
    %v1180 = vadd.f32 %v1179, 1.0
    %v1181 = vrcp.pop %v1180
    %v1182 = vmul.f32 1.0, %v1181
    %v1183 = vtanh.pop %v1172
    %v1185 = vrot.slane %v1046, 6
    %v1187 = vmul.f32 %v1182, %v1185
    %1189 = vrot.lane.b32.xlu0 %v1183, 64
    %v1190 = vpop.permute.xlu0 %1189
    %v1192 = vmul.f32 %v1182, %v1190
    %1194 = vrot.lane.b32.xlu0 %v1192, 32
    %v1195 = vpop.permute.xlu0 %1194
    %v1197 = vadd.f32 %v1187, %v1195
    %v1198 = vtanh.pop %v1197
    %1200 = vrot.lane.b32.xlu0 %v1198, 64
    %v1201 = vpop.permute.xlu0 %1200
    %v1203 = vmul.f32 %v1182, %v1201
    %v1204 = vxor.u32 %v1176, 2147483648
    %v1205 = vmul.f32 %v1204, 1.442695
    %v1206 = vpow.pop %v1205
    %v1207 = vadd.f32 %v1206, 1.0
    %v1208 = vrcp.pop %v1207
    %v1209 = vmul.f32 1.0, %v1208
    %v1210 = vtanh.pop %v1176
    %v1212 = vrot.slane %v1073, 2
    %v1214 = vmul.f32 %v1209, %v1212
    %1216 = vrot.lane.b32.xlu0 %v1210, 64
    %v1217 = vpop.permute.xlu0 %1216
    %v1219 = vmul.f32 %v1209, %v1217
    %1221 = vrot.lane.b32.xlu0 %v1219, 32
    %v1222 = vpop.permute.xlu0 %1221
    %v1224 = vadd.f32 %v1214, %v1222
    %v1225 = vtanh.pop %v1224
    %1227 = vrot.lane.b32.xlu0 %v1225, 64
    %v1228 = vpop.permute.xlu0 %1227
    %v1230 = vmul.f32 %v1209, %v1228
    %1232 = vrot.lane.b32.xlu0 %v1203, 32
    %v1233 = vpop.permute.xlu0 %1232
    %1235 = vst.msk [vmem:[#allocation2 + $0x8] sm:$0x3] %vm625, %v1233
    %1237 = vrot.lane.b32.xlu0 %v1230, 64
    %v1238 = vpop.permute.xlu0 %1237
    %1240 = vst.msk [vmem:[#allocation2] sm:$0xc0] %vm631, %v1238
    %v1241 = vrot.slane %v1230, 6
    %1242 = vrot.lane.b32.xlu0 %v1241, 64
    %v1243 = vpop.permute.xlu0 %1242
    %v1245 = vsel %vm637, %v1233, %v1243
    %v1247 = vsel %vm431, %v1245, 0
    %1249 = vmatprep.subr.mxu0 %v479
    %1250 = vmatpush1.msra.mxu0 %v478
    %1251 = vmatprep.subr.mxu0 %v481
    %1252 = vmatpush1.msra.mxu0 %v480
    %1253 = vmatprep.subr.mxu0 %v483
    %1254 = vmatpush1.msra.mxu0 %v482
    %1255 = vmatprep.subr.mxu0 %v485
    %1256 = vmatpush1.msra.mxu0 %v484
    %1257 = vmatprep.subr.mxu0 %v487
    %1258 = vmatpush1.msra.mxu0 %v486
    %1259 = vmatprep.subr.mxu0 %v489
    %1260 = vmatpush1.msra.mxu0 %v488
    %1261 = vmatprep.subr.mxu0 %v491
    %1262 = vmatpush1.msra.mxu0 %v490
    %1263 = vmatprep.subr.mxu0 %v493
    %1264 = vmatpush1.msra.mxu0 %v492
    %1265 = vmatprep.subr.mxu0 0.0
    %1266 = vmatpush1.msra.mxu0 0.0
    %1267 = vmatprep.subr.mxu0 0.0
    %1268 = vmatpush1.msra.mxu0 0.0
    %1269 = vmatprep.subr.mxu0 0.0
    %1270 = vmatpush1.msra.mxu0 0.0
    %1271 = vmatprep.subr.mxu0 0.0
    %1272 = vmatpush1.msra.mxu0 0.0
    %1273 = vmatprep.subr.mxu0 0.0
    %1274 = vmatpush1.msra.mxu0 0.0
    %1275 = vmatprep.subr.mxu0 0.0
    %1276 = vmatpush1.msra.mxu0 0.0
    %1277 = vmatprep.subr.mxu0 0.0
    %1278 = vmatpush1.msra.mxu0 0.0
    %1279 = vmatprep.subr.mxu0 0.0
    %1280 = vmatpush1.msra.mxu0 0.0
    %1281 = vmatprep.subr.mxu0 0.0
    %1282 = vmatpush1.msra.mxu0 0.0
    %1283 = vmatprep.subr.mxu0 0.0
    %1284 = vmatpush1.msra.mxu0 0.0
    %1285 = vmatprep.subr.mxu0 0.0
    %1286 = vmatpush1.msra.mxu0 0.0
    %1287 = vmatprep.subr.mxu0 0.0
    %1288 = vmatpush1.msra.mxu0 0.0
    %1289 = vmatprep.subr.mxu0 0.0
    %1290 = vmatpush1.msra.mxu0 0.0
    %1291 = vmatprep.subr.mxu0 0.0
    %1292 = vmatpush1.msra.mxu0 0.0
    %1293 = vmatprep.subr.mxu0 0.0
    %1294 = vmatpush1.msra.mxu0 0.0
    %1295 = vmatprep.subr.mxu0 0.0
    %1296 = vmatpush1.msra.mxu0 0.0
    %1297 = vmatprep.subr.mxu0 0.0
    %1298 = vmatpush1.msra.mxu0 0.0
    %1299 = vmatprep.subr.mxu0 0.0
    %1300 = vmatpush1.msra.mxu0 0.0
    %1301 = vmatprep.subr.mxu0 0.0
    %1302 = vmatpush1.msra.mxu0 0.0
    %1303 = vmatprep.subr.mxu0 0.0
    %1304 = vmatpush1.msra.mxu0 0.0
    %1305 = vmatprep.subr.mxu0 0.0
    %1306 = vmatpush1.msra.mxu0 0.0
    %1307 = vmatprep.subr.mxu0 0.0
    %1308 = vmatpush1.msra.mxu0 0.0
    %1309 = vmatprep.subr.mxu0 0.0
    %1310 = vmatpush1.msra.mxu0 0.0
    %1311 = vmatprep.subr.mxu0 0.0
    %1312 = vmatpush1.msra.mxu0 0.0
    %1313 = vmatprep.mubr.f32.mxu0 0.0
    %1314 = vmatmul.mubr.f32.gmra.mrb[0].mxu0 %v1247
    %v1315 = vpop.f32.mrb[0].mxu0
    %v1316 = vadd.f32 0.0, %v1315
    %v1317 = vpop.f32.mrb[0].mxu0
    %v1318 = vadd.f32 0.0, %v1317
    %1319 = vdwg.mxu0
    %v1321 = vrot.slane %v1316, 6
    %v1323 = vadd.f32 %v474, %v1321
    %v1325 = vrot.slane %v1318, 4
    %v1327 = vadd.f32 %v472, %v1325
    %v1328 = vxor.u32 %v1323, 2147483648
    %v1329 = vmul.f32 %v1328, 1.442695
    %v1330 = vpow.pop %v1329
    %v1331 = vadd.f32 %v1330, 1.0
    %v1332 = vrcp.pop %v1331
    %v1333 = vmul.f32 1.0, %v1332
    %v1334 = vtanh.pop %v1323
    %v1336 = vrot.slane %v1197, 6
    %v1338 = vmul.f32 %v1333, %v1336
    %1340 = vrot.lane.b32.xlu0 %v1334, 64
    %v1341 = vpop.permute.xlu0 %1340
    %v1343 = vmul.f32 %v1333, %v1341
    %1345 = vrot.lane.b32.xlu0 %v1343, 32
    %v1346 = vpop.permute.xlu0 %1345
    %v1348 = vadd.f32 %v1338, %v1346
    %v1349 = vtanh.pop %v1348
    %1351 = vrot.lane.b32.xlu0 %v1349, 64
    %v1352 = vpop.permute.xlu0 %1351
    %v1354 = vmul.f32 %v1333, %v1352
    %v1355 = vxor.u32 %v1327, 2147483648
    %v1356 = vmul.f32 %v1355, 1.442695
    %v1357 = vpow.pop %v1356
    %v1358 = vadd.f32 %v1357, 1.0
    %v1359 = vrcp.pop %v1358
    %v1360 = vmul.f32 1.0, %v1359
    %v1361 = vtanh.pop %v1327
    %v1363 = vrot.slane %v1224, 2
    %v1365 = vmul.f32 %v1360, %v1363
    %1367 = vrot.lane.b32.xlu0 %v1361, 64
    %v1368 = vpop.permute.xlu0 %1367
    %v1370 = vmul.f32 %v1360, %v1368
    %1372 = vrot.lane.b32.xlu0 %v1370, 32
    %v1373 = vpop.permute.xlu0 %1372
    %v1375 = vadd.f32 %v1365, %v1373
    %v1376 = vtanh.pop %v1375
    %1378 = vrot.lane.b32.xlu0 %v1376, 64
    %v1379 = vpop.permute.xlu0 %1378
    %v1381 = vmul.f32 %v1360, %v1379
    %1383 = vrot.lane.b32.xlu0 %v1354, 32
    %v1384 = vpop.permute.xlu0 %1383
    %1386 = vst.msk [vmem:[#allocation2 + $0x8] sm:$0xc] %vm779, %v1384
    %1388 = vrot.lane.b32.xlu0 %v1381, 64
    %v1389 = vpop.permute.xlu0 %1388
    %1391 = vst.msk [vmem:[#allocation2] sm:$0x30] %vm785, %v1389
    %v1392 = vrot.slane %v1381, 2
    %1393 = vrot.lane.b32.xlu0 %v1392, 64
    %v1394 = vpop.permute.xlu0 %1393
    %v1396 = vsel %vm637, %v1384, %v1394
    %v1398 = vrot.slane %v1396, 2
    %v1399 = vsel %vm431, %v1398, 0
    %1401 = vmatprep.subr.mxu0 %v479
    %1402 = vmatpush1.msra.mxu0 %v478
    %1403 = vmatprep.subr.mxu0 %v481
    %1404 = vmatpush1.msra.mxu0 %v480
    %1405 = vmatprep.subr.mxu0 %v483
    %1406 = vmatpush1.msra.mxu0 %v482
    %1407 = vmatprep.subr.mxu0 %v485
    %1408 = vmatpush1.msra.mxu0 %v484
    %1409 = vmatprep.subr.mxu0 %v487
    %1410 = vmatpush1.msra.mxu0 %v486
    %1411 = vmatprep.subr.mxu0 %v489
    %1412 = vmatpush1.msra.mxu0 %v488
    %1413 = vmatprep.subr.mxu0 %v491
    %1414 = vmatpush1.msra.mxu0 %v490
    %1415 = vmatprep.subr.mxu0 %v493
    %1416 = vmatpush1.msra.mxu0 %v492
    %1417 = vmatprep.subr.mxu0 0.0
    %1418 = vmatpush1.msra.mxu0 0.0
    %1419 = vmatprep.subr.mxu0 0.0
    %1420 = vmatpush1.msra.mxu0 0.0
    %1421 = vmatprep.subr.mxu0 0.0
    %1422 = vmatpush1.msra.mxu0 0.0
    %1423 = vmatprep.subr.mxu0 0.0
    %1424 = vmatpush1.msra.mxu0 0.0
    %1425 = vmatprep.subr.mxu0 0.0
    %1426 = vmatpush1.msra.mxu0 0.0
    %1427 = vmatprep.subr.mxu0 0.0
    %1428 = vmatpush1.msra.mxu0 0.0
    %1429 = vmatprep.subr.mxu0 0.0
    %1430 = vmatpush1.msra.mxu0 0.0
    %1431 = vmatprep.subr.mxu0 0.0
    %1432 = vmatpush1.msra.mxu0 0.0
    %1433 = vmatprep.subr.mxu0 0.0
    %1434 = vmatpush1.msra.mxu0 0.0
    %1435 = vmatprep.subr.mxu0 0.0
    %1436 = vmatpush1.msra.mxu0 0.0
    %1437 = vmatprep.subr.mxu0 0.0
    %1438 = vmatpush1.msra.mxu0 0.0
    %1439 = vmatprep.subr.mxu0 0.0
    %1440 = vmatpush1.msra.mxu0 0.0
    %1441 = vmatprep.subr.mxu0 0.0
    %1442 = vmatpush1.msra.mxu0 0.0
    %1443 = vmatprep.subr.mxu0 0.0
    %1444 = vmatpush1.msra.mxu0 0.0
    %1445 = vmatprep.subr.mxu0 0.0
    %1446 = vmatpush1.msra.mxu0 0.0
    %1447 = vmatprep.subr.mxu0 0.0
    %1448 = vmatpush1.msra.mxu0 0.0
    %1449 = vmatprep.subr.mxu0 0.0
    %1450 = vmatpush1.msra.mxu0 0.0
    %1451 = vmatprep.subr.mxu0 0.0
    %1452 = vmatpush1.msra.mxu0 0.0
    %1453 = vmatprep.subr.mxu0 0.0
    %1454 = vmatpush1.msra.mxu0 0.0
    %1455 = vmatprep.subr.mxu0 0.0
    %1456 = vmatpush1.msra.mxu0 0.0
    %1457 = vmatprep.subr.mxu0 0.0
    %1458 = vmatpush1.msra.mxu0 0.0
    %1459 = vmatprep.subr.mxu0 0.0
    %1460 = vmatpush1.msra.mxu0 0.0
    %1461 = vmatprep.subr.mxu0 0.0
    %1462 = vmatpush1.msra.mxu0 0.0
    %1463 = vmatprep.subr.mxu0 0.0
    %1464 = vmatpush1.msra.mxu0 0.0
    %1465 = vmatprep.mubr.f32.mxu0 0.0
    %1466 = vmatmul.mubr.f32.gmra.mrb[0].mxu0 %v1399
    %v1467 = vpop.f32.mrb[0].mxu0
    %v1468 = vadd.f32 0.0, %v1467
    %v1469 = vpop.f32.mrb[0].mxu0
    %v1470 = vadd.f32 0.0, %v1469
    %1471 = vdwg.mxu0
    %v1473 = vrot.slane %v1468, 4
    %v1475 = vadd.f32 %v474, %v1473
    %v1477 = vrot.slane %v1470, 6
    %v1479 = vadd.f32 %v472, %v1477
    %v1480 = vxor.u32 %v1475, 2147483648
    %v1481 = vmul.f32 %v1480, 1.442695
    %v1482 = vpow.pop %v1481
    %v1483 = vadd.f32 %v1482, 1.0
    %v1484 = vrcp.pop %v1483
    %v1485 = vmul.f32 1.0, %v1484
    %v1486 = vtanh.pop %v1475
    %v1488 = vrot.slane %v1348, 6
    %v1490 = vmul.f32 %v1485, %v1488
    %1492 = vrot.lane.b32.xlu0 %v1486, 64
    %v1493 = vpop.permute.xlu0 %1492
    %v1495 = vmul.f32 %v1485, %v1493
    %1497 = vrot.lane.b32.xlu0 %v1495, 32
    %v1498 = vpop.permute.xlu0 %1497
    %v1500 = vadd.f32 %v1490, %v1498
    %v1501 = vtanh.pop %v1500
    %1503 = vrot.lane.b32.xlu0 %v1501, 64
    %v1504 = vpop.permute.xlu0 %1503
    %v1506 = vmul.f32 %v1485, %v1504
    %v1507 = vxor.u32 %v1479, 2147483648
    %v1508 = vmul.f32 %v1507, 1.442695
    %v1509 = vpow.pop %v1508
    %v1510 = vadd.f32 %v1509, 1.0
    %v1511 = vrcp.pop %v1510
    %v1512 = vmul.f32 1.0, %v1511
    %v1513 = vtanh.pop %v1479
    %v1515 = vrot.slane %v1375, 2
    %v1517 = vmul.f32 %v1512, %v1515
    %1519 = vrot.lane.b32.xlu0 %v1513, 64
    %v1520 = vpop.permute.xlu0 %1519
    %v1522 = vmul.f32 %v1512, %v1520
    %1524 = vrot.lane.b32.xlu0 %v1522, 32
    %v1525 = vpop.permute.xlu0 %1524
    %v1527 = vadd.f32 %v1517, %v1525
    %v1528 = vtanh.pop %v1527
    %1530 = vrot.lane.b32.xlu0 %v1528, 64
    %v1531 = vpop.permute.xlu0 %1530
    %v1533 = vmul.f32 %v1512, %v1531
    %1535 = vrot.lane.b32.xlu0 %v1506, 32
    %v1536 = vpop.permute.xlu0 %1535
    %1538 = vst.msk [vmem:[#allocation2 + $0x8] sm:$0x30] %vm933, %v1536
    %1540 = vrot.lane.b32.xlu0 %v1533, 64
    %v1541 = vpop.permute.xlu0 %1540
    %1543 = vst.msk [vmem:[#allocation2] sm:$0xc] %vm939, %v1541
    %v1544 = vrot.slane %v1533, 6
    %1545 = vrot.lane.b32.xlu0 %v1544, 64
    %v1546 = vpop.permute.xlu0 %1545
    %v1548 = vsel %vm637, %v1536, %v1546
    %v1550 = vrot.slane %v1548, 4
    %v1551 = vsel %vm431, %v1550, 0
    %1553 = vmatprep.subr.mxu0 %v479
    %1554 = vmatpush1.msra.mxu0 %v478
    %1555 = vmatprep.subr.mxu0 %v481
    %1556 = vmatpush1.msra.mxu0 %v480
    %1557 = vmatprep.subr.mxu0 %v483
    %1558 = vmatpush1.msra.mxu0 %v482
    %1559 = vmatprep.subr.mxu0 %v485
    %1560 = vmatpush1.msra.mxu0 %v484
    %1561 = vmatprep.subr.mxu0 %v487
    %1562 = vmatpush1.msra.mxu0 %v486
    %1563 = vmatprep.subr.mxu0 %v489
    %1564 = vmatpush1.msra.mxu0 %v488
    %1565 = vmatprep.subr.mxu0 %v491
    %1566 = vmatpush1.msra.mxu0 %v490
    %1567 = vmatprep.subr.mxu0 %v493
    %1568 = vmatpush1.msra.mxu0 %v492
    %1569 = vmatprep.subr.mxu0 0.0
    %1570 = vmatpush1.msra.mxu0 0.0
    %1571 = vmatprep.subr.mxu0 0.0
    %1572 = vmatpush1.msra.mxu0 0.0
    %1573 = vmatprep.subr.mxu0 0.0
    %1574 = vmatpush1.msra.mxu0 0.0
    %1575 = vmatprep.subr.mxu0 0.0
    %1576 = vmatpush1.msra.mxu0 0.0
    %1577 = vmatprep.subr.mxu0 0.0
    %1578 = vmatpush1.msra.mxu0 0.0
    %1579 = vmatprep.subr.mxu0 0.0
    %1580 = vmatpush1.msra.mxu0 0.0
    %1581 = vmatprep.subr.mxu0 0.0
    %1582 = vmatpush1.msra.mxu0 0.0
    %1583 = vmatprep.subr.mxu0 0.0
    %1584 = vmatpush1.msra.mxu0 0.0
    %1585 = vmatprep.subr.mxu0 0.0
    %1586 = vmatpush1.msra.mxu0 0.0
    %1587 = vmatprep.subr.mxu0 0.0
    %1588 = vmatpush1.msra.mxu0 0.0
    %1589 = vmatprep.subr.mxu0 0.0
    %1590 = vmatpush1.msra.mxu0 0.0
    %1591 = vmatprep.subr.mxu0 0.0
    %1592 = vmatpush1.msra.mxu0 0.0
    %1593 = vmatprep.subr.mxu0 0.0
    %1594 = vmatpush1.msra.mxu0 0.0
    %1595 = vmatprep.subr.mxu0 0.0
    %1596 = vmatpush1.msra.mxu0 0.0
    %1597 = vmatprep.subr.mxu0 0.0
    %1598 = vmatpush1.msra.mxu0 0.0
    %1599 = vmatprep.subr.mxu0 0.0
    %1600 = vmatpush1.msra.mxu0 0.0
    %1601 = vmatprep.subr.mxu0 0.0
    %1602 = vmatpush1.msra.mxu0 0.0
    %1603 = vmatprep.subr.mxu0 0.0
    %1604 = vmatpush1.msra.mxu0 0.0
    %1605 = vmatprep.subr.mxu0 0.0
    %1606 = vmatpush1.msra.mxu0 0.0
    %1607 = vmatprep.subr.mxu0 0.0
    %1608 = vmatpush1.msra.mxu0 0.0
    %1609 = vmatprep.subr.mxu0 0.0
    %1610 = vmatpush1.msra.mxu0 0.0
    %1611 = vmatprep.subr.mxu0 0.0
    %1612 = vmatpush1.msra.mxu0 0.0
    %1613 = vmatprep.subr.mxu0 0.0
    %1614 = vmatpush1.msra.mxu0 0.0
    %1615 = vmatprep.subr.mxu0 0.0
    %1616 = vmatpush1.msra.mxu0 0.0
    %1617 = vmatprep.mubr.f32.mxu0 0.0
    %1618 = vmatmul.mubr.f32.gmra.mrb[0].mxu0 %v1551
    %v1619 = vpop.f32.mrb[0].mxu0
    %v1620 = vadd.f32 0.0, %v1619
    %v1621 = vpop.f32.mrb[0].mxu0
    %v1622 = vadd.f32 0.0, %v1621
    %1623 = vdwg.mxu0
    %v1625 = vrot.slane %v1620, 2
    %v1627 = vadd.f32 %v474, %v1625
    %v1628 = vadd.f32 %v472, %v1622
    %v1629 = vxor.u32 %v1627, 2147483648
    %v1630 = vmul.f32 %v1629, 1.442695
    %v1631 = vpow.pop %v1630
    %v1632 = vadd.f32 %v1631, 1.0
    %v1633 = vrcp.pop %v1632
    %v1634 = vmul.f32 1.0, %v1633
    %v1635 = vtanh.pop %v1627
    %v1637 = vrot.slane %v1500, 6
    %v1639 = vmul.f32 %v1634, %v1637
    %1641 = vrot.lane.b32.xlu0 %v1635, 64
    %v1642 = vpop.permute.xlu0 %1641
    %v1644 = vmul.f32 %v1634, %v1642
    %1646 = vrot.lane.b32.xlu0 %v1644, 32
    %v1647 = vpop.permute.xlu0 %1646
    %v1649 = vadd.f32 %v1639, %v1647
    %v1650 = vtanh.pop %v1649
    %1652 = vrot.lane.b32.xlu0 %v1650, 64
    %v1653 = vpop.permute.xlu0 %1652
    %v1655 = vmul.f32 %v1634, %v1653
    %v1656 = vxor.u32 %v1628, 2147483648
    %v1657 = vmul.f32 %v1656, 1.442695
    %v1658 = vpow.pop %v1657
    %v1659 = vadd.f32 %v1658, 1.0
    %v1660 = vrcp.pop %v1659
    %v1661 = vmul.f32 1.0, %v1660
    %v1662 = vtanh.pop %v1628
    %v1664 = vrot.slane %v1527, 2
    %v1666 = vmul.f32 %v1661, %v1664
    %1668 = vrot.lane.b32.xlu0 %v1662, 64
    %v1669 = vpop.permute.xlu0 %1668
    %v1671 = vmul.f32 %v1661, %v1669
    %1673 = vrot.lane.b32.xlu0 %v1671, 32
    %v1674 = vpop.permute.xlu0 %1673
    %v1676 = vadd.f32 %v1666, %v1674
    %v1677 = vtanh.pop %v1676
    %1679 = vrot.lane.b32.xlu0 %v1677, 64
    %v1680 = vpop.permute.xlu0 %1679
    %v1682 = vmul.f32 %v1661, %v1680
    %1684 = vrot.lane.b32.xlu0 %v1655, 32
    %v1685 = vpop.permute.xlu0 %1684
    %1687 = vst.msk [vmem:[#allocation2 + $0x8] sm:$0xc0] %vm1084, %v1685
    %1689 = vrot.lane.b32.xlu0 %v1682, 64
    %v1690 = vpop.permute.xlu0 %1689
    %1692 = vst.msk [vmem:[#allocation2] sm:$0x3] %vm1090, %v1690
    %v1693 = vld [vmem:[#allocation2] sm:$0xff]
    %v1694 = vld [vmem:[#allocation2 + $0x8] sm:$0xff]
    %v1695 = vpack.c.bf16 %v1694, %v1693
    %v1696 = vld [vmem:[%s8] sm:$0xff]
    %v1697 = vld [vmem:[%s8 + $0x8] sm:$0xff]
    %v1698 = vld [vmem:[%s8 + $0x10] sm:$0xff]
    %v1699 = vld [vmem:[%s8 + $0x18] sm:$0xff]
    %v1700 = vld [vmem:[%s8 + $0x20] sm:$0xff]
    %v1701 = vld [vmem:[%s8 + $0x28] sm:$0xff]
    %v1702 = vld [vmem:[%s8 + $0x30] sm:$0xff]
    %v1703 = vld [vmem:[%s8 + $0x38] sm:$0xff]
    %v1704 = vld [vmem:[#allocation9] sm:$0x3]
    %v1706 = vlaneseq
    %v1707 = vshrl.u32 %v1706, 7
    %v1708 = vsub.s32 0, %v1707
    %v1709 = vrot.slane %v1704, %v1708
    %v1710 = vlaneseq
    %v1711 = vshrl.u32 %v1710, 7
    %v1712 = vsub.s32 1, %v1711
    %v1713 = vrot.slane %v1704, %v1712
    %v1724 = vunpack.c.l.b16 %v1696
    %v1725 = vunpack.c.h.b16 %v1696
    %v1726 = vunpack.c.l.b16 %v1697
    %v1727 = vunpack.c.h.b16 %v1697
    %v1728 = vunpack.c.l.b16 %v1698
    %v1729 = vunpack.c.h.b16 %v1698
    %v1730 = vunpack.c.l.b16 %v1699
    %v1731 = vunpack.c.h.b16 %v1699
    %v1732 = vunpack.c.l.b16 %v1700
    %v1733 = vunpack.c.h.b16 %v1700
    %v1734 = vunpack.c.l.b16 %v1701
    %v1735 = vunpack.c.h.b16 %v1701
    %v1736 = vunpack.c.l.b16 %v1702
    %v1737 = vunpack.c.h.b16 %v1702
    %v1738 = vunpack.c.l.b16 %v1703
    %v1739 = vunpack.c.h.b16 %v1703
    %v1740 = vpack.c.b16 %v1726, %v1724
    %v1741 = vpack.c.b16 %v1727, %v1725
    %v1742 = vpack.c.b16 %v1730, %v1728
    %v1743 = vpack.c.b16 %v1731, %v1729
    %v1744 = vpack.c.b16 %v1734, %v1732
    %v1745 = vpack.c.b16 %v1735, %v1733
    %v1746 = vpack.c.b16 %v1738, %v1736
    %v1747 = vpack.c.b16 %v1739, %v1737
    %v1757 = vsel %vm431, %v1695, 0
    %1759 = vmatprep.subr.bf16.mxu0 %v1741
    %1760 = vmatpush1.bf16.msra.mxu0 %v1740
    %1761 = vmatprep.subr.bf16.mxu0 %v1743
    %1762 = vmatpush1.bf16.msra.mxu0 %v1742
    %1763 = vmatprep.subr.bf16.mxu0 %v1745
    %1764 = vmatpush1.bf16.msra.mxu0 %v1744
    %1765 = vmatprep.subr.bf16.mxu0 %v1747
    %1766 = vmatpush1.bf16.msra.mxu0 %v1746
    %1767 = vmatprep.subr.bf16.mxu0 0
    %1768 = vmatpush1.bf16.msra.mxu0 0
    %1769 = vmatprep.subr.bf16.mxu0 0
    %1770 = vmatpush1.bf16.msra.mxu0 0
    %1771 = vmatprep.subr.bf16.mxu0 0
    %1772 = vmatpush1.bf16.msra.mxu0 0
    %1773 = vmatprep.subr.bf16.mxu0 0
    %1774 = vmatpush1.bf16.msra.mxu0 0
    %1775 = vmatprep.subr.bf16.mxu0 0
    %1776 = vmatpush1.bf16.msra.mxu0 0
    %1777 = vmatprep.subr.bf16.mxu0 0
    %1778 = vmatpush1.bf16.msra.mxu0 0
    %1779 = vmatprep.subr.bf16.mxu0 0
    %1780 = vmatpush1.bf16.msra.mxu0 0
    %1781 = vmatprep.subr.bf16.mxu0 0
    %1782 = vmatpush1.bf16.msra.mxu0 0
    %1783 = vmatprep.subr.bf16.mxu0 0
    %1784 = vmatpush1.bf16.msra.mxu0 0
    %1785 = vmatprep.subr.bf16.mxu0 0
    %1786 = vmatpush1.bf16.msra.mxu0 0
    %1787 = vmatprep.subr.bf16.mxu0 0
    %1788 = vmatpush1.bf16.msra.mxu0 0
    %1789 = vmatprep.subr.bf16.mxu0 0
    %1790 = vmatpush1.bf16.msra.mxu0 0
    %1791 = vmatprep.mubr.bf16.mxu0 0
    %1792 = vmatmul.mubr.bf16.gmra.mrb[0].mxu0 %v1757
    %v1793 = vpop.f32.mrb[0].mxu0
    %v1794 = vadd.f32 %v1709, %v1793
    %v1795 = vpop.f32.mrb[0].mxu0
    %v1796 = vpop.f32.mrb[0].mxu0
    %v1797 = vadd.f32 %v1709, %v1796
    %v1798 = vpop.f32.mrb[0].mxu0
    %v1799 = vadd.f32 %v1713, %v1798
    %1800 = vdwg.mxu0
    %v1801 = vld [vmem:[#allocation11] sm:$0xff]
    %v1802 = vld [vmem:[#allocation11 + $0x8] sm:$0xff]
    %v1803 = vld [vmem:[#allocation11 + $0x10] sm:$0xff]
    %v1804 = vld [vmem:[#allocation11 + $0x18] sm:$0xff]
    %v1805 = vsel %vm637, 0.0, 0
    %1807 = vmatprep.subr.mxu0 0.0
    %1808 = vmatpush1.msra.mxu0 %v1801
    %1809 = vmatprep.subr.mxu0 0.0
    %1810 = vmatpush1.msra.mxu0 %v1802
    %1811 = vmatprep.subr.mxu0 0.0
    %1812 = vmatpush1.msra.mxu0 %v1803
    %1813 = vmatprep.subr.mxu0 0.0
    %1814 = vmatpush1.msra.mxu0 %v1804
    %1815 = vmatprep.subr.mxu0 0.0
    %1816 = vmatpush1.msra.mxu0 0.0
    %1817 = vmatprep.subr.mxu0 0.0
    %1818 = vmatpush1.msra.mxu0 0.0
    %1819 = vmatprep.subr.mxu0 0.0
    %1820 = vmatpush1.msra.mxu0 0.0
    %1821 = vmatprep.subr.mxu0 0.0
    %1822 = vmatpush1.msra.mxu0 0.0
    %1823 = vmatprep.subr.mxu0 0.0
    %1824 = vmatpush1.msra.mxu0 0.0
    %1825 = vmatprep.subr.mxu0 0.0
    %1826 = vmatpush1.msra.mxu0 0.0
    %1827 = vmatprep.subr.mxu0 0.0
    %1828 = vmatpush1.msra.mxu0 0.0
    %1829 = vmatprep.subr.mxu0 0.0
    %1830 = vmatpush1.msra.mxu0 0.0
    %1831 = vmatprep.subr.mxu0 0.0
    %1832 = vmatpush1.msra.mxu0 0.0
    %1833 = vmatprep.subr.mxu0 0.0
    %1834 = vmatpush1.msra.mxu0 0.0
    %1835 = vmatprep.subr.mxu0 0.0
    %1836 = vmatpush1.msra.mxu0 0.0
    %1837 = vmatprep.subr.mxu0 0.0
    %1838 = vmatpush1.msra.mxu0 0.0
    %1839 = vmatprep.subr.mxu0 0.0
    %1840 = vmatpush1.msra.mxu0 0.0
    %1841 = vmatprep.subr.mxu0 0.0
    %1842 = vmatpush1.msra.mxu0 0.0
    %1843 = vmatprep.subr.mxu0 0.0
    %1844 = vmatpush1.msra.mxu0 0.0
    %1845 = vmatprep.subr.mxu0 0.0
    %1846 = vmatpush1.msra.mxu0 0.0
    %1847 = vmatprep.subr.mxu0 0.0
    %1848 = vmatpush1.msra.mxu0 0.0
    %1849 = vmatprep.subr.mxu0 0.0
    %1850 = vmatpush1.msra.mxu0 0.0
    %1851 = vmatprep.subr.mxu0 0.0
    %1852 = vmatpush1.msra.mxu0 0.0
    %1853 = vmatprep.subr.mxu0 0.0
    %1854 = vmatpush1.msra.mxu0 0.0
    %1855 = vmatprep.subr.mxu0 0.0
    %1856 = vmatpush1.msra.mxu0 0.0
    %1857 = vmatprep.subr.mxu0 0.0
    %1858 = vmatpush1.msra.mxu0 0.0
    %1859 = vmatprep.subr.mxu0 0.0
    %1860 = vmatpush1.msra.mxu0 0.0
    %1861 = vmatprep.subr.mxu0 0.0
    %1862 = vmatpush1.msra.mxu0 0.0
    %1863 = vmatprep.subr.mxu0 0.0
    %1864 = vmatpush1.msra.mxu0 0.0
    %1865 = vmatprep.subr.mxu0 0.0
    %1866 = vmatpush1.msra.mxu0 0.0
    %1867 = vmatprep.subr.mxu0 0.0
    %1868 = vmatpush1.msra.mxu0 0.0
    %1869 = vmatprep.subr.mxu0 0.0
    %1870 = vmatpush1.msra.mxu0 0.0
    %1871 = vmatprep.mubr.f32.mxu0 0.0
    %1872 = vmatmul.mubr.f32.gmra.mrb[0].mxu0 %v1805
    %v1873 = vpop.f32.mrb[0].mxu0
    %v1874 = vadd.f32 0.0, %v1873
    %v1875 = vpop.f32.mrb[0].mxu0
    %1876 = vdwg.mxu0
    %v1877 = vadd.f32 %v1794, %v1874
    %v1878 = vxor.u32 %v1877, 2147483648
    %v1879 = vmul.f32 %v1878, 1.442695
    %v1880 = vpow.pop %v1879
    %v1881 = vadd.f32 %v1880, 1.0
    %v1882 = vrcp.pop %v1881
    %v1883 = vmul.f32 1.0, %v1882
    %v1884 = vtanh.pop %v1877
    %v1885 = vmul.f32 %v1883, 0.0
    %1887 = vrot.lane.b32.xlu0 %v1884, 64
    %v1888 = vpop.permute.xlu0 %1887
    %v1890 = vmul.f32 %v1883, %v1888
    %1892 = vrot.lane.b32.xlu0 %v1890, 32
    %v1893 = vpop.permute.xlu0 %1892
    %v1895 = vadd.f32 %v1885, %v1893
    %v1896 = vtanh.pop %v1895
    %1898 = vrot.lane.b32.xlu0 %v1896, 64
    %v1899 = vpop.permute.xlu0 %1898
    %v1901 = vmul.f32 %v1883, %v1899
    %1903 = vrot.lane.b32.xlu0 %v1901, 32
    %v1904 = vpop.permute.xlu0 %1903
    %v1905 = vsel %vm637, %v1904, 0
    %1907 = vmatprep.subr.mxu0 0.0
    %1908 = vmatpush1.msra.mxu0 %v1801
    %1909 = vmatprep.subr.mxu0 0.0
    %1910 = vmatpush1.msra.mxu0 %v1802
    %1911 = vmatprep.subr.mxu0 0.0
    %1912 = vmatpush1.msra.mxu0 %v1803
    %1913 = vmatprep.subr.mxu0 0.0
    %1914 = vmatpush1.msra.mxu0 %v1804
    %1915 = vmatprep.subr.mxu0 0.0
    %1916 = vmatpush1.msra.mxu0 0.0
    %1917 = vmatprep.subr.mxu0 0.0
    %1918 = vmatpush1.msra.mxu0 0.0
    %1919 = vmatprep.subr.mxu0 0.0
    %1920 = vmatpush1.msra.mxu0 0.0
    %1921 = vmatprep.subr.mxu0 0.0
    %1922 = vmatpush1.msra.mxu0 0.0
    %1923 = vmatprep.subr.mxu0 0.0
    %1924 = vmatpush1.msra.mxu0 0.0
    %1925 = vmatprep.subr.mxu0 0.0
    %1926 = vmatpush1.msra.mxu0 0.0
    %1927 = vmatprep.subr.mxu0 0.0
    %1928 = vmatpush1.msra.mxu0 0.0
    %1929 = vmatprep.subr.mxu0 0.0
    %1930 = vmatpush1.msra.mxu0 0.0
    %1931 = vmatprep.subr.mxu0 0.0
    %1932 = vmatpush1.msra.mxu0 0.0
    %1933 = vmatprep.subr.mxu0 0.0
    %1934 = vmatpush1.msra.mxu0 0.0
    %1935 = vmatprep.subr.mxu0 0.0
    %1936 = vmatpush1.msra.mxu0 0.0
    %1937 = vmatprep.subr.mxu0 0.0
    %1938 = vmatpush1.msra.mxu0 0.0
    %1939 = vmatprep.subr.mxu0 0.0
    %1940 = vmatpush1.msra.mxu0 0.0
    %1941 = vmatprep.subr.mxu0 0.0
    %1942 = vmatpush1.msra.mxu0 0.0
    %1943 = vmatprep.subr.mxu0 0.0
    %1944 = vmatpush1.msra.mxu0 0.0
    %1945 = vmatprep.subr.mxu0 0.0
    %1946 = vmatpush1.msra.mxu0 0.0
    %1947 = vmatprep.subr.mxu0 0.0
    %1948 = vmatpush1.msra.mxu0 0.0
    %1949 = vmatprep.subr.mxu0 0.0
    %1950 = vmatpush1.msra.mxu0 0.0
    %1951 = vmatprep.subr.mxu0 0.0
    %1952 = vmatpush1.msra.mxu0 0.0
    %1953 = vmatprep.subr.mxu0 0.0
    %1954 = vmatpush1.msra.mxu0 0.0
    %1955 = vmatprep.subr.mxu0 0.0
    %1956 = vmatpush1.msra.mxu0 0.0
    %1957 = vmatprep.subr.mxu0 0.0
    %1958 = vmatpush1.msra.mxu0 0.0
    %1959 = vmatprep.subr.mxu0 0.0
    %1960 = vmatpush1.msra.mxu0 0.0
    %1961 = vmatprep.subr.mxu0 0.0
    %1962 = vmatpush1.msra.mxu0 0.0
    %1963 = vmatprep.subr.mxu0 0.0
    %1964 = vmatpush1.msra.mxu0 0.0
    %1965 = vmatprep.subr.mxu0 0.0
    %1966 = vmatpush1.msra.mxu0 0.0
    %1967 = vmatprep.subr.mxu0 0.0
    %1968 = vmatpush1.msra.mxu0 0.0
    %1969 = vmatprep.subr.mxu0 0.0
    %1970 = vmatpush1.msra.mxu0 0.0
    %1971 = vmatprep.mubr.f32.mxu0 0.0
    %1972 = vmatmul.mubr.f32.gmra.mrb[0].mxu0 %v1905
    %v1973 = vpop.f32.mrb[0].mxu0
    %v1974 = vadd.f32 0.0, %v1973
    %v1975 = vpop.f32.mrb[0].mxu0
    %1976 = vdwg.mxu0
    %v1978 = vrot.slane %v1974, 6
    %v1980 = vadd.f32 %v1794, %v1978
    %v1981 = vxor.u32 %v1980, 2147483648
    %v1982 = vmul.f32 %v1981, 1.442695
    %v1983 = vpow.pop %v1982
    %v1984 = vadd.f32 %v1983, 1.0
    %v1985 = vrcp.pop %v1984
    %v1986 = vmul.f32 1.0, %v1985
    %v1987 = vtanh.pop %v1980
    %v1989 = vrot.slane %v1895, 6
    %v1991 = vmul.f32 %v1986, %v1989
    %1993 = vrot.lane.b32.xlu0 %v1987, 64
    %v1994 = vpop.permute.xlu0 %1993
    %v1996 = vmul.f32 %v1986, %v1994
    %1998 = vrot.lane.b32.xlu0 %v1996, 32
    %v1999 = vpop.permute.xlu0 %1998
    %v2001 = vadd.f32 %v1991, %v1999
    %v2002 = vtanh.pop %v2001
    %2004 = vrot.lane.b32.xlu0 %v2002, 64
    %v2005 = vpop.permute.xlu0 %2004
    %v2007 = vmul.f32 %v1986, %v2005
    %v2009 = vrot.slane %v2007, 2
    %2010 = vrot.lane.b32.xlu0 %v2009, 32
    %v2011 = vpop.permute.xlu0 %2010
    %v2012 = vsel %vm637, %v2011, 0
    %2014 = vmatprep.subr.mxu0 0.0
    %2015 = vmatpush1.msra.mxu0 %v1801
    %2016 = vmatprep.subr.mxu0 0.0
    %2017 = vmatpush1.msra.mxu0 %v1802
    %2018 = vmatprep.subr.mxu0 0.0
    %2019 = vmatpush1.msra.mxu0 %v1803
    %2020 = vmatprep.subr.mxu0 0.0
    %2021 = vmatpush1.msra.mxu0 %v1804
    %2022 = vmatprep.subr.mxu0 0.0
    %2023 = vmatpush1.msra.mxu0 0.0
    %2024 = vmatprep.subr.mxu0 0.0
    %2025 = vmatpush1.msra.mxu0 0.0
    %2026 = vmatprep.subr.mxu0 0.0
    %2027 = vmatpush1.msra.mxu0 0.0
    %2028 = vmatprep.subr.mxu0 0.0
    %2029 = vmatpush1.msra.mxu0 0.0
    %2030 = vmatprep.subr.mxu0 0.0
    %2031 = vmatpush1.msra.mxu0 0.0
    %2032 = vmatprep.subr.mxu0 0.0
    %2033 = vmatpush1.msra.mxu0 0.0
    %2034 = vmatprep.subr.mxu0 0.0
    %2035 = vmatpush1.msra.mxu0 0.0
    %2036 = vmatprep.subr.mxu0 0.0
    %2037 = vmatpush1.msra.mxu0 0.0
    %2038 = vmatprep.subr.mxu0 0.0
    %2039 = vmatpush1.msra.mxu0 0.0
    %2040 = vmatprep.subr.mxu0 0.0
    %2041 = vmatpush1.msra.mxu0 0.0
    %2042 = vmatprep.subr.mxu0 0.0
    %2043 = vmatpush1.msra.mxu0 0.0
    %2044 = vmatprep.subr.mxu0 0.0
    %2045 = vmatpush1.msra.mxu0 0.0
    %2046 = vmatprep.subr.mxu0 0.0
    %2047 = vmatpush1.msra.mxu0 0.0
    %2048 = vmatprep.subr.mxu0 0.0
    %2049 = vmatpush1.msra.mxu0 0.0
    %2050 = vmatprep.subr.mxu0 0.0
    %2051 = vmatpush1.msra.mxu0 0.0
    %2052 = vmatprep.subr.mxu0 0.0
    %2053 = vmatpush1.msra.mxu0 0.0
    %2054 = vmatprep.subr.mxu0 0.0
    %2055 = vmatpush1.msra.mxu0 0.0
    %2056 = vmatprep.subr.mxu0 0.0
    %2057 = vmatpush1.msra.mxu0 0.0
    %2058 = vmatprep.subr.mxu0 0.0
    %2059 = vmatpush1.msra.mxu0 0.0
    %2060 = vmatprep.subr.mxu0 0.0
    %2061 = vmatpush1.msra.mxu0 0.0
    %2062 = vmatprep.subr.mxu0 0.0
    %2063 = vmatpush1.msra.mxu0 0.0
    %2064 = vmatprep.subr.mxu0 0.0
    %2065 = vmatpush1.msra.mxu0 0.0
    %2066 = vmatprep.subr.mxu0 0.0
    %2067 = vmatpush1.msra.mxu0 0.0
    %2068 = vmatprep.subr.mxu0 0.0
    %2069 = vmatpush1.msra.mxu0 0.0
    %2070 = vmatprep.subr.mxu0 0.0
    %2071 = vmatpush1.msra.mxu0 0.0
    %2072 = vmatprep.subr.mxu0 0.0
    %2073 = vmatpush1.msra.mxu0 0.0
    %2074 = vmatprep.subr.mxu0 0.0
    %2075 = vmatpush1.msra.mxu0 0.0
    %2076 = vmatprep.subr.mxu0 0.0
    %2077 = vmatpush1.msra.mxu0 0.0
    %2078 = vmatprep.mubr.f32.mxu0 0.0
    %2079 = vmatmul.mubr.f32.gmra.mrb[0].mxu0 %v2012
    %v2080 = vpop.f32.mrb[0].mxu0
    %v2081 = vadd.f32 0.0, %v2080
    %v2082 = vpop.f32.mrb[0].mxu0
    %2083 = vdwg.mxu0
    %v2085 = vrot.slane %v2081, 4
    %v2087 = vadd.f32 %v1794, %v2085
    %v2088 = vxor.u32 %v2087, 2147483648
    %v2089 = vmul.f32 %v2088, 1.442695
    %v2090 = vpow.pop %v2089
    %v2091 = vadd.f32 %v2090, 1.0
    %v2092 = vrcp.pop %v2091
    %v2093 = vmul.f32 1.0, %v2092
    %v2094 = vtanh.pop %v2087
    %v2096 = vrot.slane %v2001, 6
    %v2098 = vmul.f32 %v2093, %v2096
    %2100 = vrot.lane.b32.xlu0 %v2094, 64
    %v2101 = vpop.permute.xlu0 %2100
    %v2103 = vmul.f32 %v2093, %v2101
    %2105 = vrot.lane.b32.xlu0 %v2103, 32
    %v2106 = vpop.permute.xlu0 %2105
    %v2108 = vadd.f32 %v2098, %v2106
    %v2109 = vtanh.pop %v2108
    %2111 = vrot.lane.b32.xlu0 %v2109, 64
    %v2112 = vpop.permute.xlu0 %2111
    %v2114 = vmul.f32 %v2093, %v2112
    %v2116 = vrot.slane %v2114, 4
    %2117 = vrot.lane.b32.xlu0 %v2116, 32
    %v2118 = vpop.permute.xlu0 %2117
    %v2119 = vsel %vm637, %v2118, 0
    %2121 = vmatprep.subr.mxu0 0.0
    %2122 = vmatpush1.msra.mxu0 %v1801
    %2123 = vmatprep.subr.mxu0 0.0
    %2124 = vmatpush1.msra.mxu0 %v1802
    %2125 = vmatprep.subr.mxu0 0.0
    %2126 = vmatpush1.msra.mxu0 %v1803
    %2127 = vmatprep.subr.mxu0 0.0
    %2128 = vmatpush1.msra.mxu0 %v1804
    %2129 = vmatprep.subr.mxu0 0.0
    %2130 = vmatpush1.msra.mxu0 0.0
    %2131 = vmatprep.subr.mxu0 0.0
    %2132 = vmatpush1.msra.mxu0 0.0
    %2133 = vmatprep.subr.mxu0 0.0
    %2134 = vmatpush1.msra.mxu0 0.0
    %2135 = vmatprep.subr.mxu0 0.0
    %2136 = vmatpush1.msra.mxu0 0.0
    %2137 = vmatprep.subr.mxu0 0.0
    %2138 = vmatpush1.msra.mxu0 0.0
    %2139 = vmatprep.subr.mxu0 0.0
    %2140 = vmatpush1.msra.mxu0 0.0
    %2141 = vmatprep.subr.mxu0 0.0
    %2142 = vmatpush1.msra.mxu0 0.0
    %2143 = vmatprep.subr.mxu0 0.0
    %2144 = vmatpush1.msra.mxu0 0.0
    %2145 = vmatprep.subr.mxu0 0.0
    %2146 = vmatpush1.msra.mxu0 0.0
    %2147 = vmatprep.subr.mxu0 0.0
    %2148 = vmatpush1.msra.mxu0 0.0
    %2149 = vmatprep.subr.mxu0 0.0
    %2150 = vmatpush1.msra.mxu0 0.0
    %2151 = vmatprep.subr.mxu0 0.0
    %2152 = vmatpush1.msra.mxu0 0.0
    %2153 = vmatprep.subr.mxu0 0.0
    %2154 = vmatpush1.msra.mxu0 0.0
    %2155 = vmatprep.subr.mxu0 0.0
    %2156 = vmatpush1.msra.mxu0 0.0
    %2157 = vmatprep.subr.mxu0 0.0
    %2158 = vmatpush1.msra.mxu0 0.0
    %2159 = vmatprep.subr.mxu0 0.0
    %2160 = vmatpush1.msra.mxu0 0.0
    %2161 = vmatprep.subr.mxu0 0.0
    %2162 = vmatpush1.msra.mxu0 0.0
    %2163 = vmatprep.subr.mxu0 0.0
    %2164 = vmatpush1.msra.mxu0 0.0
    %2165 = vmatprep.subr.mxu0 0.0
    %2166 = vmatpush1.msra.mxu0 0.0
    %2167 = vmatprep.subr.mxu0 0.0
    %2168 = vmatpush1.msra.mxu0 0.0
    %2169 = vmatprep.subr.mxu0 0.0
    %2170 = vmatpush1.msra.mxu0 0.0
    %2171 = vmatprep.subr.mxu0 0.0
    %2172 = vmatpush1.msra.mxu0 0.0
    %2173 = vmatprep.subr.mxu0 0.0
    %2174 = vmatpush1.msra.mxu0 0.0
    %2175 = vmatprep.subr.mxu0 0.0
    %2176 = vmatpush1.msra.mxu0 0.0
    %2177 = vmatprep.subr.mxu0 0.0
    %2178 = vmatpush1.msra.mxu0 0.0
    %2179 = vmatprep.subr.mxu0 0.0
    %2180 = vmatpush1.msra.mxu0 0.0
    %2181 = vmatprep.subr.mxu0 0.0
    %2182 = vmatpush1.msra.mxu0 0.0
    %2183 = vmatprep.subr.mxu0 0.0
    %2184 = vmatpush1.msra.mxu0 0.0
    %2185 = vmatprep.mubr.f32.mxu0 0.0
    %2186 = vmatmul.mubr.f32.gmra.mrb[0].mxu0 %v2119
    %v2187 = vpop.f32.mrb[0].mxu0
    %v2188 = vadd.f32 0.0, %v2187
    %v2189 = vpop.f32.mrb[0].mxu0
    %2190 = vdwg.mxu0
    %v2192 = vrot.slane %v2188, 2
    %v2194 = vadd.f32 %v1794, %v2192
    %v2195 = vxor.u32 %v2194, 2147483648
    %v2196 = vmul.f32 %v2195, 1.442695
    %v2197 = vpow.pop %v2196
    %v2198 = vadd.f32 %v2197, 1.0
    %v2199 = vrcp.pop %v2198
    %v2200 = vmul.f32 1.0, %v2199
    %v2201 = vtanh.pop %v2194
    %v2203 = vrot.slane %v2108, 6
    %v2205 = vmul.f32 %v2200, %v2203
    %2207 = vrot.lane.b32.xlu0 %v2201, 64
    %v2208 = vpop.permute.xlu0 %2207
    %v2210 = vmul.f32 %v2200, %v2208
    %2212 = vrot.lane.b32.xlu0 %v2210, 32
    %v2213 = vpop.permute.xlu0 %2212
    %v2215 = vadd.f32 %v2205, %v2213
    %v2216 = vtanh.pop %v2215
    %2218 = vrot.lane.b32.xlu0 %v2216, 64
    %v2219 = vpop.permute.xlu0 %2218
    %v2221 = vmul.f32 %v2200, %v2219
    %v2223 = vrot.slane %v2221, 6
    %2224 = vrot.lane.b32.xlu0 %v2223, 32
    %v2225 = vpop.permute.xlu0 %2224
    %v2226 = vsel %vm637, %v2225, 0
    %2228 = vmatprep.subr.mxu0 0.0
    %2229 = vmatpush1.msra.mxu0 %v1801
    %2230 = vmatprep.subr.mxu0 0.0
    %2231 = vmatpush1.msra.mxu0 %v1802
    %2232 = vmatprep.subr.mxu0 0.0
    %2233 = vmatpush1.msra.mxu0 %v1803
    %2234 = vmatprep.subr.mxu0 0.0
    %2235 = vmatpush1.msra.mxu0 %v1804
    %2236 = vmatprep.subr.mxu0 0.0
    %2237 = vmatpush1.msra.mxu0 0.0
    %2238 = vmatprep.subr.mxu0 0.0
    %2239 = vmatpush1.msra.mxu0 0.0
    %2240 = vmatprep.subr.mxu0 0.0
    %2241 = vmatpush1.msra.mxu0 0.0
    %2242 = vmatprep.subr.mxu0 0.0
    %2243 = vmatpush1.msra.mxu0 0.0
    %2244 = vmatprep.subr.mxu0 0.0
    %2245 = vmatpush1.msra.mxu0 0.0
    %2246 = vmatprep.subr.mxu0 0.0
    %2247 = vmatpush1.msra.mxu0 0.0
    %2248 = vmatprep.subr.mxu0 0.0
    %2249 = vmatpush1.msra.mxu0 0.0
    %2250 = vmatprep.subr.mxu0 0.0
    %2251 = vmatpush1.msra.mxu0 0.0
    %2252 = vmatprep.subr.mxu0 0.0
    %2253 = vmatpush1.msra.mxu0 0.0
    %2254 = vmatprep.subr.mxu0 0.0
    %2255 = vmatpush1.msra.mxu0 0.0
    %2256 = vmatprep.subr.mxu0 0.0
    %2257 = vmatpush1.msra.mxu0 0.0
    %2258 = vmatprep.subr.mxu0 0.0
    %2259 = vmatpush1.msra.mxu0 0.0
    %2260 = vmatprep.subr.mxu0 0.0
    %2261 = vmatpush1.msra.mxu0 0.0
    %2262 = vmatprep.subr.mxu0 0.0
    %2263 = vmatpush1.msra.mxu0 0.0
    %2264 = vmatprep.subr.mxu0 0.0
    %2265 = vmatpush1.msra.mxu0 0.0
    %2266 = vmatprep.subr.mxu0 0.0
    %2267 = vmatpush1.msra.mxu0 0.0
    %2268 = vmatprep.subr.mxu0 0.0
    %2269 = vmatpush1.msra.mxu0 0.0
    %2270 = vmatprep.subr.mxu0 0.0
    %2271 = vmatpush1.msra.mxu0 0.0
    %2272 = vmatprep.subr.mxu0 0.0
    %2273 = vmatpush1.msra.mxu0 0.0
    %2274 = vmatprep.subr.mxu0 0.0
    %2275 = vmatpush1.msra.mxu0 0.0
    %2276 = vmatprep.subr.mxu0 0.0
    %2277 = vmatpush1.msra.mxu0 0.0
    %2278 = vmatprep.subr.mxu0 0.0
    %2279 = vmatpush1.msra.mxu0 0.0
    %2280 = vmatprep.subr.mxu0 0.0
    %2281 = vmatpush1.msra.mxu0 0.0
    %2282 = vmatprep.subr.mxu0 0.0
    %2283 = vmatpush1.msra.mxu0 0.0
    %2284 = vmatprep.subr.mxu0 0.0
    %2285 = vmatpush1.msra.mxu0 0.0
    %2286 = vmatprep.subr.mxu0 0.0
    %2287 = vmatpush1.msra.mxu0 0.0
    %2288 = vmatprep.subr.mxu0 0.0
    %2289 = vmatpush1.msra.mxu0 0.0
    %2290 = vmatprep.subr.mxu0 0.0
    %2291 = vmatpush1.msra.mxu0 0.0
    %2292 = vmatprep.mubr.f32.mxu0 0.0
    %2293 = vmatmul.mubr.f32.gmra.mrb[0].mxu0 %v2226
    %v2294 = vpop.f32.mrb[0].mxu0
    %v2295 = vadd.f32 0.0, %v2294
    %v2296 = vpop.f32.mrb[0].mxu0
    %2297 = vdwg.mxu0
    %v2298 = vadd.f32 %v1797, %v2295
    %v2299 = vxor.u32 %v2298, 2147483648
    %v2300 = vmul.f32 %v2299, 1.442695
    %v2301 = vpow.pop %v2300
    %v2302 = vadd.f32 %v2301, 1.0
    %v2303 = vrcp.pop %v2302
    %v2304 = vmul.f32 1.0, %v2303
    %v2305 = vtanh.pop %v2298
    %v2307 = vrot.slane %v2215, 6
    %v2309 = vmul.f32 %v2304, %v2307
    %2311 = vrot.lane.b32.xlu0 %v2305, 64
    %v2312 = vpop.permute.xlu0 %2311
    %v2314 = vmul.f32 %v2304, %v2312
    %2316 = vrot.lane.b32.xlu0 %v2314, 32
    %v2317 = vpop.permute.xlu0 %2316
    %v2319 = vadd.f32 %v2309, %v2317
    %v2320 = vtanh.pop %v2319
    %2322 = vrot.lane.b32.xlu0 %v2320, 64
    %v2323 = vpop.permute.xlu0 %2322
    %v2325 = vmul.f32 %v2304, %v2323
    %2327 = vrot.lane.b32.xlu0 %v2325, 32
    %v2328 = vpop.permute.xlu0 %2327
    %v2329 = vsel %vm637, %v2328, 0
    %2331 = vmatprep.subr.mxu0 0.0
    %2332 = vmatpush1.msra.mxu0 %v1801
    %2333 = vmatprep.subr.mxu0 0.0
    %2334 = vmatpush1.msra.mxu0 %v1802
    %2335 = vmatprep.subr.mxu0 0.0
    %2336 = vmatpush1.msra.mxu0 %v1803
    %2337 = vmatprep.subr.mxu0 0.0
    %2338 = vmatpush1.msra.mxu0 %v1804
    %2339 = vmatprep.subr.mxu0 0.0
    %2340 = vmatpush1.msra.mxu0 0.0
    %2341 = vmatprep.subr.mxu0 0.0
    %2342 = vmatpush1.msra.mxu0 0.0
    %2343 = vmatprep.subr.mxu0 0.0
    %2344 = vmatpush1.msra.mxu0 0.0
    %2345 = vmatprep.subr.mxu0 0.0
    %2346 = vmatpush1.msra.mxu0 0.0
    %2347 = vmatprep.subr.mxu0 0.0
    %2348 = vmatpush1.msra.mxu0 0.0
    %2349 = vmatprep.subr.mxu0 0.0
    %2350 = vmatpush1.msra.mxu0 0.0
    %2351 = vmatprep.subr.mxu0 0.0
    %2352 = vmatpush1.msra.mxu0 0.0
    %2353 = vmatprep.subr.mxu0 0.0
    %2354 = vmatpush1.msra.mxu0 0.0
    %2355 = vmatprep.subr.mxu0 0.0
    %2356 = vmatpush1.msra.mxu0 0.0
    %2357 = vmatprep.subr.mxu0 0.0
    %2358 = vmatpush1.msra.mxu0 0.0
    %2359 = vmatprep.subr.mxu0 0.0
    %2360 = vmatpush1.msra.mxu0 0.0
    %2361 = vmatprep.subr.mxu0 0.0
    %2362 = vmatpush1.msra.mxu0 0.0
    %2363 = vmatprep.subr.mxu0 0.0
    %2364 = vmatpush1.msra.mxu0 0.0
    %2365 = vmatprep.subr.mxu0 0.0
    %2366 = vmatpush1.msra.mxu0 0.0
    %2367 = vmatprep.subr.mxu0 0.0
    %2368 = vmatpush1.msra.mxu0 0.0
    %2369 = vmatprep.subr.mxu0 0.0
    %2370 = vmatpush1.msra.mxu0 0.0
    %2371 = vmatprep.subr.mxu0 0.0
    %2372 = vmatpush1.msra.mxu0 0.0
    %2373 = vmatprep.subr.mxu0 0.0
    %2374 = vmatpush1.msra.mxu0 0.0
    %2375 = vmatprep.subr.mxu0 0.0
    %2376 = vmatpush1.msra.mxu0 0.0
    %2377 = vmatprep.subr.mxu0 0.0
    %2378 = vmatpush1.msra.mxu0 0.0
    %2379 = vmatprep.subr.mxu0 0.0
    %2380 = vmatpush1.msra.mxu0 0.0
    %2381 = vmatprep.subr.mxu0 0.0
    %2382 = vmatpush1.msra.mxu0 0.0
    %2383 = vmatprep.subr.mxu0 0.0
    %2384 = vmatpush1.msra.mxu0 0.0
    %2385 = vmatprep.subr.mxu0 0.0
    %2386 = vmatpush1.msra.mxu0 0.0
    %2387 = vmatprep.subr.mxu0 0.0
    %2388 = vmatpush1.msra.mxu0 0.0
    %2389 = vmatprep.subr.mxu0 0.0
    %2390 = vmatpush1.msra.mxu0 0.0
    %2391 = vmatprep.subr.mxu0 0.0
    %2392 = vmatpush1.msra.mxu0 0.0
    %2393 = vmatprep.subr.mxu0 0.0
    %2394 = vmatpush1.msra.mxu0 0.0
    %2395 = vmatprep.mubr.f32.mxu0 0.0
    %2396 = vmatmul.mubr.f32.gmra.mrb[0].mxu0 %v2329
    %v2397 = vpop.f32.mrb[0].mxu0
    %v2398 = vadd.f32 0.0, %v2397
    %v2399 = vpop.f32.mrb[0].mxu0
    %2400 = vdwg.mxu0
    %v2402 = vrot.slane %v2398, 6
    %v2404 = vadd.f32 %v1797, %v2402
    %v2405 = vxor.u32 %v2404, 2147483648
    %v2406 = vmul.f32 %v2405, 1.442695
    %v2407 = vpow.pop %v2406
    %v2408 = vadd.f32 %v2407, 1.0
    %v2409 = vrcp.pop %v2408
    %v2410 = vmul.f32 1.0, %v2409
    %v2411 = vtanh.pop %v2404
    %v2413 = vrot.slane %v2319, 6
    %v2415 = vmul.f32 %v2410, %v2413
    %2417 = vrot.lane.b32.xlu0 %v2411, 64
    %v2418 = vpop.permute.xlu0 %2417
    %v2420 = vmul.f32 %v2410, %v2418
    %2422 = vrot.lane.b32.xlu0 %v2420, 32
    %v2423 = vpop.permute.xlu0 %2422
    %v2425 = vadd.f32 %v2415, %v2423
    %v2426 = vtanh.pop %v2425
    %2428 = vrot.lane.b32.xlu0 %v2426, 64
    %v2429 = vpop.permute.xlu0 %2428
    %v2431 = vmul.f32 %v2410, %v2429
    %v2433 = vrot.slane %v2431, 2
    %2434 = vrot.lane.b32.xlu0 %v2433, 32
    %v2435 = vpop.permute.xlu0 %2434
    %v2436 = vsel %vm637, %v2435, 0
    %2438 = vmatprep.subr.mxu0 0.0
    %2439 = vmatpush1.msra.mxu0 %v1801
    %2440 = vmatprep.subr.mxu0 0.0
    %2441 = vmatpush1.msra.mxu0 %v1802
    %2442 = vmatprep.subr.mxu0 0.0
    %2443 = vmatpush1.msra.mxu0 %v1803
    %2444 = vmatprep.subr.mxu0 0.0
    %2445 = vmatpush1.msra.mxu0 %v1804
    %2446 = vmatprep.subr.mxu0 0.0
    %2447 = vmatpush1.msra.mxu0 0.0
    %2448 = vmatprep.subr.mxu0 0.0
    %2449 = vmatpush1.msra.mxu0 0.0
    %2450 = vmatprep.subr.mxu0 0.0
    %2451 = vmatpush1.msra.mxu0 0.0
    %2452 = vmatprep.subr.mxu0 0.0
    %2453 = vmatpush1.msra.mxu0 0.0
    %2454 = vmatprep.subr.mxu0 0.0
    %2455 = vmatpush1.msra.mxu0 0.0
    %2456 = vmatprep.subr.mxu0 0.0
    %2457 = vmatpush1.msra.mxu0 0.0
    %2458 = vmatprep.subr.mxu0 0.0
    %2459 = vmatpush1.msra.mxu0 0.0
    %2460 = vmatprep.subr.mxu0 0.0
    %2461 = vmatpush1.msra.mxu0 0.0
    %2462 = vmatprep.subr.mxu0 0.0
    %2463 = vmatpush1.msra.mxu0 0.0
    %2464 = vmatprep.subr.mxu0 0.0
    %2465 = vmatpush1.msra.mxu0 0.0
    %2466 = vmatprep.subr.mxu0 0.0
    %2467 = vmatpush1.msra.mxu0 0.0
    %2468 = vmatprep.subr.mxu0 0.0
    %2469 = vmatpush1.msra.mxu0 0.0
    %2470 = vmatprep.subr.mxu0 0.0
    %2471 = vmatpush1.msra.mxu0 0.0
    %2472 = vmatprep.subr.mxu0 0.0
    %2473 = vmatpush1.msra.mxu0 0.0
    %2474 = vmatprep.subr.mxu0 0.0
    %2475 = vmatpush1.msra.mxu0 0.0
    %2476 = vmatprep.subr.mxu0 0.0
    %2477 = vmatpush1.msra.mxu0 0.0
    %2478 = vmatprep.subr.mxu0 0.0
    %2479 = vmatpush1.msra.mxu0 0.0
    %2480 = vmatprep.subr.mxu0 0.0
    %2481 = vmatpush1.msra.mxu0 0.0
    %2482 = vmatprep.subr.mxu0 0.0
    %2483 = vmatpush1.msra.mxu0 0.0
    %2484 = vmatprep.subr.mxu0 0.0
    %2485 = vmatpush1.msra.mxu0 0.0
    %2486 = vmatprep.subr.mxu0 0.0
    %2487 = vmatpush1.msra.mxu0 0.0
    %2488 = vmatprep.subr.mxu0 0.0
    %2489 = vmatpush1.msra.mxu0 0.0
    %2490 = vmatprep.subr.mxu0 0.0
    %2491 = vmatpush1.msra.mxu0 0.0
    %2492 = vmatprep.subr.mxu0 0.0
    %2493 = vmatpush1.msra.mxu0 0.0
    %2494 = vmatprep.subr.mxu0 0.0
    %2495 = vmatpush1.msra.mxu0 0.0
    %2496 = vmatprep.subr.mxu0 0.0
    %2497 = vmatpush1.msra.mxu0 0.0
    %2498 = vmatprep.subr.mxu0 0.0
    %2499 = vmatpush1.msra.mxu0 0.0
    %2500 = vmatprep.subr.mxu0 0.0
    %2501 = vmatpush1.msra.mxu0 0.0
    %2502 = vmatprep.mubr.f32.mxu0 0.0
    %2503 = vmatmul.mubr.f32.gmra.mrb[0].mxu0 %v2436
    %v2504 = vpop.f32.mrb[0].mxu0
    %v2505 = vadd.f32 0.0, %v2504
    %v2506 = vpop.f32.mrb[0].mxu0
    %2507 = vdwg.mxu0
    %v2509 = vrot.slane %v2505, 4
    %v2511 = vadd.f32 %v1797, %v2509
    %v2512 = vxor.u32 %v2511, 2147483648
    %v2513 = vmul.f32 %v2512, 1.442695
    %v2514 = vpow.pop %v2513
    %v2515 = vadd.f32 %v2514, 1.0
    %v2516 = vrcp.pop %v2515
    %v2517 = vmul.f32 1.0, %v2516
    %v2518 = vtanh.pop %v2511
    %v2520 = vrot.slane %v2425, 6
    %v2522 = vmul.f32 %v2517, %v2520
    %2524 = vrot.lane.b32.xlu0 %v2518, 64
    %v2525 = vpop.permute.xlu0 %2524
    %v2527 = vmul.f32 %v2517, %v2525
    %2529 = vrot.lane.b32.xlu0 %v2527, 32
    %v2530 = vpop.permute.xlu0 %2529
    %v2532 = vadd.f32 %v2522, %v2530
    %v2533 = vtanh.pop %v2532
    %2535 = vrot.lane.b32.xlu0 %v2533, 64
    %v2536 = vpop.permute.xlu0 %2535
    %v2538 = vmul.f32 %v2517, %v2536
    %v2540 = vrot.slane %v2538, 4
    %2541 = vrot.lane.b32.xlu0 %v2540, 32
    %v2542 = vpop.permute.xlu0 %2541
    %v2543 = vsel %vm637, %v2542, 0
    %2545 = vmatprep.subr.mxu0 0.0
    %2546 = vmatpush1.msra.mxu0 %v1801
    %2547 = vmatprep.subr.mxu0 0.0
    %2548 = vmatpush1.msra.mxu0 %v1802
    %2549 = vmatprep.subr.mxu0 0.0
    %2550 = vmatpush1.msra.mxu0 %v1803
    %2551 = vmatprep.subr.mxu0 0.0
    %2552 = vmatpush1.msra.mxu0 %v1804
    %2553 = vmatprep.subr.mxu0 0.0
    %2554 = vmatpush1.msra.mxu0 0.0
    %2555 = vmatprep.subr.mxu0 0.0
    %2556 = vmatpush1.msra.mxu0 0.0
    %2557 = vmatprep.subr.mxu0 0.0
    %2558 = vmatpush1.msra.mxu0 0.0
    %2559 = vmatprep.subr.mxu0 0.0
    %2560 = vmatpush1.msra.mxu0 0.0
    %2561 = vmatprep.subr.mxu0 0.0
    %2562 = vmatpush1.msra.mxu0 0.0
    %2563 = vmatprep.subr.mxu0 0.0
    %2564 = vmatpush1.msra.mxu0 0.0
    %2565 = vmatprep.subr.mxu0 0.0
    %2566 = vmatpush1.msra.mxu0 0.0
    %2567 = vmatprep.subr.mxu0 0.0
    %2568 = vmatpush1.msra.mxu0 0.0
    %2569 = vmatprep.subr.mxu0 0.0
    %2570 = vmatpush1.msra.mxu0 0.0
    %2571 = vmatprep.subr.mxu0 0.0
    %2572 = vmatpush1.msra.mxu0 0.0
    %2573 = vmatprep.subr.mxu0 0.0
    %2574 = vmatpush1.msra.mxu0 0.0
    %2575 = vmatprep.subr.mxu0 0.0
    %2576 = vmatpush1.msra.mxu0 0.0
    %2577 = vmatprep.subr.mxu0 0.0
    %2578 = vmatpush1.msra.mxu0 0.0
    %2579 = vmatprep.subr.mxu0 0.0
    %2580 = vmatpush1.msra.mxu0 0.0
    %2581 = vmatprep.subr.mxu0 0.0
    %2582 = vmatpush1.msra.mxu0 0.0
    %2583 = vmatprep.subr.mxu0 0.0
    %2584 = vmatpush1.msra.mxu0 0.0
    %2585 = vmatprep.subr.mxu0 0.0
    %2586 = vmatpush1.msra.mxu0 0.0
    %2587 = vmatprep.subr.mxu0 0.0
    %2588 = vmatpush1.msra.mxu0 0.0
    %2589 = vmatprep.subr.mxu0 0.0
    %2590 = vmatpush1.msra.mxu0 0.0
    %2591 = vmatprep.subr.mxu0 0.0
    %2592 = vmatpush1.msra.mxu0 0.0
    %2593 = vmatprep.subr.mxu0 0.0
    %2594 = vmatpush1.msra.mxu0 0.0
    %2595 = vmatprep.subr.mxu0 0.0
    %2596 = vmatpush1.msra.mxu0 0.0
    %2597 = vmatprep.subr.mxu0 0.0
    %2598 = vmatpush1.msra.mxu0 0.0
    %2599 = vmatprep.subr.mxu0 0.0
    %2600 = vmatpush1.msra.mxu0 0.0
    %2601 = vmatprep.subr.mxu0 0.0
    %2602 = vmatpush1.msra.mxu0 0.0
    %2603 = vmatprep.subr.mxu0 0.0
    %2604 = vmatpush1.msra.mxu0 0.0
    %2605 = vmatprep.subr.mxu0 0.0
    %2606 = vmatpush1.msra.mxu0 0.0
    %2607 = vmatprep.subr.mxu0 0.0
    %2608 = vmatpush1.msra.mxu0 0.0
    %2609 = vmatprep.mubr.f32.mxu0 0.0
    %2610 = vmatmul.mubr.f32.gmra.mrb[0].mxu0 %v2543
    %v2611 = vpop.f32.mrb[0].mxu0
    %v2612 = vadd.f32 0.0, %v2611
    %v2613 = vpop.f32.mrb[0].mxu0
    %2614 = vdwg.mxu0
    %v2616 = vrot.slane %v2612, 2
    %v2618 = vadd.f32 %v1797, %v2616
    %v2619 = vxor.u32 %v2618, 2147483648
    %v2620 = vmul.f32 %v2619, 1.442695
    %v2621 = vpow.pop %v2620
    %v2622 = vadd.f32 %v2621, 1.0
    %v2623 = vrcp.pop %v2622
    %v2624 = vmul.f32 1.0, %v2623
    %v2625 = vtanh.pop %v2618
    %v2627 = vrot.slane %v2532, 6
    %v2629 = vmul.f32 %v2624, %v2627
    %2631 = vrot.lane.b32.xlu0 %v2625, 64
    %v2632 = vpop.permute.xlu0 %2631
    %v2634 = vmul.f32 %v2624, %v2632
    %2636 = vrot.lane.b32.xlu0 %v2634, 32
    %v2637 = vpop.permute.xlu0 %2636
    %v2639 = vadd.f32 %v2629, %v2637
    %v2640 = vtanh.pop %v2639
    %2642 = vrot.lane.b32.xlu0 %v2640, 64
    %v2643 = vpop.permute.xlu0 %2642
    %v2645 = vmul.f32 %v2624, %v2643
    %v2646 = vxor.u32 %v1799, 2147483648
    %v2647 = vmul.f32 %v2646, 1.442695
    %v2648 = vpow.pop %v2647
    %v2649 = vadd.f32 %v2648, 1.0
    %v2650 = vrcp.pop %v2649
    %v2651 = vmul.f32 1.0, %v2650
    %v2652 = vtanh.pop %v1799
    %v2653 = vmul.f32 %v2651, 0.0
    %2655 = vrot.lane.b32.xlu0 %v2652, 64
    %v2656 = vpop.permute.xlu0 %2655
    %v2658 = vmul.f32 %v2651, %v2656
    %2660 = vrot.lane.b32.xlu0 %v2658, 32
    %v2661 = vpop.permute.xlu0 %2660
    %v2663 = vadd.f32 %v2653, %v2661
    %v2664 = vtanh.pop %v2663
    %2666 = vrot.lane.b32.xlu0 %v2664, 64
    %v2667 = vpop.permute.xlu0 %2666
    %v2669 = vmul.f32 %v2651, %v2667
    %2671 = vrot.lane.b32.xlu0 %v2645, 32
    %v2672 = vpop.permute.xlu0 %2671
    %2675 = vrot.lane.b32.xlu0 %v2669, 64
    %v2676 = vpop.permute.xlu0 %2675
    %v2678 = vsel %vm637, %v2672, %v2676
    %v2679 = vld [vmem:[%s11] sm:$0xff]
    %v2680 = vld [vmem:[%s11 + $0x8] sm:$0xff]
    %v2681 = vld [vmem:[%s11 + $0x10] sm:$0xff]
    %v2682 = vld [vmem:[%s11 + $0x18] sm:$0xff]
    %v2683 = vld [vmem:[%s11 + $0x20] sm:$0xff]
    %v2684 = vld [vmem:[%s11 + $0x28] sm:$0xff]
    %v2685 = vld [vmem:[%s11 + $0x30] sm:$0xff]
    %v2686 = vld [vmem:[%s11 + $0x38] sm:$0xff]
    %v2687 = vld [vmem:[#allocation3] sm:$0x1]
    %v2689 = vlaneseq
    %v2690 = vshrl.u32 %v2689, 7
    %v2691 = vsub.s32 0, %v2690
    %v2692 = vrot.slane %v2687, %v2691
    %v2695 = vrot.slane %v2678, 6
    %v2696 = vsel %vm431, %v2695, 0
    %2698 = vmatprep.subr.mxu0 0.0
    %2699 = vmatpush1.msra.mxu0 %v2679
    %2700 = vmatprep.subr.mxu0 0.0
    %2701 = vmatpush1.msra.mxu0 %v2680
    %2702 = vmatprep.subr.mxu0 0.0
    %2703 = vmatpush1.msra.mxu0 %v2681
    %2704 = vmatprep.subr.mxu0 0.0
    %2705 = vmatpush1.msra.mxu0 %v2682
    %2706 = vmatprep.subr.mxu0 0.0
    %2707 = vmatpush1.msra.mxu0 %v2683
    %2708 = vmatprep.subr.mxu0 0.0
    %2709 = vmatpush1.msra.mxu0 %v2684
    %2710 = vmatprep.subr.mxu0 0.0
    %2711 = vmatpush1.msra.mxu0 %v2685
    %2712 = vmatprep.subr.mxu0 0.0
    %2713 = vmatpush1.msra.mxu0 %v2686
    %2714 = vmatprep.subr.mxu0 0.0
    %2715 = vmatpush1.msra.mxu0 0.0
    %2716 = vmatprep.subr.mxu0 0.0
    %2717 = vmatpush1.msra.mxu0 0.0
    %2718 = vmatprep.subr.mxu0 0.0
    %2719 = vmatpush1.msra.mxu0 0.0
    %2720 = vmatprep.subr.mxu0 0.0
    %2721 = vmatpush1.msra.mxu0 0.0
    %2722 = vmatprep.subr.mxu0 0.0
    %2723 = vmatpush1.msra.mxu0 0.0
    %2724 = vmatprep.subr.mxu0 0.0
    %2725 = vmatpush1.msra.mxu0 0.0
    %2726 = vmatprep.subr.mxu0 0.0
    %2727 = vmatpush1.msra.mxu0 0.0
    %2728 = vmatprep.subr.mxu0 0.0
    %2729 = vmatpush1.msra.mxu0 0.0
    %2730 = vmatprep.subr.mxu0 0.0
    %2731 = vmatpush1.msra.mxu0 0.0
    %2732 = vmatprep.subr.mxu0 0.0
    %2733 = vmatpush1.msra.mxu0 0.0
    %2734 = vmatprep.subr.mxu0 0.0
    %2735 = vmatpush1.msra.mxu0 0.0
    %2736 = vmatprep.subr.mxu0 0.0
    %2737 = vmatpush1.msra.mxu0 0.0
    %2738 = vmatprep.subr.mxu0 0.0
    %2739 = vmatpush1.msra.mxu0 0.0
    %2740 = vmatprep.subr.mxu0 0.0
    %2741 = vmatpush1.msra.mxu0 0.0
    %2742 = vmatprep.subr.mxu0 0.0
    %2743 = vmatpush1.msra.mxu0 0.0
    %2744 = vmatprep.subr.mxu0 0.0
    %2745 = vmatpush1.msra.mxu0 0.0
    %2746 = vmatprep.subr.mxu0 0.0
    %2747 = vmatpush1.msra.mxu0 0.0
    %2748 = vmatprep.subr.mxu0 0.0
    %2749 = vmatpush1.msra.mxu0 0.0
    %2750 = vmatprep.subr.mxu0 0.0
    %2751 = vmatpush1.msra.mxu0 0.0
    %2752 = vmatprep.subr.mxu0 0.0
    %2753 = vmatpush1.msra.mxu0 0.0
    %2754 = vmatprep.subr.mxu0 0.0
    %2755 = vmatpush1.msra.mxu0 0.0
    %2756 = vmatprep.subr.mxu0 0.0
    %2757 = vmatpush1.msra.mxu0 0.0
    %2758 = vmatprep.subr.mxu0 0.0
    %2759 = vmatpush1.msra.mxu0 0.0
    %2760 = vmatprep.subr.mxu0 0.0
    %2761 = vmatpush1.msra.mxu0 0.0
    %2762 = vmatprep.mubr.f32.mxu0 0.0
    %2763 = vmatmul.mubr.f32.gmra.mrb[0].mxu0 %v2696
    %v2764 = vpop.f32.mrb[0].mxu0
    %v2765 = vadd.f32 %v2692, %v2764
    %v2766 = vpop.f32.mrb[0].mxu0
    %2767 = vdwg.mxu0
    %vm2768 = vcmask 1024
    %2769 = vst.msk [vmem:[%s13] sm:$0x3] %vm2768, %v2765
    // Predicated region
    $region74: #{mylstm_forward.1} parent=1 // pred_check
      _
    $region75: #{mylstm_forward.1} parent=1 // pred_check_branch
      %2771 = sbr.rel (0) target = $region77
    $region76: #{mylstm_forward.1} parent=1 // pred_region
      _
    $region77: #{mylstm_forward.1} parent=1 // pred_fallthru
      _
    // Predicated region
    $region78: #{mylstm_forward.1} parent=1 // pred_check
      _
    $region79: #{mylstm_forward.1} parent=1 // pred_check_branch
      %2773 = sbr.rel (0) target = $region81
    $region80: #{mylstm_forward.1} parent=1 // pred_region
      _
    $region81: #{mylstm_forward.1} parent=1 // pred_fallthru
      _
    %2774 = vsyncpa [#allocation5], 1
    %2775 = vsyncpa [#allocation7], 1
    %2776 = vsyncpa [#allocation10], 1

</llo_original>
